<compile_context>
chip_gen: v7x
topology: tpu7x:2x2x1
jax: 0.10.0
libtpu: 0.0.40
codegen_flags: <defaults>
</compile_context>

<pallas_src>
import functools

import jax
import jax.numpy as jnp
from jax import lax
from jax.experimental import pallas as pl
from jax.experimental.pallas import tpu as pltpu


def _pick_tile(dim, target, align):
    """Largest tile <= target that divides `dim` and is a multiple of `align`;
    falls back to the full dimension (always a legal block size)."""
    if dim <= target:
        return dim
    t = (target // align) * align
    while t >= align:
        if dim % t == 0:
            return t
        t -= align
    return dim


# ----------------------------------------------------------------------------
# Kernel 1: tiled bias-free linear  (M,K) @ (N,K).T -> (M,N), bf16 MXU, f32 acc
# ----------------------------------------------------------------------------
def _linear_kernel(x_ref, w_ref, o_ref, acc_ref):
    @pl.when(pl.program_id(2) == 0)
    def _init():
        acc_ref[...] = jnp.zeros_like(acc_ref)

    # x block (tm, tk) contracted with w block (tn, tk) along their last dims:
    # PyTorch (out,in) weight layout consumed directly (no transpose anywhere).
    acc_ref[...] += lax.dot_general(
        x_ref[...], w_ref[...],
        dimension_numbers=(((1,), (1,)), ((), ())),
        preferred_element_type=jnp.float32,
    )

    @pl.when(pl.program_id(2) == pl.num_programs(2) - 1)
    def _store():
        o_ref[...] = acc_ref[...].astype(o_ref.dtype)


def linear(x2d, w, *, out_dtype=None, tm=512, tn=512, tk=1024):
    """x2d: (M, K); w: (N, K) PyTorch layout. Returns (M, N) in out_dtype.
    Pass bf16 inputs for MXU-rate matmuls; the accumulator stays float32."""
    M, K = x2d.shape
    N, K2 = w.shape
    assert K == K2, "weight in_features must match x"
    out_dtype = x2d.dtype if out_dtype is None else out_dtype

    tm = _pick_tile(M, tm, 16)      # 16-aligned second-minor (bf16 sublane packing)
    tn = _pick_tile(N, tn, 128)     # lane-dense output minor dim
    tk = _pick_tile(K, tk, 128)     # minor of x and w blocks
    grid = (M // tm, N // tn, K // tk)

    in_item = jnp.dtype(x2d.dtype).itemsize
    out_item = jnp.dtype(out_dtype).itemsize
    # double-buffered x/w/out blocks + f32 accumulator, with headroom.
    vmem_need = (2 * (tm * tk + tn * tk) * in_item
                 + 2 * tm * tn * out_item + tm * tn * 4)
    vmem_limit = int(min(max(2 * vmem_need, 32 << 20), 56 << 20))

    cost = pl.CostEstimate(
        flops=2 * M * N * K,
        transcendentals=0,
        bytes_accessed=(M * K + N * K) * in_item + M * N * out_item,
    )
    return pl.pallas_call(
        _linear_kernel,
        grid=grid,
        in_specs=[
            pl.BlockSpec((tm, tk), lambda i, j, k: (i, k)),
            pl.BlockSpec((tn, tk), lambda i, j, k: (j, k)),
        ],
        out_specs=pl.BlockSpec((tm, tn), lambda i, j, k: (i, j)),
        out_shape=jax.ShapeDtypeStruct((M, N), out_dtype),
        scratch_shapes=[pltpu.VMEM((tm, tn), jnp.float32)],
        compiler_params=pltpu.CompilerParams(
            dimension_semantics=("parallel", "parallel", "arbitrary"),
            vmem_limit_bytes=vmem_limit),
        cost_estimate=cost,
    )(x2d, w)


# ----------------------------------------------------------------------------
# Kernel 2: head-packed attention core.
# One grid step = (batch b, head-group g). The single input block is the
# (T, heads_per_block*3*D) column slab of the (B, T, 3E) qkv projection whose
# columns are (h, k, d)-ordered, so q/k/v of each head are static slices.
# Output is written directly in 'b t (h d)' layout (no glue transposes).
# sqrt(D) is already folded into q (via the weight), so no in-kernel scaling.
# ----------------------------------------------------------------------------
def _attention_kernel(qkv_ref, o_ref, *, head_dim, heads_per_block):
    D = head_dim
    outs = []
    for h in range(heads_per_block):                     # static, fully unrolled
        base = 3 * D * h
        q = qkv_ref[:, base:base + D]                    # (T, D) bf16 (pre-scaled)
        k = qkv_ref[:, base + D:base + 2 * D]            # (T, D) bf16
        v = qkv_ref[:, base + 2 * D:base + 3 * D]        # (T, D) bf16

        # energy = q @ k.T on the MXU (bf16 in, f32 accumulation).
        s = lax.dot_general(q, k, (((1,), (1,)), ((), ())),
                            preferred_element_type=jnp.float32)      # (T, T) f32

        # numerically-stable softmax; denominator folded into the (T,D) context.
        s = s - jnp.max(s, axis=-1, keepdims=True)
        p = jnp.exp(s)
        denom = jnp.sum(p, axis=-1, keepdims=True)                   # (T, 1) f32
        ctx = jnp.dot(p.astype(v.dtype), v,
                      preferred_element_type=jnp.float32)            # bf16 MXU, f32 acc
        ctx = ctx * pl.reciprocal(denom, approx=True)                # EUP vrcp
        outs.append(ctx.astype(o_ref.dtype))

    # Single lane-dense (multiple-of-128-wide) store for the whole head group.
    o_ref[...] = jnp.concatenate(outs, axis=-1) if len(outs) > 1 else outs[0]


def _heads_per_block(batch, head_num, head_dim):
    """Pack heads so the block minor dim is >=128 lanes; grow per-step work
    while keeping >=4 parallel grid steps (2 TensorCores on v7x + pipelining)."""
    divisors = [h for h in range(1, head_num + 1) if head_num % h == 0]
    hpb = next((h for h in divisors if h * head_dim >= 128), head_num)
    for h in divisors:
        if h > hpb and batch * (head_num // h) >= 4:
            hpb = h
    return hpb


def attention_core(qkv3, head_num):
    """qkv3: (B, T, 3E) with columns (h, k, d)-ordered -> context (B, T, E)."""
    B, T, three_e = qkv3.shape
    E = three_e // 3
    D = E // head_num
    hpb = _heads_per_block(B, head_num, D)
    G = head_num // hpb
    w_in = 3 * hpb * D        # block minor dim (multiple of 128 for D*hpb>=128)
    w_out = hpb * D

    itemsize = jnp.dtype(qkv3.dtype).itemsize
    cost = pl.CostEstimate(
        flops=4 * B * head_num * T * T * D,      # QK^T + PV
        transcendentals=B * head_num * T * T,    # exp
        bytes_accessed=B * T * (three_e + E) * itemsize,
    )
    kernel = functools.partial(_attention_kernel, head_dim=D, heads_per_block=hpb)
    return pl.pallas_call(
        kernel,
        grid=(B, G),
        in_specs=[pl.BlockSpec((None, T, w_in), lambda b, g: (b, 0, g))],
        out_specs=pl.BlockSpec((None, T, w_out), lambda b, g: (b, 0, g)),
        out_shape=jax.ShapeDtypeStruct((B, T, E), qkv3.dtype),
        compiler_params=pltpu.CompilerParams(
            dimension_semantics=("parallel", "parallel"),
            vmem_limit_bytes=32 << 20),
        cost_estimate=cost,
    )(qkv3)


# ----------------------------------------------------------------------------
# One-time (init-time, out-of-jit) weight preparation:
#   * reorder W_qkv rows from the reference's (d, k, h) column layout to
#     (h, k, d) so each head's q|k|v are contiguous projection columns,
#   * fold sqrt(D) into the q rows,
#   * cast to bf16.
# ----------------------------------------------------------------------------
def _permute_and_scale_qkv(w_qkv, head_num, scale):
    three_e, e = w_qkv.shape
    d = e // head_num
    hh = jnp.arange(head_num).reshape(head_num, 1, 1)
    kk = jnp.arange(3).reshape(1, 3, 1)
    dd = jnp.arange(d).reshape(1, 1, d)
    # reference column index for (d, k, h): d*3H + k*H + h; new order is (h, k, d)
    old_rows = (dd * (3 * head_num) + kk * head_num + hh).reshape(-1)
    w = jnp.take(w_qkv, old_rows, axis=0)
    comp = (jnp.arange(3 * e) // d) % 3              # 0=q, 1=k, 2=v per new row
    row_scale = jnp.where(comp == 0,
                          jnp.asarray(scale, w.dtype),
                          jnp.asarray(1.0, w.dtype))
    return w * row_scale[:, None]


def prepare_params(w_qkv, w_out, head_num, compute_dtype=jnp.bfloat16):
    e = w_out.shape[0]
    d = e // head_num
    scale = float(d) ** 0.5      # self.dk — MULTIPLIED, exactly as in the reference
    w_qkv_hkd = _permute_and_scale_qkv(w_qkv, head_num, scale).astype(compute_dtype)
    return w_qkv_hkd, w_out.astype(compute_dtype)


# ----------------------------------------------------------------------------
# Full module forward (expects prepare_params()-processed weights)
# ----------------------------------------------------------------------------
def multi_head_attention(x, w_qkv_hkd, w_out, head_num):
    """x: (B, T, E); w_qkv_hkd: (3E, E) permuted+scaled bf16; w_out: (E, E) bf16."""
    B, T, E = x.shape
    x_bf = x.astype(w_qkv_hkd.dtype)

    # qkv projection (tiled Pallas matmul, bf16 MXU / f32 acc)
    qkv = linear(x_bf.reshape(B * T, E), w_qkv_hkd, out_dtype=w_qkv_hkd.dtype)
    qkv3 = qkv.reshape(B, T, 3 * E)          # free reshape; columns already (h,k,d)

    # attention core: reads q/k/v via BlockSpecs, writes 'b t (h d)' directly
    ctx = attention_core(qkv3, head_num)     # (B, T, E) bf16

    # output projection (tiled Pallas matmul), f32 result
    return linear(ctx.reshape(B * T, E), w_out, out_dtype=jnp.float32).reshape(B, T, E)


# ----------------------------------------------------------------------------
# Reference mirroring the PyTorch forward; matmul inputs use the same bf16
# compute dtype (f32 accumulation) so the comparison validates the kernel
# rather than bf16 quantization noise.
# ----------------------------------------------------------------------------
def reference_mha(x, w_qkv, w_out, head_num, compute_dtype=jnp.bfloat16):
    B, T, E = x.shape
    D = E // head_num
    xc = x.astype(compute_dtype)
    wq = w_qkv.astype(compute_dtype)
    wo = w_out.astype(compute_dtype)
    qkv = jnp.dot(xc, wq.T, preferred_element_type=jnp.float32).astype(compute_dtype)
    qkv = qkv.reshape(B, T, D, 3, head_num)        # 'b t (d k h)'
    qkv = jnp.transpose(qkv, (3, 0, 4, 1, 2))      # 'k b h t d'
    q, k, v = qkv[0], qkv[1], qkv[2]
    energy = jnp.einsum("bhid,bhjd->bhij", q, k,
                        preferred_element_type=jnp.float32) * (D ** 0.5)
    attn = jax.nn.softmax(energy, axis=-1)
    o = jnp.einsum("bhij,bhjd->bhid", attn.astype(compute_dtype), v,
                   preferred_element_type=jnp.float32)
    o = jnp.transpose(o, (0, 2, 1, 3)).reshape(B, T, E).astype(compute_dtype)
    return jnp.dot(o, wo.T, preferred_element_type=jnp.float32)


if __name__ == "__main__":
    # Small but tiling-exercising shapes: E % H == 0, T multiple of 8, D = 64.
    B, T, E, H = 2, 64, 256, 4

    key = jax.random.PRNGKey(0)
    kx, kq, ko = jax.random.split(key, 3)
    x = jax.random.normal(kx, (B, T, E), dtype=jnp.float32)
    # deterministic nn.Linear-shaped weights (out_features, in_features), bias=False
    w_qkv = 0.05 * jax.random.normal(kq, (3 * E, E), dtype=jnp.float32)
    w_out = 0.05 * jax.random.normal(ko, (E, E), dtype=jnp.float32)

    # One-time weight prep (hoisted out of the jitted forward).
    w_qkv_hkd, w_out_bf = jax.block_until_ready(prepare_params(w_qkv, w_out, H))

    fwd = jax.jit(functools.partial(multi_head_attention, head_num=H))
    out = jax.block_until_ready(fwd(x, w_qkv_hkd, w_out_bf))

    ref = reference_mha(x, w_qkv, w_out, H)
    assert out.shape == (B, T, E)
    assert jnp.allclose(out, ref, atol=2e-2, rtol=2e-2), (
        "mismatch vs reference: max abs err = "
        f"{float(jnp.max(jnp.abs(out - ref)))}")
    print("KERNEL_OK")
</pallas_src>

<mosaic_0001>
module attributes {stable_mosaic.version = 11 : i64} {
  func.func @_attention_kernel(%arg0: i32, %arg1: i32, %arg2: memref<1x64x384xbf16, #tpu.memory_space<vmem>>, %arg3: memref<1x64x128xbf16, #tpu.memory_space<vmem>>) attributes {dimension_semantics = [#tpu.dimension_semantics<parallel>, #tpu.dimension_semantics<parallel>], iteration_bounds = array<i64: 2, 2>, scalar_prefetch = 0 : i64, scratch_operands = 0 : i64, tpu.core_type = #tpu.core_type<tc>, window_params = [{transform_indices = @transform_0, window_bounds = array<i64: 1, 64, 384>}, {transform_indices = @transform_1, window_bounds = array<i64: 1, 64, 128>}]} {
    %c0 = arith.constant 0 : index
    %c0_0 = arith.constant 0 : index
    %c0_1 = arith.constant 0 : index
    %0 = vector.load %arg2[%c0, %c0_0, %c0_1] : memref<1x64x384xbf16, #tpu.memory_space<vmem>>, vector<1x64x64xbf16>
    %1 = vector.shape_cast %0 : vector<1x64x64xbf16> to vector<64x64xbf16>
    %c0_2 = arith.constant 0 : index
    %c0_3 = arith.constant 0 : index
    %c64 = arith.constant 64 : index
    %2 = vector.load %arg2[%c0_2, %c0_3, %c64] : memref<1x64x384xbf16, #tpu.memory_space<vmem>>, vector<1x64x64xbf16>
    %3 = vector.shape_cast %2 : vector<1x64x64xbf16> to vector<64x64xbf16>
    %c0_4 = arith.constant 0 : index
    %c0_5 = arith.constant 0 : index
    %c128 = arith.constant 128 : index
    %4 = vector.load %arg2[%c0_4, %c0_5, %c128] : memref<1x64x384xbf16, #tpu.memory_space<vmem>>, vector<1x64x64xbf16>
    %5 = vector.shape_cast %4 : vector<1x64x64xbf16> to vector<64x64xbf16>
    %cst = arith.constant dense<0.000000e+00> : vector<64x64xf32>
    %6 = tpu.matmul %1, %3, %cst {dimension_numbers = #tpu.dot_dimension_numbers<[1], [1], [0], [0], [0, 0, 1, 0], [], []>} : vector<64x64xbf16>, vector<64x64xbf16>, vector<64x64xf32> -> vector<64x64xf32>
    %cst_6 = arith.constant dense<0xFF800000> : vector<64xf32>
    %7 = vector.multi_reduction <maximumf>, %6, %cst_6 [1] : vector<64x64xf32> to vector<64xf32>
    %8 = vector.shape_cast %7 : vector<64xf32> to vector<64x1xf32>
    %9 = vector.broadcast %8 : vector<64x1xf32> to vector<64x64xf32>
    %10 = arith.subf %6, %9 : vector<64x64xf32>
    %11 = math.exp %10 : vector<64x64xf32>
    %cst_7 = arith.constant dense<0.000000e+00> : vector<64xf32>
    %12 = vector.multi_reduction <add>, %11, %cst_7 [1] : vector<64x64xf32> to vector<64xf32>
    %13 = vector.shape_cast %12 : vector<64xf32> to vector<64x1xf32>
    %14 = arith.truncf %11 : vector<64x64xf32> to vector<64x64xbf16>
    %cst_8 = arith.constant dense<0.000000e+00> : vector<64x64xf32>
    %15 = tpu.matmul %14, %5, %cst_8 {dimension_numbers = #tpu.dot_dimension_numbers<[1], [0], [0], [1], [0, 0, 1, 1], [], []>} : vector<64x64xbf16>, vector<64x64xbf16>, vector<64x64xf32> -> vector<64x64xf32>
    %16 = tpu.reciprocal %13 {approx = true} : vector<64x1xf32> -> vector<64x1xf32>
    %17 = vector.broadcast %16 : vector<64x1xf32> to vector<64x64xf32>
    %18 = arith.mulf %15, %17 : vector<64x64xf32>
    %19 = arith.truncf %18 : vector<64x64xf32> to vector<64x64xbf16>
    %c0_9 = arith.constant 0 : index
    %c0_10 = arith.constant 0 : index
    %c192 = arith.constant 192 : index
    %20 = vector.load %arg2[%c0_9, %c0_10, %c192] : memref<1x64x384xbf16, #tpu.memory_space<vmem>>, vector<1x64x64xbf16>
    %21 = vector.shape_cast %20 : vector<1x64x64xbf16> to vector<64x64xbf16>
    %c0_11 = arith.constant 0 : index
    %c0_12 = arith.constant 0 : index
    %c256 = arith.constant 256 : index
    %22 = vector.load %arg2[%c0_11, %c0_12, %c256] : memref<1x64x384xbf16, #tpu.memory_space<vmem>>, vector<1x64x64xbf16>
    %23 = vector.shape_cast %22 : vector<1x64x64xbf16> to vector<64x64xbf16>
    %c0_13 = arith.constant 0 : index
    %c0_14 = arith.constant 0 : index
    %c320 = arith.constant 320 : index
    %24 = vector.load %arg2[%c0_13, %c0_14, %c320] : memref<1x64x384xbf16, #tpu.memory_space<vmem>>, vector<1x64x64xbf16>
    %25 = vector.shape_cast %24 : vector<1x64x64xbf16> to vector<64x64xbf16>
    %cst_15 = arith.constant dense<0.000000e+00> : vector<64x64xf32>
    %26 = tpu.matmul %21, %23, %cst_15 {dimension_numbers = #tpu.dot_dimension_numbers<[1], [1], [0], [0], [0, 0, 1, 0], [], []>} : vector<64x64xbf16>, vector<64x64xbf16>, vector<64x64xf32> -> vector<64x64xf32>
    %cst_16 = arith.constant dense<0xFF800000> : vector<64xf32>
    %27 = vector.multi_reduction <maximumf>, %26, %cst_16 [1] : vector<64x64xf32> to vector<64xf32>
    %28 = vector.shape_cast %27 : vector<64xf32> to vector<64x1xf32>
    %29 = vector.broadcast %28 : vector<64x1xf32> to vector<64x64xf32>
    %30 = arith.subf %26, %29 : vector<64x64xf32>
    %31 = math.exp %30 : vector<64x64xf32>
    %cst_17 = arith.constant dense<0.000000e+00> : vector<64xf32>
    %32 = vector.multi_reduction <add>, %31, %cst_17 [1] : vector<64x64xf32> to vector<64xf32>
    %33 = vector.shape_cast %32 : vector<64xf32> to vector<64x1xf32>
    %34 = arith.truncf %31 : vector<64x64xf32> to vector<64x64xbf16>
    %cst_18 = arith.constant dense<0.000000e+00> : vector<64x64xf32>
    %35 = tpu.matmul %34, %25, %cst_18 {dimension_numbers = #tpu.dot_dimension_numbers<[1], [0], [0], [1], [0, 0, 1, 1], [], []>} : vector<64x64xbf16>, vector<64x64xbf16>, vector<64x64xf32> -> vector<64x64xf32>
    %36 = tpu.reciprocal %33 {approx = true} : vector<64x1xf32> -> vector<64x1xf32>
    %37 = vector.broadcast %36 : vector<64x1xf32> to vector<64x64xf32>
    %38 = arith.mulf %35, %37 : vector<64x64xf32>
    %39 = arith.truncf %38 : vector<64x64xf32> to vector<64x64xbf16>
    %40 = tpu.concatenate %19, %39 in 1 : vector<64x64xbf16>, vector<64x64xbf16> -> vector<64x128xbf16>
    %c0_19 = arith.constant 0 : index
    %c0_20 = arith.constant 0 : index
    %c0_21 = arith.constant 0 : index
    %41 = vector.load %arg3[%c0_19, %c0_20, %c0_21] : memref<1x64x128xbf16, #tpu.memory_space<vmem>>, vector<1x64x128xbf16>
    %42 = vector.shape_cast %41 : vector<1x64x128xbf16> to vector<64x128xbf16>
    %43 = vector.shape_cast %40 : vector<64x128xbf16> to vector<1x64x128xbf16>
    tpu.vector_store %arg3[%c0_19, %c0_20, %c0_21], %43 {strides = array<i32>} : memref<1x64x128xbf16, #tpu.memory_space<vmem>>, vector<1x64x128xbf16>,
    return
  }
  func.func @transform_0(%arg0: i32, %arg1: i32) -> (i32, i32, i32) {
    %c0_i32 = arith.constant 0 : i32
    %c0_i32_0 = arith.constant 0 : i32
    return %arg0, %c0_i32, %arg1 : i32, i32, i32
  }
  func.func @transform_1(%arg0: i32, %arg1: i32) -> (i32, i32, i32) {
    %c0_i32 = arith.constant 0 : i32
    %c0_i32_0 = arith.constant 0 : i32
    return %arg0, %c0_i32, %arg1 : i32, i32, i32
  }
}

module attributes {stable_mosaic.version = 11 : i64} {
  func.func @_linear_kernel(%arg0: i32, %arg1: i32, %arg2: i32, %arg3: memref<128x256xbf16, #tpu.memory_space<vmem>>, %arg4: memref<256x256xbf16, #tpu.memory_space<vmem>>, %arg5: memref<128x256xf32, #tpu.memory_space<vmem>>, %arg6: memref<128x256xf32, #tpu.memory_space<vmem>>) attributes {dimension_semantics = [#tpu.dimension_semantics<parallel>, #tpu.dimension_semantics<parallel>, #tpu.dimension_semantics<arbitrary>], iteration_bounds = array<i64: 1, 1, 1>, scalar_prefetch = 0 : i64, scratch_operands = 1 : i64, tpu.core_type = #tpu.core_type<tc>, window_params = [{transform_indices = @transform_0, window_bounds = array<i64: 128, 256>}, {transform_indices = @transform_1, window_bounds = array<i64: 256, 256>}, {transform_indices = @transform_2, window_bounds = array<i64: 128, 256>}]} {
    %c0_i32 = arith.constant 0 : i32
    %0 = arith.cmpi eq, %arg2, %c0_i32 : i32
    %1 = arith.extui %0 : i1 to i32
    %c0_i32_0 = arith.constant 0 : i32
    %2 = arith.cmpi ne, %1, %c0_i32_0 : i32
    scf.if %2 {
      %cst_10 = arith.constant 0.000000e+00 : f32
      %12 = vector.broadcast %cst_10 : f32 to vector<128x256xf32>
      %c0_11 = arith.constant 0 : index
      %c0_12 = arith.constant 0 : index
      %13 = vector.load %arg6[%c0_11, %c0_12] : memref<128x256xf32, #tpu.memory_space<vmem>>, vector<128x256xf32>
      tpu.vector_store %arg6[%c0_11, %c0_12], %12 {strides = array<i32>} : memref<128x256xf32, #tpu.memory_space<vmem>>, vector<128x256xf32>,
    } else {
    }
    %c0 = arith.constant 0 : index
    %c0_1 = arith.constant 0 : index
    %3 = vector.load %arg6[%c0, %c0_1] : memref<128x256xf32, #tpu.memory_space<vmem>>, vector<128x256xf32>
    %c0_2 = arith.constant 0 : index
    %c0_3 = arith.constant 0 : index
    %4 = vector.load %arg3[%c0_2, %c0_3] : memref<128x256xbf16, #tpu.memory_space<vmem>>, vector<128x256xbf16>
    %c0_4 = arith.constant 0 : index
    %c0_5 = arith.constant 0 : index
    %5 = vector.load %arg4[%c0_4, %c0_5] : memref<256x256xbf16, #tpu.memory_space<vmem>>, vector<256x256xbf16>
    %cst = arith.constant dense<0.000000e+00> : vector<128x256xf32>
    %6 = tpu.matmul %4, %5, %cst {dimension_numbers = #tpu.dot_dimension_numbers<[1], [1], [0], [0], [0, 0, 1, 0], [], []>} : vector<128x256xbf16>, vector<256x256xbf16>, vector<128x256xf32> -> vector<128x256xf32>
    %7 = arith.addf %3, %6 : vector<128x256xf32>
    %c0_6 = arith.constant 0 : index
    %c0_7 = arith.constant 0 : index
    %8 = vector.load %arg6[%c0_6, %c0_7] : memref<128x256xf32, #tpu.memory_space<vmem>>, vector<128x256xf32>
    tpu.vector_store %arg6[%c0_6, %c0_7], %7 {strides = array<i32>} : memref<128x256xf32, #tpu.memory_space<vmem>>, vector<128x256xf32>,
    %c0_i32_8 = arith.constant 0 : i32
    %9 = arith.cmpi eq, %arg2, %c0_i32_8 : i32
    %10 = arith.extui %9 : i1 to i32
    %c0_i32_9 = arith.constant 0 : i32
    %11 = arith.cmpi ne, %10, %c0_i32_9 : i32
    scf.if %11 {
      %c0_10 = arith.constant 0 : index
      %c0_11 = arith.constant 0 : index
      %12 = vector.load %arg6[%c0_10, %c0_11] : memref<128x256xf32, #tpu.memory_space<vmem>>, vector<128x256xf32>
      %c0_12 = arith.constant 0 : index
      %c0_13 = arith.constant 0 : index
      %13 = vector.load %arg5[%c0_12, %c0_13] : memref<128x256xf32, #tpu.memory_space<vmem>>, vector<128x256xf32>
      tpu.vector_store %arg5[%c0_12, %c0_13], %12 {strides = array<i32>} : memref<128x256xf32, #tpu.memory_space<vmem>>, vector<128x256xf32>,
    } else {
    }
    return
  }
  func.func @transform_0(%arg0: i32, %arg1: i32, %arg2: i32) -> (i32, i32) {
    %c0_i32 = arith.constant 0 : i32
    return %arg0, %arg2 : i32, i32
  }
  func.func @transform_1(%arg0: i32, %arg1: i32, %arg2: i32) -> (i32, i32) {
    %c0_i32 = arith.constant 0 : i32
    return %arg1, %arg2 : i32, i32
  }
  func.func @transform_2(%arg0: i32, %arg1: i32, %arg2: i32) -> (i32, i32) {
    %c0_i32 = arith.constant 0 : i32
    return %arg0, %arg1 : i32, i32
  }
}

module attributes {stable_mosaic.version = 11 : i64} {
  func.func @_linear_kernel(%arg0: i32, %arg1: i32, %arg2: i32, %arg3: memref<128x256xbf16, #tpu.memory_space<vmem>>, %arg4: memref<384x256xbf16, #tpu.memory_space<vmem>>, %arg5: memref<128x384xbf16, #tpu.memory_space<vmem>>, %arg6: memref<128x384xf32, #tpu.memory_space<vmem>>) attributes {dimension_semantics = [#tpu.dimension_semantics<parallel>, #tpu.dimension_semantics<parallel>, #tpu.dimension_semantics<arbitrary>], iteration_bounds = array<i64: 1, 2, 1>, scalar_prefetch = 0 : i64, scratch_operands = 1 : i64, tpu.core_type = #tpu.core_type<tc>, window_params = [{transform_indices = @transform_0, window_bounds = array<i64: 128, 256>}, {transform_indices = @transform_1, window_bounds = array<i64: 384, 256>}, {transform_indices = @transform_2, window_bounds = array<i64: 128, 384>}]} {
    %c0_i32 = arith.constant 0 : i32
    %0 = arith.cmpi eq, %arg2, %c0_i32 : i32
    %1 = arith.extui %0 : i1 to i32
    %c0_i32_0 = arith.constant 0 : i32
    %2 = arith.cmpi ne, %1, %c0_i32_0 : i32
    scf.if %2 {
      %cst_10 = arith.constant 0.000000e+00 : f32
      %12 = vector.broadcast %cst_10 : f32 to vector<128x384xf32>
      %c0_11 = arith.constant 0 : index
      %c0_12 = arith.constant 0 : index
      %13 = vector.load %arg6[%c0_11, %c0_12] : memref<128x384xf32, #tpu.memory_space<vmem>>, vector<128x384xf32>
      tpu.vector_store %arg6[%c0_11, %c0_12], %12 {strides = array<i32>} : memref<128x384xf32, #tpu.memory_space<vmem>>, vector<128x384xf32>,
    } else {
    }
    %c0 = arith.constant 0 : index
    %c0_1 = arith.constant 0 : index
    %3 = vector.load %arg6[%c0, %c0_1] : memref<128x384xf32, #tpu.memory_space<vmem>>, vector<128x384xf32>
    %c0_2 = arith.constant 0 : index
    %c0_3 = arith.constant 0 : index
    %4 = vector.load %arg3[%c0_2, %c0_3] : memref<128x256xbf16, #tpu.memory_space<vmem>>, vector<128x256xbf16>
    %c0_4 = arith.constant 0 : index
    %c0_5 = arith.constant 0 : index
    %5 = vector.load %arg4[%c0_4, %c0_5] : memref<384x256xbf16, #tpu.memory_space<vmem>>, vector<384x256xbf16>
    %cst = arith.constant dense<0.000000e+00> : vector<128x384xf32>
    %6 = tpu.matmul %4, %5, %cst {dimension_numbers = #tpu.dot_dimension_numbers<[1], [1], [0], [0], [0, 0, 1, 0], [], []>} : vector<128x256xbf16>, vector<384x256xbf16>, vector<128x384xf32> -> vector<128x384xf32>
    %7 = arith.addf %3, %6 : vector<128x384xf32>
    %c0_6 = arith.constant 0 : index
    %c0_7 = arith.constant 0 : index
    %8 = vector.load %arg6[%c0_6, %c0_7] : memref<128x384xf32, #tpu.memory_space<vmem>>, vector<128x384xf32>
    tpu.vector_store %arg6[%c0_6, %c0_7], %7 {strides = array<i32>} : memref<128x384xf32, #tpu.memory_space<vmem>>, vector<128x384xf32>,
    %c0_i32_8 = arith.constant 0 : i32
    %9 = arith.cmpi eq, %arg2, %c0_i32_8 : i32
    %10 = arith.extui %9 : i1 to i32
    %c0_i32_9 = arith.constant 0 : i32
    %11 = arith.cmpi ne, %10, %c0_i32_9 : i32
    scf.if %11 {
      %c0_10 = arith.constant 0 : index
      %c0_11 = arith.constant 0 : index
      %12 = vector.load %arg6[%c0_10, %c0_11] : memref<128x384xf32, #tpu.memory_space<vmem>>, vector<128x384xf32>
      %13 = arith.truncf %12 : vector<128x384xf32> to vector<128x384xbf16>
      %c0_12 = arith.constant 0 : index
      %c0_13 = arith.constant 0 : index
      %14 = vector.load %arg5[%c0_12, %c0_13] : memref<128x384xbf16, #tpu.memory_space<vmem>>, vector<128x384xbf16>
      tpu.vector_store %arg5[%c0_12, %c0_13], %13 {strides = array<i32>} : memref<128x384xbf16, #tpu.memory_space<vmem>>, vector<128x384xbf16>,
    } else {
    }
    return
  }
  func.func @transform_0(%arg0: i32, %arg1: i32, %arg2: i32) -> (i32, i32) {
    %c0_i32 = arith.constant 0 : i32
    return %arg0, %arg2 : i32, i32
  }
  func.func @transform_1(%arg0: i32, %arg1: i32, %arg2: i32) -> (i32, i32) {
    %c0_i32 = arith.constant 0 : i32
    return %arg1, %arg2 : i32, i32
  }
  func.func @transform_2(%arg0: i32, %arg1: i32, %arg2: i32) -> (i32, i32) {
    %c0_i32 = arith.constant 0 : i32
    return %arg0, %arg1 : i32, i32
  }
}

</mosaic_0001>

<llo_original>
// kernel: multi_head_attention.5
$region0: #{multi_head_attention.5}
  #allocation0 [shape = 'u32[]', space=smem, size = 0x4, offset = 0x4, fixed_abs, tag = 'smem constant byte address 0x4 - core index']
  #allocation1 [shape = 'u32[144,128]{1,0:T(1,128)}', space=vmem, size = 0x12000, scoped, tag = 'internal scratch']
  #allocation2 [shape = 'f32[128,256]{1,0:T(8,128)}', space=vmem, size = 0x20000, scoped, tag = 'scratch operand']
  %s0 = inlined_call_operand.vmem [shape: bf16[128,256], index: 0, kind: input, shape index: {}]
  %s1 = inlined_call_operand.vmem [shape: bf16[256,256], index: 1, kind: input, shape index: {}]
  %s2 = inlined_call_operand.hbm [shape: f32[128,256], index: 2, kind: output, shape index: {}]
  %s3 = sld [smem:[#allocation0]]
  $region26: #{multi_head_attention.5} parent=0
    _
  %s5 = ssub.s32 1, %s3
  %s6 = scalar_select 0, %s5, %s3
  $region1: #{multi_head_attention.5} parent=0
    #allocation3 [shape = 'u8[131072]{0}', space=vmem, size = 0x20000, scoped, tag = 'output window, operand 0, single buffered']
    #allocation4 [shape = 's32[1]{0}', space=sflag, size = 0x4, scoped, tag = 'scoped memory for multi_head_attention.5']
    %7 = vsyncpa [#allocation4], 0
    // Predicated region
    $region2: #{multi_head_attention.5} parent=1 // pred_check
      _
    $region3: #{multi_head_attention.5} parent=1 // pred_check_branch
      %9 = sbr.rel (0) target = $region5
    $region4: #{multi_head_attention.5} parent=1 // pred_region
      _
    $region5: #{multi_head_attention.5} parent=1 // pred_fallthru
      _
    // Predicated region
    $region6: #{multi_head_attention.5} parent=1 // pred_check
      _
    $region7: #{multi_head_attention.5} parent=1 // pred_check_branch
      %11 = sbr.rel (0) target = $region9
    $region8: #{multi_head_attention.5} parent=1 // pred_region
      _
    $region9: #{multi_head_attention.5} parent=1 // pred_fallthru
      _
    %p12 = scmp.eq.s32.totalorder 0, 0
    // Predicated region
    $region10: #{multi_head_attention.5} parent=1 // pred_check
      %p13 = pneg %p12
    $region11: #{multi_head_attention.5} parent=1 // pred_check_branch
      %15 = sbr.rel (%p13) target = $region13
    $region12: #{multi_head_attention.5} parent=1 // pred_region
      %16 = vst [vmem:[#allocation2] sm:$0xff] 0.0
      %17 = vst [vmem:[#allocation2 + $0x8] sm:$0xff] 0.0
      %18 = vst [vmem:[#allocation2 + $0x10] sm:$0xff] 0.0
      %19 = vst [vmem:[#allocation2 + $0x18] sm:$0xff] 0.0
      %20 = vst [vmem:[#allocation2 + $0x20] sm:$0xff] 0.0
      %21 = vst [vmem:[#allocation2 + $0x28] sm:$0xff] 0.0
      %22 = vst [vmem:[#allocation2 + $0x30] sm:$0xff] 0.0
      %23 = vst [vmem:[#allocation2 + $0x38] sm:$0xff] 0.0
      %24 = vst [vmem:[#allocation2 + $0x40] sm:$0xff] 0.0
      %25 = vst [vmem:[#allocation2 + $0x48] sm:$0xff] 0.0
      %26 = vst [vmem:[#allocation2 + $0x50] sm:$0xff] 0.0
      %27 = vst [vmem:[#allocation2 + $0x58] sm:$0xff] 0.0
      %28 = vst [vmem:[#allocation2 + $0x60] sm:$0xff] 0.0
      %29 = vst [vmem:[#allocation2 + $0x68] sm:$0xff] 0.0
      %30 = vst [vmem:[#allocation2 + $0x70] sm:$0xff] 0.0
      %31 = vst [vmem:[#allocation2 + $0x78] sm:$0xff] 0.0
      %32 = vst [vmem:[#allocation2 + $0x80] sm:$0xff] 0.0
      %33 = vst [vmem:[#allocation2 + $0x88] sm:$0xff] 0.0
      %34 = vst [vmem:[#allocation2 + $0x90] sm:$0xff] 0.0
      %35 = vst [vmem:[#allocation2 + $0x98] sm:$0xff] 0.0
      %36 = vst [vmem:[#allocation2 + $0xa0] sm:$0xff] 0.0
      %37 = vst [vmem:[#allocation2 + $0xa8] sm:$0xff] 0.0
      %38 = vst [vmem:[#allocation2 + $0xb0] sm:$0xff] 0.0
      %39 = vst [vmem:[#allocation2 + $0xb8] sm:$0xff] 0.0
      %40 = vst [vmem:[#allocation2 + $0xc0] sm:$0xff] 0.0
      %41 = vst [vmem:[#allocation2 + $0xc8] sm:$0xff] 0.0
      %42 = vst [vmem:[#allocation2 + $0xd0] sm:$0xff] 0.0
      %43 = vst [vmem:[#allocation2 + $0xd8] sm:$0xff] 0.0
      %44 = vst [vmem:[#allocation2 + $0xe0] sm:$0xff] 0.0
      %45 = vst [vmem:[#allocation2 + $0xe8] sm:$0xff] 0.0
      %46 = vst [vmem:[#allocation2 + $0xf0] sm:$0xff] 0.0
      %47 = vst [vmem:[#allocation2 + $0xf8] sm:$0xff] 0.0
    $region13: #{multi_head_attention.5} parent=1 // pred_fallthru
      _
    %v48 = vld [vmem:[#allocation2] sm:$0xff]
    %v49 = vld [vmem:[#allocation2 + $0x8] sm:$0xff]
    %v50 = vld [vmem:[#allocation2 + $0x10] sm:$0xff]
    %v51 = vld [vmem:[#allocation2 + $0x18] sm:$0xff]
    %v52 = vld [vmem:[#allocation2 + $0x20] sm:$0xff]
    %v53 = vld [vmem:[#allocation2 + $0x28] sm:$0xff]
    %v54 = vld [vmem:[#allocation2 + $0x30] sm:$0xff]
    %v55 = vld [vmem:[#allocation2 + $0x38] sm:$0xff]
    %v56 = vld [vmem:[#allocation2 + $0x40] sm:$0xff]
    %v57 = vld [vmem:[#allocation2 + $0x48] sm:$0xff]
    %v58 = vld [vmem:[#allocation2 + $0x50] sm:$0xff]
    %v59 = vld [vmem:[#allocation2 + $0x58] sm:$0xff]
    %v60 = vld [vmem:[#allocation2 + $0x60] sm:$0xff]
    %v61 = vld [vmem:[#allocation2 + $0x68] sm:$0xff]
    %v62 = vld [vmem:[#allocation2 + $0x70] sm:$0xff]
    %v63 = vld [vmem:[#allocation2 + $0x78] sm:$0xff]
    %v64 = vld [vmem:[#allocation2 + $0x80] sm:$0xff]
    %v65 = vld [vmem:[#allocation2 + $0x88] sm:$0xff]
    %v66 = vld [vmem:[#allocation2 + $0x90] sm:$0xff]
    %v67 = vld [vmem:[#allocation2 + $0x98] sm:$0xff]
    %v68 = vld [vmem:[#allocation2 + $0xa0] sm:$0xff]
    %v69 = vld [vmem:[#allocation2 + $0xa8] sm:$0xff]
    %v70 = vld [vmem:[#allocation2 + $0xb0] sm:$0xff]
    %v71 = vld [vmem:[#allocation2 + $0xb8] sm:$0xff]
    %v72 = vld [vmem:[#allocation2 + $0xc0] sm:$0xff]
    %v73 = vld [vmem:[#allocation2 + $0xc8] sm:$0xff]
    %v74 = vld [vmem:[#allocation2 + $0xd0] sm:$0xff]
    %v75 = vld [vmem:[#allocation2 + $0xd8] sm:$0xff]
    %v76 = vld [vmem:[#allocation2 + $0xe0] sm:$0xff]
    %v77 = vld [vmem:[#allocation2 + $0xe8] sm:$0xff]
    %v78 = vld [vmem:[#allocation2 + $0xf0] sm:$0xff]
    %v79 = vld [vmem:[#allocation2 + $0xf8] sm:$0xff]
    %v80 = vld [vmem:[%s0] sm:$0xff]
    %v81 = vld [vmem:[%s0 + $0x8] sm:$0xff]
    %v82 = vld [vmem:[%s0 + $0x10] sm:$0xff]
    %v83 = vld [vmem:[%s0 + $0x18] sm:$0xff]
    %v84 = vld [vmem:[%s0 + $0x20] sm:$0xff]
    %v85 = vld [vmem:[%s0 + $0x28] sm:$0xff]
    %v86 = vld [vmem:[%s0 + $0x30] sm:$0xff]
    %v87 = vld [vmem:[%s0 + $0x38] sm:$0xff]
    %v88 = vld [vmem:[%s0 + $0x40] sm:$0xff]
    %v89 = vld [vmem:[%s0 + $0x48] sm:$0xff]
    %v90 = vld [vmem:[%s0 + $0x50] sm:$0xff]
    %v91 = vld [vmem:[%s0 + $0x58] sm:$0xff]
    %v92 = vld [vmem:[%s0 + $0x60] sm:$0xff]
    %v93 = vld [vmem:[%s0 + $0x68] sm:$0xff]
    %v94 = vld [vmem:[%s0 + $0x70] sm:$0xff]
    %v95 = vld [vmem:[%s0 + $0x78] sm:$0xff]
    %v96 = vld [vmem:[%s1] sm:$0xff]
    %v97 = vld [vmem:[%s1 + $0x8] sm:$0xff]
    %v98 = vld [vmem:[%s1 + $0x10] sm:$0xff]
    %v99 = vld [vmem:[%s1 + $0x18] sm:$0xff]
    %v100 = vld [vmem:[%s1 + $0x20] sm:$0xff]
    %v101 = vld [vmem:[%s1 + $0x28] sm:$0xff]
    %v102 = vld [vmem:[%s1 + $0x30] sm:$0xff]
    %v103 = vld [vmem:[%s1 + $0x38] sm:$0xff]
    %v104 = vld [vmem:[%s1 + $0x40] sm:$0xff]
    %v105 = vld [vmem:[%s1 + $0x48] sm:$0xff]
    %v106 = vld [vmem:[%s1 + $0x50] sm:$0xff]
    %v107 = vld [vmem:[%s1 + $0x58] sm:$0xff]
    %v108 = vld [vmem:[%s1 + $0x60] sm:$0xff]
    %v109 = vld [vmem:[%s1 + $0x68] sm:$0xff]
    %v110 = vld [vmem:[%s1 + $0x70] sm:$0xff]
    %v111 = vld [vmem:[%s1 + $0x78] sm:$0xff]
    %v112 = vld [vmem:[%s1 + $0x80] sm:$0xff]
    %v113 = vld [vmem:[%s1 + $0x88] sm:$0xff]
    %v114 = vld [vmem:[%s1 + $0x90] sm:$0xff]
    %v115 = vld [vmem:[%s1 + $0x98] sm:$0xff]
    %v116 = vld [vmem:[%s1 + $0xa0] sm:$0xff]
    %v117 = vld [vmem:[%s1 + $0xa8] sm:$0xff]
    %v118 = vld [vmem:[%s1 + $0xb0] sm:$0xff]
    %v119 = vld [vmem:[%s1 + $0xb8] sm:$0xff]
    %v120 = vld [vmem:[%s1 + $0xc0] sm:$0xff]
    %v121 = vld [vmem:[%s1 + $0xc8] sm:$0xff]
    %v122 = vld [vmem:[%s1 + $0xd0] sm:$0xff]
    %v123 = vld [vmem:[%s1 + $0xd8] sm:$0xff]
    %v124 = vld [vmem:[%s1 + $0xe0] sm:$0xff]
    %v125 = vld [vmem:[%s1 + $0xe8] sm:$0xff]
    %v126 = vld [vmem:[%s1 + $0xf0] sm:$0xff]
    %v127 = vld [vmem:[%s1 + $0xf8] sm:$0xff]
    %v144 = vunpack.c.l.b16 %v80
    %v145 = vunpack.c.h.b16 %v80
    %v146 = vunpack.c.l.b16 %v81
    %v147 = vunpack.c.h.b16 %v81
    %v148 = vunpack.c.l.b16 %v82
    %v149 = vunpack.c.h.b16 %v82
    %v150 = vunpack.c.l.b16 %v83
    %v151 = vunpack.c.h.b16 %v83
    %v152 = vunpack.c.l.b16 %v84
    %v153 = vunpack.c.h.b16 %v84
    %v154 = vunpack.c.l.b16 %v85
    %v155 = vunpack.c.h.b16 %v85
    %v156 = vunpack.c.l.b16 %v86
    %v157 = vunpack.c.h.b16 %v86
    %v158 = vunpack.c.l.b16 %v87
    %v159 = vunpack.c.h.b16 %v87
    %v160 = vunpack.c.l.b16 %v88
    %v161 = vunpack.c.h.b16 %v88
    %v162 = vunpack.c.l.b16 %v89
    %v163 = vunpack.c.h.b16 %v89
    %v164 = vunpack.c.l.b16 %v90
    %v165 = vunpack.c.h.b16 %v90
    %v166 = vunpack.c.l.b16 %v91
    %v167 = vunpack.c.h.b16 %v91
    %v168 = vunpack.c.l.b16 %v92
    %v169 = vunpack.c.h.b16 %v92
    %v170 = vunpack.c.l.b16 %v93
    %v171 = vunpack.c.h.b16 %v93
    %v172 = vunpack.c.l.b16 %v94
    %v173 = vunpack.c.h.b16 %v94
    %v174 = vunpack.c.l.b16 %v95
    %v175 = vunpack.c.h.b16 %v95
    %v176 = vpack.c.b16 %v146, %v144
    %v177 = vpack.c.b16 %v147, %v145
    %v178 = vpack.c.b16 %v150, %v148
    %v179 = vpack.c.b16 %v151, %v149
    %v180 = vpack.c.b16 %v154, %v152
    %v181 = vpack.c.b16 %v155, %v153
    %v182 = vpack.c.b16 %v158, %v156
    %v183 = vpack.c.b16 %v159, %v157
    %v184 = vpack.c.b16 %v162, %v160
    %v185 = vpack.c.b16 %v163, %v161
    %v186 = vpack.c.b16 %v166, %v164
    %v187 = vpack.c.b16 %v167, %v165
    %v188 = vpack.c.b16 %v170, %v168
    %v189 = vpack.c.b16 %v171, %v169
    %v190 = vpack.c.b16 %v174, %v172
    %v191 = vpack.c.b16 %v175, %v173
    %v240 = vunpack.c.l.b16 %v96
    %v241 = vunpack.c.h.b16 %v96
    %v242 = vunpack.c.l.b16 %v97
    %v243 = vunpack.c.h.b16 %v97
    %v244 = vunpack.c.l.b16 %v98
    %v245 = vunpack.c.h.b16 %v98
    %v246 = vunpack.c.l.b16 %v99
    %v247 = vunpack.c.h.b16 %v99
    %v248 = vunpack.c.l.b16 %v100
    %v249 = vunpack.c.h.b16 %v100
    %v250 = vunpack.c.l.b16 %v101
    %v251 = vunpack.c.h.b16 %v101
    %v252 = vunpack.c.l.b16 %v102
    %v253 = vunpack.c.h.b16 %v102
    %v254 = vunpack.c.l.b16 %v103
    %v255 = vunpack.c.h.b16 %v103
    %v256 = vunpack.c.l.b16 %v104
    %v257 = vunpack.c.h.b16 %v104
    %v258 = vunpack.c.l.b16 %v105
    %v259 = vunpack.c.h.b16 %v105
    %v260 = vunpack.c.l.b16 %v106
    %v261 = vunpack.c.h.b16 %v106
    %v262 = vunpack.c.l.b16 %v107
    %v263 = vunpack.c.h.b16 %v107
    %v264 = vunpack.c.l.b16 %v108
    %v265 = vunpack.c.h.b16 %v108
    %v266 = vunpack.c.l.b16 %v109
    %v267 = vunpack.c.h.b16 %v109
    %v268 = vunpack.c.l.b16 %v110
    %v269 = vunpack.c.h.b16 %v110
    %v270 = vunpack.c.l.b16 %v111
    %v271 = vunpack.c.h.b16 %v111
    %v272 = vunpack.c.l.b16 %v112
    %v273 = vunpack.c.h.b16 %v112
    %v274 = vunpack.c.l.b16 %v113
    %v275 = vunpack.c.h.b16 %v113
    %v276 = vunpack.c.l.b16 %v114
    %v277 = vunpack.c.h.b16 %v114
    %v278 = vunpack.c.l.b16 %v115
    %v279 = vunpack.c.h.b16 %v115
    %v280 = vunpack.c.l.b16 %v116
    %v281 = vunpack.c.h.b16 %v116
    %v282 = vunpack.c.l.b16 %v117
    %v283 = vunpack.c.h.b16 %v117
    %v284 = vunpack.c.l.b16 %v118
    %v285 = vunpack.c.h.b16 %v118
    %v286 = vunpack.c.l.b16 %v119
    %v287 = vunpack.c.h.b16 %v119
    %v288 = vunpack.c.l.b16 %v120
    %v289 = vunpack.c.h.b16 %v120
    %v290 = vunpack.c.l.b16 %v121
    %v291 = vunpack.c.h.b16 %v121
    %v292 = vunpack.c.l.b16 %v122
    %v293 = vunpack.c.h.b16 %v122
    %v294 = vunpack.c.l.b16 %v123
    %v295 = vunpack.c.h.b16 %v123
    %v296 = vunpack.c.l.b16 %v124
    %v297 = vunpack.c.h.b16 %v124
    %v298 = vunpack.c.l.b16 %v125
    %v299 = vunpack.c.h.b16 %v125
    %v300 = vunpack.c.l.b16 %v126
    %v301 = vunpack.c.h.b16 %v126
    %v302 = vunpack.c.l.b16 %v127
    %v303 = vunpack.c.h.b16 %v127
    %v304 = vpack.c.b16 %v242, %v240
    %v305 = vpack.c.b16 %v243, %v241
    %v306 = vpack.c.b16 %v246, %v244
    %v307 = vpack.c.b16 %v247, %v245
    %v308 = vpack.c.b16 %v250, %v248
    %v309 = vpack.c.b16 %v251, %v249
    %v310 = vpack.c.b16 %v254, %v252
    %v311 = vpack.c.b16 %v255, %v253
    %v312 = vpack.c.b16 %v258, %v256
    %v313 = vpack.c.b16 %v259, %v257
    %v314 = vpack.c.b16 %v262, %v260
    %v315 = vpack.c.b16 %v263, %v261
    %v316 = vpack.c.b16 %v266, %v264
    %v317 = vpack.c.b16 %v267, %v265
    %v318 = vpack.c.b16 %v270, %v268
    %v319 = vpack.c.b16 %v271, %v269
    %v320 = vpack.c.b16 %v274, %v272
    %v321 = vpack.c.b16 %v275, %v273
    %v322 = vpack.c.b16 %v278, %v276
    %v323 = vpack.c.b16 %v279, %v277
    %v324 = vpack.c.b16 %v282, %v280
    %v325 = vpack.c.b16 %v283, %v281
    %v326 = vpack.c.b16 %v286, %v284
    %v327 = vpack.c.b16 %v287, %v285
    %v328 = vpack.c.b16 %v290, %v288
    %v329 = vpack.c.b16 %v291, %v289
    %v330 = vpack.c.b16 %v294, %v292
    %v331 = vpack.c.b16 %v295, %v293
    %v332 = vpack.c.b16 %v298, %v296
    %v333 = vpack.c.b16 %v299, %v297
    %v334 = vpack.c.b16 %v302, %v300
    %v335 = vpack.c.b16 %v303, %v301
    %368 = vmatprep.subr.bf16.mxu0 %v305
    %369 = vmatpush1.bf16.xpose.msra.mxu0 %v304
    %370 = vmatprep.subr.bf16.mxu0 %v307
    %371 = vmatpush1.bf16.xpose.msra.mxu0 %v306
    %372 = vmatprep.subr.bf16.mxu0 %v309
    %373 = vmatpush1.bf16.xpose.msra.mxu0 %v308
    %374 = vmatprep.subr.bf16.mxu0 %v311
    %375 = vmatpush1.bf16.xpose.msra.mxu0 %v310
    %376 = vmatprep.subr.bf16.mxu0 %v313
    %377 = vmatpush1.bf16.xpose.msra.mxu0 %v312
    %378 = vmatprep.subr.bf16.mxu0 %v315
    %379 = vmatpush1.bf16.xpose.msra.mxu0 %v314
    %380 = vmatprep.subr.bf16.mxu0 %v317
    %381 = vmatpush1.bf16.xpose.msra.mxu0 %v316
    %382 = vmatprep.subr.bf16.mxu0 %v319
    %383 = vmatpush1.bf16.xpose.msra.mxu0 %v318
    %384 = vmatprep.subr.bf16.mxu0 %v321
    %385 = vmatpush1.bf16.xpose.msra.mxu0 %v320
    %386 = vmatprep.subr.bf16.mxu0 %v323
    %387 = vmatpush1.bf16.xpose.msra.mxu0 %v322
    %388 = vmatprep.subr.bf16.mxu0 %v325
    %389 = vmatpush1.bf16.xpose.msra.mxu0 %v324
    %390 = vmatprep.subr.bf16.mxu0 %v327
    %391 = vmatpush1.bf16.xpose.msra.mxu0 %v326
    %392 = vmatprep.subr.bf16.mxu0 %v329
    %393 = vmatpush1.bf16.xpose.msra.mxu0 %v328
    %394 = vmatprep.subr.bf16.mxu0 %v331
    %395 = vmatpush1.bf16.xpose.msra.mxu0 %v330
    %396 = vmatprep.subr.bf16.mxu0 %v333
    %397 = vmatpush1.bf16.xpose.msra.mxu0 %v332
    %398 = vmatprep.subr.bf16.mxu0 %v335
    %399 = vmatpush1.bf16.xpose.msra.mxu0 %v334
    %400 = vmatprep.mubr.bf16.mxu0 %v177
    %401 = vmatmul.mubr.bf16.gmra.mrb[0].mxu0 %v176
    %v402 = vpop.f32.mrb[0].mxu0
    %v403 = vadd.f32 0.0, %v402
    %v404 = vpop.f32.mrb[0].mxu0
    %v405 = vadd.f32 0.0, %v404
    %v406 = vpop.f32.mrb[0].mxu0
    %v407 = vadd.f32 0.0, %v406
    %v408 = vpop.f32.mrb[0].mxu0
    %v409 = vadd.f32 0.0, %v408
    %410 = vmatprep.mubr.bf16.mxu0 %v179
    %411 = vmatmul.mubr.bf16.gmra.mrb[0].mxu0 %v178
    %v412 = vpop.f32.mrb[0].mxu0
    %v413 = vadd.f32 0.0, %v412
    %v414 = vpop.f32.mrb[0].mxu0
    %v415 = vadd.f32 0.0, %v414
    %v416 = vpop.f32.mrb[0].mxu0
    %v417 = vadd.f32 0.0, %v416
    %v418 = vpop.f32.mrb[0].mxu0
    %v419 = vadd.f32 0.0, %v418
    %420 = vmatprep.mubr.bf16.mxu0 %v181
    %421 = vmatmul.mubr.bf16.gmra.mrb[0].mxu0 %v180
    %v422 = vpop.f32.mrb[0].mxu0
    %v423 = vadd.f32 0.0, %v422
    %v424 = vpop.f32.mrb[0].mxu0
    %v425 = vadd.f32 0.0, %v424
    %v426 = vpop.f32.mrb[0].mxu0
    %v427 = vadd.f32 0.0, %v426
    %v428 = vpop.f32.mrb[0].mxu0
    %v429 = vadd.f32 0.0, %v428
    %430 = vmatprep.mubr.bf16.mxu0 %v183
    %431 = vmatmul.mubr.bf16.gmra.mrb[0].mxu0 %v182
    %v432 = vpop.f32.mrb[0].mxu0
    %v433 = vadd.f32 0.0, %v432
    %v434 = vpop.f32.mrb[0].mxu0
    %v435 = vadd.f32 0.0, %v434
    %v436 = vpop.f32.mrb[0].mxu0
    %v437 = vadd.f32 0.0, %v436
    %v438 = vpop.f32.mrb[0].mxu0
    %v439 = vadd.f32 0.0, %v438
    %440 = vmatprep.mubr.bf16.mxu0 %v185
    %441 = vmatmul.mubr.bf16.gmra.mrb[0].mxu0 %v184
    %v442 = vpop.f32.mrb[0].mxu0
    %v443 = vadd.f32 0.0, %v442
    %v444 = vpop.f32.mrb[0].mxu0
    %v445 = vadd.f32 0.0, %v444
    %v446 = vpop.f32.mrb[0].mxu0
    %v447 = vadd.f32 0.0, %v446
    %v448 = vpop.f32.mrb[0].mxu0
    %v449 = vadd.f32 0.0, %v448
    %450 = vmatprep.mubr.bf16.mxu0 %v187
    %451 = vmatmul.mubr.bf16.gmra.mrb[0].mxu0 %v186
    %v452 = vpop.f32.mrb[0].mxu0
    %v453 = vadd.f32 0.0, %v452
    %v454 = vpop.f32.mrb[0].mxu0
    %v455 = vadd.f32 0.0, %v454
    %v456 = vpop.f32.mrb[0].mxu0
    %v457 = vadd.f32 0.0, %v456
    %v458 = vpop.f32.mrb[0].mxu0
    %v459 = vadd.f32 0.0, %v458
    %460 = vmatprep.mubr.bf16.mxu0 %v189
    %461 = vmatmul.mubr.bf16.gmra.mrb[0].mxu0 %v188
    %v462 = vpop.f32.mrb[0].mxu0
    %v463 = vadd.f32 0.0, %v462
    %v464 = vpop.f32.mrb[0].mxu0
    %v465 = vadd.f32 0.0, %v464
    %v466 = vpop.f32.mrb[0].mxu0
    %v467 = vadd.f32 0.0, %v466
    %v468 = vpop.f32.mrb[0].mxu0
    %v469 = vadd.f32 0.0, %v468
    %470 = vmatprep.mubr.bf16.mxu0 %v191
    %471 = vmatmul.mubr.bf16.gmra.mrb[0].mxu0 %v190
    %v472 = vpop.f32.mrb[0].mxu0
    %v473 = vadd.f32 0.0, %v472
    %v474 = vpop.f32.mrb[0].mxu0
    %v475 = vadd.f32 0.0, %v474
    %v476 = vpop.f32.mrb[0].mxu0
    %v477 = vadd.f32 0.0, %v476
    %v478 = vpop.f32.mrb[0].mxu0
    %v479 = vadd.f32 0.0, %v478
    %480 = vdwg.mxu0
    %v481 = vadd.f32 %v48, %v403
    %v482 = vadd.f32 %v49, %v405
    %v483 = vadd.f32 %v50, %v407
    %v484 = vadd.f32 %v51, %v409
    %v485 = vadd.f32 %v52, %v413
    %v486 = vadd.f32 %v53, %v415
    %v487 = vadd.f32 %v54, %v417
    %v488 = vadd.f32 %v55, %v419
    %v489 = vadd.f32 %v56, %v423
    %v490 = vadd.f32 %v57, %v425
    %v491 = vadd.f32 %v58, %v427
    %v492 = vadd.f32 %v59, %v429
    %v493 = vadd.f32 %v60, %v433
    %v494 = vadd.f32 %v61, %v435
    %v495 = vadd.f32 %v62, %v437
    %v496 = vadd.f32 %v63, %v439
    %v497 = vadd.f32 %v64, %v443
    %v498 = vadd.f32 %v65, %v445
    %v499 = vadd.f32 %v66, %v447
    %v500 = vadd.f32 %v67, %v449
    %v501 = vadd.f32 %v68, %v453
    %v502 = vadd.f32 %v69, %v455
    %v503 = vadd.f32 %v70, %v457
    %v504 = vadd.f32 %v71, %v459
    %v505 = vadd.f32 %v72, %v463
    %v506 = vadd.f32 %v73, %v465
    %v507 = vadd.f32 %v74, %v467
    %v508 = vadd.f32 %v75, %v469
    %v509 = vadd.f32 %v76, %v473
    %v510 = vadd.f32 %v77, %v475
    %v511 = vadd.f32 %v78, %v477
    %v512 = vadd.f32 %v79, %v479
    %513 = vst [vmem:[#allocation2] sm:$0xff] %v481
    %514 = vst [vmem:[#allocation2 + $0x8] sm:$0xff] %v482
    %515 = vst [vmem:[#allocation2 + $0x10] sm:$0xff] %v483
    %516 = vst [vmem:[#allocation2 + $0x18] sm:$0xff] %v484
    %517 = vst [vmem:[#allocation2 + $0x20] sm:$0xff] %v485
    %518 = vst [vmem:[#allocation2 + $0x28] sm:$0xff] %v486
    %519 = vst [vmem:[#allocation2 + $0x30] sm:$0xff] %v487
    %520 = vst [vmem:[#allocation2 + $0x38] sm:$0xff] %v488
    %521 = vst [vmem:[#allocation2 + $0x40] sm:$0xff] %v489
    %522 = vst [vmem:[#allocation2 + $0x48] sm:$0xff] %v490
    %523 = vst [vmem:[#allocation2 + $0x50] sm:$0xff] %v491
    %524 = vst [vmem:[#allocation2 + $0x58] sm:$0xff] %v492
    %525 = vst [vmem:[#allocation2 + $0x60] sm:$0xff] %v493
    %526 = vst [vmem:[#allocation2 + $0x68] sm:$0xff] %v494
    %527 = vst [vmem:[#allocation2 + $0x70] sm:$0xff] %v495
    %528 = vst [vmem:[#allocation2 + $0x78] sm:$0xff] %v496
    %529 = vst [vmem:[#allocation2 + $0x80] sm:$0xff] %v497
    %530 = vst [vmem:[#allocation2 + $0x88] sm:$0xff] %v498
    %531 = vst [vmem:[#allocation2 + $0x90] sm:$0xff] %v499
    %532 = vst [vmem:[#allocation2 + $0x98] sm:$0xff] %v500
    %533 = vst [vmem:[#allocation2 + $0xa0] sm:$0xff] %v501
    %534 = vst [vmem:[#allocation2 + $0xa8] sm:$0xff] %v502
    %535 = vst [vmem:[#allocation2 + $0xb0] sm:$0xff] %v503
    %536 = vst [vmem:[#allocation2 + $0xb8] sm:$0xff] %v504
    %537 = vst [vmem:[#allocation2 + $0xc0] sm:$0xff] %v505
    %538 = vst [vmem:[#allocation2 + $0xc8] sm:$0xff] %v506
    %539 = vst [vmem:[#allocation2 + $0xd0] sm:$0xff] %v507
    %540 = vst [vmem:[#allocation2 + $0xd8] sm:$0xff] %v508
    %541 = vst [vmem:[#allocation2 + $0xe0] sm:$0xff] %v509
    %542 = vst [vmem:[#allocation2 + $0xe8] sm:$0xff] %v510
    %543 = vst [vmem:[#allocation2 + $0xf0] sm:$0xff] %v511
    %544 = vst [vmem:[#allocation2 + $0xf8] sm:$0xff] %v512
    // Predicated region
    $region14: #{multi_head_attention.5} parent=1 // pred_check
      %p545 = pneg %p12
    $region15: #{multi_head_attention.5} parent=1 // pred_check_branch
      %547 = sbr.rel (%p545) target = $region17
    $region16: #{multi_head_attention.5} parent=1 // pred_region
      %v548 = vld [vmem:[#allocation2] sm:$0xff]
      %v549 = vld [vmem:[#allocation2 + $0x8] sm:$0xff]
      %v550 = vld [vmem:[#allocation2 + $0x10] sm:$0xff]
      %v551 = vld [vmem:[#allocation2 + $0x18] sm:$0xff]
      %v552 = vld [vmem:[#allocation2 + $0x20] sm:$0xff]
      %v553 = vld [vmem:[#allocation2 + $0x28] sm:$0xff]
      %v554 = vld [vmem:[#allocation2 + $0x30] sm:$0xff]
      %v555 = vld [vmem:[#allocation2 + $0x38] sm:$0xff]
      %v556 = vld [vmem:[#allocation2 + $0x40] sm:$0xff]
      %v557 = vld [vmem:[#allocation2 + $0x48] sm:$0xff]
      %v558 = vld [vmem:[#allocation2 + $0x50] sm:$0xff]
      %v559 = vld [vmem:[#allocation2 + $0x58] sm:$0xff]
      %v560 = vld [vmem:[#allocation2 + $0x60] sm:$0xff]
      %v561 = vld [vmem:[#allocation2 + $0x68] sm:$0xff]
      %v562 = vld [vmem:[#allocation2 + $0x70] sm:$0xff]
      %v563 = vld [vmem:[#allocation2 + $0x78] sm:$0xff]
      %v564 = vld [vmem:[#allocation2 + $0x80] sm:$0xff]
      %v565 = vld [vmem:[#allocation2 + $0x88] sm:$0xff]
      %v566 = vld [vmem:[#allocation2 + $0x90] sm:$0xff]
      %v567 = vld [vmem:[#allocation2 + $0x98] sm:$0xff]
      %v568 = vld [vmem:[#allocation2 + $0xa0] sm:$0xff]
      %v569 = vld [vmem:[#allocation2 + $0xa8] sm:$0xff]
      %v570 = vld [vmem:[#allocation2 + $0xb0] sm:$0xff]
      %v571 = vld [vmem:[#allocation2 + $0xb8] sm:$0xff]
      %v572 = vld [vmem:[#allocation2 + $0xc0] sm:$0xff]
      %v573 = vld [vmem:[#allocation2 + $0xc8] sm:$0xff]
      %v574 = vld [vmem:[#allocation2 + $0xd0] sm:$0xff]
      %v575 = vld [vmem:[#allocation2 + $0xd8] sm:$0xff]
      %v576 = vld [vmem:[#allocation2 + $0xe0] sm:$0xff]
      %v577 = vld [vmem:[#allocation2 + $0xe8] sm:$0xff]
      %v578 = vld [vmem:[#allocation2 + $0xf0] sm:$0xff]
      %v579 = vld [vmem:[#allocation2 + $0xf8] sm:$0xff]
      %580 = vst [vmem:[#allocation3] sm:$0xff] %v548
      %581 = vst [vmem:[#allocation3 + $0x8] sm:$0xff] %v549
      %582 = vst [vmem:[#allocation3 + $0x10] sm:$0xff] %v550
      %583 = vst [vmem:[#allocation3 + $0x18] sm:$0xff] %v551
      %584 = vst [vmem:[#allocation3 + $0x20] sm:$0xff] %v552
      %585 = vst [vmem:[#allocation3 + $0x28] sm:$0xff] %v553
      %586 = vst [vmem:[#allocation3 + $0x30] sm:$0xff] %v554
      %587 = vst [vmem:[#allocation3 + $0x38] sm:$0xff] %v555
      %588 = vst [vmem:[#allocation3 + $0x40] sm:$0xff] %v556
      %589 = vst [vmem:[#allocation3 + $0x48] sm:$0xff] %v557
      %590 = vst [vmem:[#allocation3 + $0x50] sm:$0xff] %v558
      %591 = vst [vmem:[#allocation3 + $0x58] sm:$0xff] %v559
      %592 = vst [vmem:[#allocation3 + $0x60] sm:$0xff] %v560
      %593 = vst [vmem:[#allocation3 + $0x68] sm:$0xff] %v561
      %594 = vst [vmem:[#allocation3 + $0x70] sm:$0xff] %v562
      %595 = vst [vmem:[#allocation3 + $0x78] sm:$0xff] %v563
      %596 = vst [vmem:[#allocation3 + $0x80] sm:$0xff] %v564
      %597 = vst [vmem:[#allocation3 + $0x88] sm:$0xff] %v565
      %598 = vst [vmem:[#allocation3 + $0x90] sm:$0xff] %v566
      %599 = vst [vmem:[#allocation3 + $0x98] sm:$0xff] %v567
      %600 = vst [vmem:[#allocation3 + $0xa0] sm:$0xff] %v568
      %601 = vst [vmem:[#allocation3 + $0xa8] sm:$0xff] %v569
      %602 = vst [vmem:[#allocation3 + $0xb0] sm:$0xff] %v570
      %603 = vst [vmem:[#allocation3 + $0xb8] sm:$0xff] %v571
      %604 = vst [vmem:[#allocation3 + $0xc0] sm:$0xff] %v572
      %605 = vst [vmem:[#allocation3 + $0xc8] sm:$0xff] %v573
      %606 = vst [vmem:[#allocation3 + $0xd0] sm:$0xff] %v574
      %607 = vst [vmem:[#allocation3 + $0xd8] sm:$0xff] %v575
      %608 = vst [vmem:[#allocation3 + $0xe0] sm:$0xff] %v576
      %609 = vst [vmem:[#allocation3 + $0xe8] sm:$0xff] %v577
      %610 = vst [vmem:[#allocation3 + $0xf0] sm:$0xff] %v578
      %611 = vst [vmem:[#allocation3 + $0xf8] sm:$0xff] %v579
    $region17: #{multi_head_attention.5} parent=1 // pred_fallthru
      _
    // Predicated region
    $region18: #{multi_head_attention.5} parent=1 // pred_check
      _
    $region19: #{multi_head_attention.5} parent=1 // pred_check_branch
      %613 = sbr.rel (0) target = $region21
    $region20: #{multi_head_attention.5} parent=1 // pred_region
      %s615 = ssub.s32 4096, 4096
      %616 = vsyncadd [#allocation4], %s615
      %s617 = sshll.u32 [#allocation3], 4
      %s618 = int_to_ptr.vmem [resolvable:$true] %s617
      %623 = dma.vmem_to_hbm [thread:$0]  %s618, 4096, %s2, [#allocation4], 256, 256, 16
    $region21: #{multi_head_attention.5} parent=1 // pred_fallthru
      _
    // Predicated region
    $region22: #{multi_head_attention.5} parent=1 // pred_check
      _
    $region23: #{multi_head_attention.5} parent=1 // pred_check_branch
      %625 = sbr.rel (0) target = $region25
    $region24: #{multi_head_attention.5} parent=1 // pred_region
      %626 = dma.done [#allocation4], 4096
    $region25: #{multi_head_attention.5} parent=1 // pred_fallthru
      _
    %627 = vsyncpa [#allocation4], 1

// kernel: multi_head_attention.4
$region0: #{multi_head_attention.4}
  #allocation0 [shape = 'u32[]', space=smem, size = 0x4, offset = 0x4, fixed_abs, tag = 'smem constant byte address 0x4 - core index']
  #allocation1 [shape = 'u32[144,128]{1,0:T(1,128)}', space=vmem, size = 0x12000, scoped, tag = 'internal scratch']
  %s0 = inlined_call_operand.vmem [shape: bf16[2,64,768], index: 0, kind: input, shape index: {}]
  %s1 = inlined_call_operand.vmem [shape: bf16[2,64,256], index: 1, kind: output, shape index: {}]
  %s2 = sld [smem:[#allocation0]]
  $region100: #{multi_head_attention.4} parent=0
    _
  %s4 = ssub.s32 1, %s2
  %s5 = scalar_select 0, %s4, %s2
  $region1: #{multi_head_attention.4} parent=0
    #allocation2 [shape = 'u8[98304]{0}', space=vmem, size = 0x18000, scoped, tag = 'input window, operand 0']
    #allocation3 [shape = 'u8[32768]{0}', space=vmem, size = 0x8000, scoped, tag = 'output window, operand 0']
    loop: start=0, step=1, limit=6
    $region2: #{multi_head_attention.4} parent=1 // loop_pre_header
      _
    $region3: #{multi_head_attention.4} parent=1 // loop_header
      %s7 = sphi 0, %s11
      %p8 = scmp.ge.s32.totalorder %s7, 6
      %s14 = sphi 0, %s26
      %s15 = sphi 0, %s22
      %s16 = sphi 0, %s14
      %s17 = sphi 0, %s15
      %s18 = sphi 0, %s16
      %s19 = sphi 0, %s17
      %s31 = sphi 0, %s33
      %s34 = sphi 0, %s31
      %s35 = sphi 0, %s34
      %s51 = sphi 0, %s35
      %s59 = sphi 0, %s61
      %s62 = sphi 0, %s59
      %s63 = sphi 0, %s62
      %s79 = sphi 0, %s63
    $region4: #{multi_head_attention.4} parent=1 // loop_header_branch
      %10 = sbr.rel (%p8) target = $region8
    $region5: #{multi_head_attention.4} parent=1 // loop_body
      %s12 = ssub.s32 %s7, 1
      %s13 = ssub.s32 %s7, 2
      %s20 = sadd.s32 1, %s15
      %p21 = scmp.ge.s32.totalorder %s20, 2
      %s22 = scalar_select %p21, 0, %s20
      %s23 = sadd.s32 1, %s14
      %s24 = scalar_select %p21, %s23, %s14
      %p25 = scmp.ge.s32.totalorder %s24, 2
      %s26 = scalar_select %p25, 0, %s24
      %s27 = ssub.s32 %s14, %s26
      %s28 = ssub.s32 %s15, %s22
      %s29 = sor.u32 %s27, %s28
      %p30 = scmp.eq.s32.totalorder %s29, 0
      %s32 = sadd.s32 %s31, 1
      %s33 = scalar_select %p30, %s31, %s32
      %p36 = pneg %p30
      %p37 = scmp.eq.s32.totalorder %s7, 3
      %p38 = por %p36, %p37
      %p39 = scmp.ne.s32.totalorder %s31, %s34
      %p40 = scmp.eq.s32.totalorder %s7, 0
      %p41 = por %p39, %p40
      %p42 = scmp.ne.s32.totalorder %s31, %s34
      %p43 = scmp.eq.s32.totalorder %s12, 3
      %p44 = por %p42, %p43
      %p45 = scmp.ne.s32.totalorder %s34, %s35
      %p46 = scmp.eq.s32.totalorder %s12, 0
      %p47 = por %p45, %p46
      %p48 = scmp.ne.s32.totalorder %s34, %s35
      %p49 = scmp.eq.s32.totalorder %s13, 3
      %p50 = por %p48, %p49
      %p52 = scmp.ne.s32.totalorder %s35, %s51
      %p53 = scmp.eq.s32.totalorder %s13, 0
      %p54 = por %p52, %p53
      %s55 = ssub.s32 %s14, %s26
      %s56 = ssub.s32 %s15, %s22
      %s57 = sor.u32 %s55, %s56
      %p58 = scmp.eq.s32.totalorder %s57, 0
      %s60 = sadd.s32 %s59, 1
      %s61 = scalar_select %p58, %s59, %s60
      %p64 = pneg %p58
      %p65 = scmp.eq.s32.totalorder %s7, 3
      %p66 = por %p64, %p65
      %p67 = scmp.ne.s32.totalorder %s59, %s62
      %p68 = scmp.eq.s32.totalorder %s7, 0
      %p69 = por %p67, %p68
      %p70 = scmp.ne.s32.totalorder %s59, %s62
      %p71 = scmp.eq.s32.totalorder %s12, 3
      %p72 = por %p70, %p71
      %p73 = scmp.ne.s32.totalorder %s62, %s63
      %p74 = scmp.eq.s32.totalorder %s12, 0
      %p75 = por %p73, %p74
      %p76 = scmp.ne.s32.totalorder %s62, %s63
      %p77 = scmp.eq.s32.totalorder %s13, 3
      %p78 = por %p76, %p77
      %p80 = scmp.ne.s32.totalorder %s63, %s79
      %p81 = scmp.eq.s32.totalorder %s13, 0
      %p82 = por %p80, %p81
      %p83 = scmp.le.s32.totalorder 1, %s7
      %p84 = scmp.lt.s32.totalorder %s7, 5
      %p85 = pnand %p83, %p84
      %p86 = pneg %p85
      // Predicated region
      $region9: #{multi_head_attention.4} parent=5 // pred_check
        _
      $region10: #{multi_head_attention.4} parent=5 // pred_check_branch
        %88 = sbr.rel (%p85) target = $region12
      $region11: #{multi_head_attention.4} parent=5 // pred_region
        %s89 = ssub.s32 %s7, 1
      $region12: #{multi_head_attention.4} parent=5 // pred_fallthru
        _
      %p90 = scmp.lt.s32.totalorder %s7, 4
      // Predicated region
      $region13: #{multi_head_attention.4} parent=5 // pred_check
        %p91 = pneg %p90
      $region14: #{multi_head_attention.4} parent=5 // pred_check_branch
        %93 = sbr.rel (%p91) target = $region16
      $region15: #{multi_head_attention.4} parent=5 // pred_region
        // Predicated region
        $region17: #{multi_head_attention.4} parent=15 // pred_check
          %p94 = pneg %p41
        $region18: #{multi_head_attention.4} parent=15 // pred_check_branch
          %96 = sbr.rel (%p94) target = $region20
        $region19: #{multi_head_attention.4} parent=15 // pred_region
          %s97 = sand.u32 %s31, 1
          %s98 = sand.u32 %s31, 1
          %s99 = smul.addr %s98, 96
          %s100 = scalar_lea.vmem [#allocation2], %s99
          %s101 = smul.u32 3, %s15
          %s102 = smul.addr %s14, 48
          %s103 = sadd.s32 %s101, %s102
          %s104 = smul.addr %s103, 4
          %s105 = scalar_lea.vmem %s0, %s104
          // Predicated region
          $region21: #{multi_head_attention.4} parent=19 // pred_check
            _
          $region22: #{multi_head_attention.4} parent=19 // pred_check_branch
            %107 = sbr.rel (0) target = $region24
          $region23: #{multi_head_attention.4} parent=19 // pred_region
            // Predicated region
            $region25: #{multi_head_attention.4} parent=23 // pred_check
              _
            $region26: #{multi_head_attention.4} parent=23 // pred_check_branch
              %109 = sbr.rel (0) target = $region28
            $region27: #{multi_head_attention.4} parent=23 // pred_region
              %s110 = scalar_lea.vmem %s105, 8
              %s111 = scalar_lea.vmem %s100, 8 [#allocation2]
              loop: start=0, step=1, limit=1
              $region29: #{multi_head_attention.4} parent=27 // loop_pre_header
                _
              $region30: #{multi_head_attention.4} parent=27 // loop_header
                %s113 = sphi 0, %s117
                %p114 = scmp.ge.s32.totalorder %s113, 1
                %s118 = sphi %s105, %s105
                %s119 = sphi %s100, %s100
              $region31: #{multi_head_attention.4} parent=27 // loop_header_branch
                %116 = sbr.rel (%p114) target = $region35
              $region32: #{multi_head_attention.4} parent=27 // loop_body
                %v120 = vld [vmem:[%s118] sm:$0xff]
                %121 = vst [vmem:[%s119] sm:$0xff] %v120
                %v122 = vld [vmem:[%s118 + $0x18] sm:$0xff]
                %123 = vst [vmem:[%s119 + $0xc] sm:$0xff] %v122
                %v124 = vld [vmem:[%s118 + $0x30] sm:$0xff]
                %125 = vst [vmem:[%s119 + $0x18] sm:$0xff] %v124
                %v126 = vld [vmem:[%s118 + $0x48] sm:$0xff]
                %127 = vst [vmem:[%s119 + $0x24] sm:$0xff] %v126
                %v128 = vld [vmem:[%s118 + $0x60] sm:$0xff]
                %129 = vst [vmem:[%s119 + $0x30] sm:$0xff] %v128
                %v130 = vld [vmem:[%s118 + $0x78] sm:$0xff]
                %131 = vst [vmem:[%s119 + $0x3c] sm:$0xff] %v130
                %v132 = vld [vmem:[%s118 + $0x90] sm:$0xff]
                %133 = vst [vmem:[%s119 + $0x48] sm:$0xff] %v132
                %v134 = vld [vmem:[%s118 + $0xa8] sm:$0xff]
                %135 = vst [vmem:[%s119 + $0x54] sm:$0xff] %v134
              $region33: #{multi_head_attention.4} parent=27 // loop_footer
                %s117 = sadd.s32 1, %s113
              $region34: #{multi_head_attention.4} parent=27 // loop_footer_branch
                %112 = sbr.rel target = $region30
              $region35: #{multi_head_attention.4} parent=27 // loop_exit
                _
              loop: start=0, step=1, limit=1
              $region36: #{multi_head_attention.4} parent=27 // loop_pre_header
                _
              $region37: #{multi_head_attention.4} parent=27 // loop_header
                %s138 = sphi 0, %s142
                %p139 = scmp.ge.s32.totalorder %s138, 1
                %s143 = sphi %s110, %s110
                %s144 = sphi %s111, %s111
              $region38: #{multi_head_attention.4} parent=27 // loop_header_branch
                %141 = sbr.rel (%p139) target = $region42
              $region39: #{multi_head_attention.4} parent=27 // loop_body
                %v145 = vld [vmem:[%s143] sm:$0xf]
                %146 = vst [vmem:[%s144] sm:$0xf] %v145
                %v147 = vld [vmem:[%s143 + $0x18] sm:$0xf]
                %148 = vst [vmem:[%s144 + $0xc] sm:$0xf] %v147
                %v149 = vld [vmem:[%s143 + $0x30] sm:$0xf]
                %150 = vst [vmem:[%s144 + $0x18] sm:$0xf] %v149
                %v151 = vld [vmem:[%s143 + $0x48] sm:$0xf]
                %152 = vst [vmem:[%s144 + $0x24] sm:$0xf] %v151
                %v153 = vld [vmem:[%s143 + $0x60] sm:$0xf]
                %154 = vst [vmem:[%s144 + $0x30] sm:$0xf] %v153
                %v155 = vld [vmem:[%s143 + $0x78] sm:$0xf]
                %156 = vst [vmem:[%s144 + $0x3c] sm:$0xf] %v155
                %v157 = vld [vmem:[%s143 + $0x90] sm:$0xf]
                %158 = vst [vmem:[%s144 + $0x48] sm:$0xf] %v157
                %v159 = vld [vmem:[%s143 + $0xa8] sm:$0xf]
                %160 = vst [vmem:[%s144 + $0x54] sm:$0xf] %v159
              $region40: #{multi_head_attention.4} parent=27 // loop_footer
                %s142 = sadd.s32 1, %s138
              $region41: #{multi_head_attention.4} parent=27 // loop_footer_branch
                %137 = sbr.rel target = $region37
              $region42: #{multi_head_attention.4} parent=27 // loop_exit
                _
            $region28: #{multi_head_attention.4} parent=23 // pred_fallthru
              _
          $region24: #{multi_head_attention.4} parent=19 // pred_fallthru
            _
          %161 = vnop
        $region20: #{multi_head_attention.4} parent=15 // pred_fallthru
          _
      $region16: #{multi_head_attention.4} parent=5 // pred_fallthru
        _
      %p162 = scmp.le.s32.totalorder 1, %s7
      %p163 = scmp.lt.s32.totalorder %s7, 5
      %p164 = pnand %p162, %p163
      %p165 = pneg %p164
      // Predicated region
      $region43: #{multi_head_attention.4} parent=5 // pred_check
        _
      $region44: #{multi_head_attention.4} parent=5 // pred_check_branch
        %167 = sbr.rel (%p164) target = $region46
      $region45: #{multi_head_attention.4} parent=5 // pred_region
        %s168 = ssub.s32 %s7, 1
        %s169 = sand.u32 %s34, 1
        %s170 = sand.u32 %s34, 1
        %s171 = smul.addr %s170, 96
        %s172 = scalar_lea.vmem [#allocation2], %s171
        // Predicated region
        $region47: #{multi_head_attention.4} parent=45 // pred_check
          %p173 = pneg %p47
        $region48: #{multi_head_attention.4} parent=45 // pred_check_branch
          %175 = sbr.rel (%p173) target = $region50
        $region49: #{multi_head_attention.4} parent=45 // pred_region
          _
        $region50: #{multi_head_attention.4} parent=45 // pred_fallthru
          _
        %s176 = sand.u32 %s34, 1
        %s177 = sand.u32 %s34, 1
        %s178 = smul.addr %s177, 96
        %s179 = scalar_lea.vmem [#allocation2], %s178
        %p180 = pneg %p47
        %p181 = pneg %p44
        %p182 = pneg %p75
        %p183 = pneg %p72
        %s184 = sand.u32 %s62, 1
        %s185 = sand.u32 %s62, 1
        %s186 = smul.addr %s185, 32
        %s187 = scalar_lea.vmem [#allocation3], %s186
        %s188 = smul.u32 3, %s17
        %v190 = vld [vmem:[%s172] sm:$0xf]
        %v191 = vld [vmem:[%s172 + $0xc] sm:$0xf]
        %v192 = vld [vmem:[%s172 + $0x18] sm:$0xf]
        %v193 = vld [vmem:[%s172 + $0x24] sm:$0xf]
        %v194 = vld [vmem:[%s172 + $0x30] sm:$0xf]
        %v195 = vld [vmem:[%s172 + $0x3c] sm:$0xf]
        %v196 = vld [vmem:[%s172 + $0x48] sm:$0xf]
        %v197 = vld [vmem:[%s172 + $0x54] sm:$0xf]
        %v198 = vld [vmem:[%s172 + $0x4] sm:$0xf]
        %v199 = vld [vmem:[%s172 + $0x10] sm:$0xf]
        %v200 = vld [vmem:[%s172 + $0x1c] sm:$0xf]
        %v201 = vld [vmem:[%s172 + $0x28] sm:$0xf]
        %v202 = vld [vmem:[%s172 + $0x34] sm:$0xf]
        %v203 = vld [vmem:[%s172 + $0x40] sm:$0xf]
        %v204 = vld [vmem:[%s172 + $0x4c] sm:$0xf]
        %v205 = vld [vmem:[%s172 + $0x58] sm:$0xf]
        %v214 = vunpack.c.l.b16 %v190
        %v215 = vunpack.c.l.b16 %v191
        %v216 = vunpack.c.l.b16 %v192
        %v217 = vunpack.c.l.b16 %v193
        %v218 = vunpack.c.l.b16 %v194
        %v219 = vunpack.c.l.b16 %v195
        %v220 = vunpack.c.l.b16 %v196
        %v221 = vunpack.c.l.b16 %v197
        %v222 = vpack.c.b16 %v215, %v214
        %v223 = vpack.c.b16 %v217, %v216
        %v224 = vpack.c.b16 %v219, %v218
        %v225 = vpack.c.b16 %v221, %v220
        %226 = vrot.lane.b32.xlu0 %v222, 64
        %v227 = vpop.permute.xlu0 %226
        %228 = vrot.lane.b32.xlu0 %v223, 64
        %v229 = vpop.permute.xlu0 %228
        %230 = vrot.lane.b32.xlu0 %v224, 64
        %v231 = vpop.permute.xlu0 %230
        %232 = vrot.lane.b32.xlu0 %v225, 64
        %v233 = vpop.permute.xlu0 %232
        %vm234 = vcmask 523264
        %v236 = vsel %vm234, %v222, 0
        %v239 = vsel %vm234, %v223, 0
        %v242 = vsel %vm234, %v224, 0
        %v245 = vsel %vm234, %v225, 0
        %v248 = vsel %vm234, %v227, 0
        %v251 = vsel %vm234, %v229, 0
        %v254 = vsel %vm234, %v231, 0
        %v257 = vsel %vm234, %v233, 0
        %259 = vmatprep.subr.bf16.mxu0 0
        %260 = vmatpush1.bf16.xpose.msra.mxu0 %v248
        %261 = vmatprep.subr.bf16.mxu0 0
        %262 = vmatpush1.bf16.xpose.msra.mxu0 %v251
        %263 = vmatprep.subr.bf16.mxu0 0
        %264 = vmatpush1.bf16.xpose.msra.mxu0 %v254
        %265 = vmatprep.subr.bf16.mxu0 0
        %266 = vmatpush1.bf16.xpose.msra.mxu0 %v257
        %267 = vmatprep.subr.bf16.mxu0 0
        %268 = vmatpush1.bf16.xpose.msra.mxu0 0
        %269 = vmatprep.subr.bf16.mxu0 0
        %270 = vmatpush1.bf16.xpose.msra.mxu0 0
        %271 = vmatprep.subr.bf16.mxu0 0
        %272 = vmatpush1.bf16.xpose.msra.mxu0 0
        %273 = vmatprep.subr.bf16.mxu0 0
        %274 = vmatpush1.bf16.xpose.msra.mxu0 0
        %275 = vmatprep.subr.bf16.mxu0 0
        %276 = vmatpush1.bf16.xpose.msra.mxu0 0
        %277 = vmatprep.subr.bf16.mxu0 0
        %278 = vmatpush1.bf16.xpose.msra.mxu0 0
        %279 = vmatprep.subr.bf16.mxu0 0
        %280 = vmatpush1.bf16.xpose.msra.mxu0 0
        %281 = vmatprep.subr.bf16.mxu0 0
        %282 = vmatpush1.bf16.xpose.msra.mxu0 0
        %283 = vmatprep.subr.bf16.mxu0 0
        %284 = vmatpush1.bf16.xpose.msra.mxu0 0
        %285 = vmatprep.subr.bf16.mxu0 0
        %286 = vmatpush1.bf16.xpose.msra.mxu0 0
        %287 = vmatprep.subr.bf16.mxu0 0
        %288 = vmatpush1.bf16.xpose.msra.mxu0 0
        %289 = vmatprep.subr.bf16.mxu0 0
        %290 = vmatpush1.bf16.xpose.msra.mxu0 0
        %291 = vmatprep.mubr.bf16.mxu0 0
        %292 = vmatmul.mubr.bf16.gmra.mrb[0].mxu0 %v236
        %v293 = vpop.f32.mrb[0].mxu0
        %v294 = vadd.f32 0.0, %v293
        %v295 = vpop.f32.mrb[0].mxu0
        %v296 = vpop.f32.mrb[0].mxu0
        %v297 = vadd.f32 0.0, %v296
        %v298 = vpop.f32.mrb[0].mxu0
        %299 = vmatprep.mubr.bf16.mxu0 0
        %300 = vmatmul.mubr.bf16.gmra.mrb[0].mxu0 %v239
        %v301 = vpop.f32.mrb[0].mxu0
        %v302 = vadd.f32 0.0, %v301
        %v303 = vpop.f32.mrb[0].mxu0
        %v304 = vpop.f32.mrb[0].mxu0
        %v305 = vadd.f32 0.0, %v304
        %v306 = vpop.f32.mrb[0].mxu0
        %307 = vmatprep.mubr.bf16.mxu0 0
        %308 = vmatmul.mubr.bf16.gmra.mrb[0].mxu0 %v242
        %v309 = vpop.f32.mrb[0].mxu0
        %v310 = vadd.f32 0.0, %v309
        %v311 = vpop.f32.mrb[0].mxu0
        %v312 = vpop.f32.mrb[0].mxu0
        %v313 = vadd.f32 0.0, %v312
        %v314 = vpop.f32.mrb[0].mxu0
        %315 = vmatprep.mubr.bf16.mxu0 0
        %316 = vmatmul.mubr.bf16.gmra.mrb[0].mxu0 %v245
        %v317 = vpop.f32.mrb[0].mxu0
        %v318 = vadd.f32 0.0, %v317
        %v319 = vpop.f32.mrb[0].mxu0
        %v320 = vpop.f32.mrb[0].mxu0
        %v321 = vadd.f32 0.0, %v320
        %v322 = vpop.f32.mrb[0].mxu0
        %323 = vdwg.mxu0
        %v324 = vsel %vm234, %v294, -inf
        %325 = vmax.xlane.f32.xlu0 %v324
        %v326 = vpop.xlane.xlu0 %325
        %v327 = vsel %vm234, %v297, -inf
        %328 = vmax.xlane.f32.xlu0 %v327
        %v329 = vpop.xlane.xlu0 %328
        %v330 = vsel %vm234, %v302, -inf
        %331 = vmax.xlane.f32.xlu0 %v330
        %v332 = vpop.xlane.xlu0 %331
        %v333 = vsel %vm234, %v305, -inf
        %334 = vmax.xlane.f32.xlu0 %v333
        %v335 = vpop.xlane.xlu0 %334
        %v336 = vsel %vm234, %v310, -inf
        %337 = vmax.xlane.f32.xlu0 %v336
        %v338 = vpop.xlane.xlu0 %337
        %v339 = vsel %vm234, %v313, -inf
        %340 = vmax.xlane.f32.xlu0 %v339
        %v341 = vpop.xlane.xlu0 %340
        %v342 = vsel %vm234, %v318, -inf
        %343 = vmax.xlane.f32.xlu0 %v342
        %v344 = vpop.xlane.xlu0 %343
        %v345 = vsel %vm234, %v321, -inf
        %346 = vmax.xlane.f32.xlu0 %v345
        %v347 = vpop.xlane.xlu0 %346
        %v348 = vsub.f32 %v294, %v326
        %v349 = vsub.f32 %v297, %v329
        %v350 = vsub.f32 %v302, %v332
        %v351 = vsub.f32 %v305, %v335
        %v352 = vsub.f32 %v310, %v338
        %v353 = vsub.f32 %v313, %v341
        %v354 = vsub.f32 %v318, %v344
        %v355 = vsub.f32 %v321, %v347
        %v356 = vmul.f32 %v348, 1.442695
        %v357 = vpow.pop %v356
        %v358 = vmul.f32 %v349, 1.442695
        %v359 = vpow.pop %v358
        %v360 = vmul.f32 %v350, 1.442695
        %v361 = vpow.pop %v360
        %v362 = vmul.f32 %v351, 1.442695
        %v363 = vpow.pop %v362
        %v364 = vmul.f32 %v352, 1.442695
        %v365 = vpow.pop %v364
        %v366 = vmul.f32 %v353, 1.442695
        %v367 = vpow.pop %v366
        %v368 = vmul.f32 %v354, 1.442695
        %v369 = vpow.pop %v368
        %v370 = vmul.f32 %v355, 1.442695
        %v371 = vpow.pop %v370
        %v372 = vsel %vm234, %v357, 0.0
        %373 = vadd.xlane.f32.xlu0 %v372
        %v374 = vpop.xlane.xlu0 %373
        %v375 = vsel %vm234, %v359, 0.0
        %376 = vadd.xlane.f32.xlu0 %v375
        %v377 = vpop.xlane.xlu0 %376
        %v378 = vsel %vm234, %v361, 0.0
        %379 = vadd.xlane.f32.xlu0 %v378
        %v380 = vpop.xlane.xlu0 %379
        %v381 = vsel %vm234, %v363, 0.0
        %382 = vadd.xlane.f32.xlu0 %v381
        %v383 = vpop.xlane.xlu0 %382
        %v384 = vsel %vm234, %v365, 0.0
        %385 = vadd.xlane.f32.xlu0 %v384
        %v386 = vpop.xlane.xlu0 %385
        %v387 = vsel %vm234, %v367, 0.0
        %388 = vadd.xlane.f32.xlu0 %v387
        %v389 = vpop.xlane.xlu0 %388
        %v390 = vsel %vm234, %v369, 0.0
        %391 = vadd.xlane.f32.xlu0 %v390
        %v392 = vpop.xlane.xlu0 %391
        %v393 = vsel %vm234, %v371, 0.0
        %394 = vadd.xlane.f32.xlu0 %v393
        %v395 = vpop.xlane.xlu0 %394
        %v396 = vpack.c.bf16 %v359, %v357
        %v397 = vpack.c.bf16 %v363, %v361
        %v398 = vpack.c.bf16 %v367, %v365
        %v399 = vpack.c.bf16 %v371, %v369
        %v408 = vunpack.c.l.b16 %v198
        %v409 = vunpack.c.l.b16 %v199
        %v410 = vunpack.c.l.b16 %v200
        %v411 = vunpack.c.l.b16 %v201
        %v412 = vunpack.c.l.b16 %v202
        %v413 = vunpack.c.l.b16 %v203
        %v414 = vunpack.c.l.b16 %v204
        %v415 = vunpack.c.l.b16 %v205
        %v416 = vpack.c.b16 %v409, %v408
        %v417 = vpack.c.b16 %v411, %v410
        %v418 = vpack.c.b16 %v413, %v412
        %v419 = vpack.c.b16 %v415, %v414
        %v425 = vsel %vm234, %v396, 0
        %v428 = vsel %vm234, %v397, 0
        %v431 = vsel %vm234, %v398, 0
        %v434 = vsel %vm234, %v399, 0
        %436 = vmatprep.subr.bf16.mxu0 0
        %437 = vmatpush1.bf16.msra.mxu0 %v416
        %438 = vmatprep.subr.bf16.mxu0 0
        %439 = vmatpush1.bf16.msra.mxu0 %v417
        %440 = vmatprep.subr.bf16.mxu0 0
        %441 = vmatpush1.bf16.msra.mxu0 %v418
        %442 = vmatprep.subr.bf16.mxu0 0
        %443 = vmatpush1.bf16.msra.mxu0 %v419
        %444 = vmatprep.subr.bf16.mxu0 0
        %445 = vmatpush1.bf16.msra.mxu0 0
        %446 = vmatprep.subr.bf16.mxu0 0
        %447 = vmatpush1.bf16.msra.mxu0 0
        %448 = vmatprep.subr.bf16.mxu0 0
        %449 = vmatpush1.bf16.msra.mxu0 0
        %450 = vmatprep.subr.bf16.mxu0 0
        %451 = vmatpush1.bf16.msra.mxu0 0
        %452 = vmatprep.subr.bf16.mxu0 0
        %453 = vmatpush1.bf16.msra.mxu0 0
        %454 = vmatprep.subr.bf16.mxu0 0
        %455 = vmatpush1.bf16.msra.mxu0 0
        %456 = vmatprep.subr.bf16.mxu0 0
        %457 = vmatpush1.bf16.msra.mxu0 0
        %458 = vmatprep.subr.bf16.mxu0 0
        %459 = vmatpush1.bf16.msra.mxu0 0
        %460 = vmatprep.subr.bf16.mxu0 0
        %461 = vmatpush1.bf16.msra.mxu0 0
        %462 = vmatprep.subr.bf16.mxu0 0
        %463 = vmatpush1.bf16.msra.mxu0 0
        %464 = vmatprep.subr.bf16.mxu0 0
        %465 = vmatpush1.bf16.msra.mxu0 0
        %466 = vmatprep.subr.bf16.mxu0 0
        %467 = vmatpush1.bf16.msra.mxu0 0
        %468 = vmatprep.mubr.bf16.mxu0 0
        %469 = vmatmul.mubr.bf16.gmra.mrb[0].mxu0 %v425
        %v470 = vpop.f32.mrb[0].mxu0
        %v471 = vadd.f32 0.0, %v470
        %v472 = vpop.f32.mrb[0].mxu0
        %v473 = vpop.f32.mrb[0].mxu0
        %v474 = vadd.f32 0.0, %v473
        %v475 = vpop.f32.mrb[0].mxu0
        %476 = vmatprep.mubr.bf16.mxu0 0
        %477 = vmatmul.mubr.bf16.gmra.mrb[0].mxu0 %v428
        %v478 = vpop.f32.mrb[0].mxu0
        %v479 = vadd.f32 0.0, %v478
        %v480 = vpop.f32.mrb[0].mxu0
        %v481 = vpop.f32.mrb[0].mxu0
        %v482 = vadd.f32 0.0, %v481
        %v483 = vpop.f32.mrb[0].mxu0
        %484 = vmatprep.mubr.bf16.mxu0 0
        %485 = vmatmul.mubr.bf16.gmra.mrb[0].mxu0 %v431
        %v486 = vpop.f32.mrb[0].mxu0
        %v487 = vadd.f32 0.0, %v486
        %v488 = vpop.f32.mrb[0].mxu0
        %v489 = vpop.f32.mrb[0].mxu0
        %v490 = vadd.f32 0.0, %v489
        %v491 = vpop.f32.mrb[0].mxu0
        %492 = vmatprep.mubr.bf16.mxu0 0
        %493 = vmatmul.mubr.bf16.gmra.mrb[0].mxu0 %v434
        %v494 = vpop.f32.mrb[0].mxu0
        %v495 = vadd.f32 0.0, %v494
        %v496 = vpop.f32.mrb[0].mxu0
        %v497 = vpop.f32.mrb[0].mxu0
        %v498 = vadd.f32 0.0, %v497
        %v499 = vpop.f32.mrb[0].mxu0
        %500 = vdwg.mxu0
        %v501 = vrcp.pop %v374
        %v502 = vrcp.pop %v377
        %v503 = vrcp.pop %v380
        %v504 = vrcp.pop %v383
        %v505 = vrcp.pop %v386
        %v506 = vrcp.pop %v389
        %v507 = vrcp.pop %v392
        %v508 = vrcp.pop %v395
        %v509 = vmul.f32 %v471, %v501
        %v510 = vmul.f32 %v474, %v502
        %v511 = vmul.f32 %v479, %v503
        %v512 = vmul.f32 %v482, %v504
        %v513 = vmul.f32 %v487, %v505
        %v514 = vmul.f32 %v490, %v506
        %v515 = vmul.f32 %v495, %v507
        %v516 = vmul.f32 %v498, %v508
        %v517 = vpack.c.bf16 %v510, %v509
        %v518 = vpack.c.bf16 %v512, %v511
        %v519 = vpack.c.bf16 %v514, %v513
        %v520 = vpack.c.bf16 %v516, %v515
        %v521 = vld [vmem:[%s172 + $0x8] sm:$0xf]
        %v522 = vld [vmem:[%s172 + $0x14] sm:$0xf]
        %v523 = vld [vmem:[%s172 + $0x20] sm:$0xf]
        %v524 = vld [vmem:[%s172 + $0x2c] sm:$0xf]
        %v525 = vld [vmem:[%s172 + $0x38] sm:$0xf]
        %v526 = vld [vmem:[%s172 + $0x44] sm:$0xf]
        %v527 = vld [vmem:[%s172 + $0x50] sm:$0xf]
        %v528 = vld [vmem:[%s172 + $0x5c] sm:$0xf]
        %529 = vrot.lane.b32.xlu0 %v416, 64
        %v530 = vpop.permute.xlu0 %529
        %531 = vrot.lane.b32.xlu0 %v417, 64
        %v532 = vpop.permute.xlu0 %531
        %533 = vrot.lane.b32.xlu0 %v418, 64
        %v534 = vpop.permute.xlu0 %533
        %535 = vrot.lane.b32.xlu0 %v419, 64
        %v536 = vpop.permute.xlu0 %535
        %v545 = vunpack.c.l.b16 %v521
        %v546 = vunpack.c.l.b16 %v522
        %v547 = vunpack.c.l.b16 %v523
        %v548 = vunpack.c.l.b16 %v524
        %v549 = vunpack.c.l.b16 %v525
        %v550 = vunpack.c.l.b16 %v526
        %v551 = vunpack.c.l.b16 %v527
        %v552 = vunpack.c.l.b16 %v528
        %v553 = vpack.c.b16 %v546, %v545
        %v554 = vpack.c.b16 %v548, %v547
        %v555 = vpack.c.b16 %v550, %v549
        %v556 = vpack.c.b16 %v552, %v551
        %v558 = vsel %vm234, %v530, 0
        %v561 = vsel %vm234, %v532, 0
        %v564 = vsel %vm234, %v534, 0
        %v567 = vsel %vm234, %v536, 0
        %v570 = vsel %vm234, %v553, 0
        %v573 = vsel %vm234, %v554, 0
        %v576 = vsel %vm234, %v555, 0
        %v579 = vsel %vm234, %v556, 0
        %581 = vmatprep.subr.bf16.mxu0 0
        %582 = vmatpush1.bf16.xpose.msra.mxu0 %v570
        %583 = vmatprep.subr.bf16.mxu0 0
        %584 = vmatpush1.bf16.xpose.msra.mxu0 %v573
        %585 = vmatprep.subr.bf16.mxu0 0
        %586 = vmatpush1.bf16.xpose.msra.mxu0 %v576
        %587 = vmatprep.subr.bf16.mxu0 0
        %588 = vmatpush1.bf16.xpose.msra.mxu0 %v579
        %589 = vmatprep.subr.bf16.mxu0 0
        %590 = vmatpush1.bf16.xpose.msra.mxu0 0
        %591 = vmatprep.subr.bf16.mxu0 0
        %592 = vmatpush1.bf16.xpose.msra.mxu0 0
        %593 = vmatprep.subr.bf16.mxu0 0
        %594 = vmatpush1.bf16.xpose.msra.mxu0 0
        %595 = vmatprep.subr.bf16.mxu0 0
        %596 = vmatpush1.bf16.xpose.msra.mxu0 0
        %597 = vmatprep.subr.bf16.mxu0 0
        %598 = vmatpush1.bf16.xpose.msra.mxu0 0
        %599 = vmatprep.subr.bf16.mxu0 0
        %600 = vmatpush1.bf16.xpose.msra.mxu0 0
        %601 = vmatprep.subr.bf16.mxu0 0
        %602 = vmatpush1.bf16.xpose.msra.mxu0 0
        %603 = vmatprep.subr.bf16.mxu0 0
        %604 = vmatpush1.bf16.xpose.msra.mxu0 0
        %605 = vmatprep.subr.bf16.mxu0 0
        %606 = vmatpush1.bf16.xpose.msra.mxu0 0
        %607 = vmatprep.subr.bf16.mxu0 0
        %608 = vmatpush1.bf16.xpose.msra.mxu0 0
        %609 = vmatprep.subr.bf16.mxu0 0
        %610 = vmatpush1.bf16.xpose.msra.mxu0 0
        %611 = vmatprep.subr.bf16.mxu0 0
        %612 = vmatpush1.bf16.xpose.msra.mxu0 0
        %613 = vmatprep.mubr.bf16.mxu0 0
        %614 = vmatmul.mubr.bf16.gmra.mrb[0].mxu0 %v558
        %v615 = vpop.f32.mrb[0].mxu0
        %v616 = vadd.f32 0.0, %v615
        %v617 = vpop.f32.mrb[0].mxu0
        %v618 = vpop.f32.mrb[0].mxu0
        %v619 = vadd.f32 0.0, %v618
        %v620 = vpop.f32.mrb[0].mxu0
        %621 = vmatprep.mubr.bf16.mxu0 0
        %622 = vmatmul.mubr.bf16.gmra.mrb[0].mxu0 %v561
        %v623 = vpop.f32.mrb[0].mxu0
        %v624 = vadd.f32 0.0, %v623
        %v625 = vpop.f32.mrb[0].mxu0
        %v626 = vpop.f32.mrb[0].mxu0
        %v627 = vadd.f32 0.0, %v626
        %v628 = vpop.f32.mrb[0].mxu0
        %629 = vmatprep.mubr.bf16.mxu0 0
        %630 = vmatmul.mubr.bf16.gmra.mrb[0].mxu0 %v564
        %v631 = vpop.f32.mrb[0].mxu0
        %v632 = vadd.f32 0.0, %v631
        %v633 = vpop.f32.mrb[0].mxu0
        %v634 = vpop.f32.mrb[0].mxu0
        %v635 = vadd.f32 0.0, %v634
        %v636 = vpop.f32.mrb[0].mxu0
        %637 = vmatprep.mubr.bf16.mxu0 0
        %638 = vmatmul.mubr.bf16.gmra.mrb[0].mxu0 %v567
        %v639 = vpop.f32.mrb[0].mxu0
        %v640 = vadd.f32 0.0, %v639
        %v641 = vpop.f32.mrb[0].mxu0
        %v642 = vpop.f32.mrb[0].mxu0
        %v643 = vadd.f32 0.0, %v642
        %v644 = vpop.f32.mrb[0].mxu0
        %645 = vdwg.mxu0
        %v646 = vsel %vm234, %v616, -inf
        %647 = vmax.xlane.f32.xlu0 %v646
        %v648 = vpop.xlane.xlu0 %647
        %v649 = vsel %vm234, %v619, -inf
        %650 = vmax.xlane.f32.xlu0 %v649
        %v651 = vpop.xlane.xlu0 %650
        %v652 = vsel %vm234, %v624, -inf
        %653 = vmax.xlane.f32.xlu0 %v652
        %v654 = vpop.xlane.xlu0 %653
        %v655 = vsel %vm234, %v627, -inf
        %656 = vmax.xlane.f32.xlu0 %v655
        %v657 = vpop.xlane.xlu0 %656
        %v658 = vsel %vm234, %v632, -inf
        %659 = vmax.xlane.f32.xlu0 %v658
        %v660 = vpop.xlane.xlu0 %659
        %v661 = vsel %vm234, %v635, -inf
        %662 = vmax.xlane.f32.xlu0 %v661
        %v663 = vpop.xlane.xlu0 %662
        %v664 = vsel %vm234, %v640, -inf
        %665 = vmax.xlane.f32.xlu0 %v664
        %v666 = vpop.xlane.xlu0 %665
        %v667 = vsel %vm234, %v643, -inf
        %668 = vmax.xlane.f32.xlu0 %v667
        %v669 = vpop.xlane.xlu0 %668
        %v670 = vsub.f32 %v616, %v648
        %v671 = vsub.f32 %v619, %v651
        %v672 = vsub.f32 %v624, %v654
        %v673 = vsub.f32 %v627, %v657
        %v674 = vsub.f32 %v632, %v660
        %v675 = vsub.f32 %v635, %v663
        %v676 = vsub.f32 %v640, %v666
        %v677 = vsub.f32 %v643, %v669
        %v678 = vmul.f32 %v670, 1.442695
        %v679 = vpow.pop %v678
        %v680 = vmul.f32 %v671, 1.442695
        %v681 = vpow.pop %v680
        %v682 = vmul.f32 %v672, 1.442695
        %v683 = vpow.pop %v682
        %v684 = vmul.f32 %v673, 1.442695
        %v685 = vpow.pop %v684
        %v686 = vmul.f32 %v674, 1.442695
        %v687 = vpow.pop %v686
        %v688 = vmul.f32 %v675, 1.442695
        %v689 = vpow.pop %v688
        %v690 = vmul.f32 %v676, 1.442695
        %v691 = vpow.pop %v690
        %v692 = vmul.f32 %v677, 1.442695
        %v693 = vpow.pop %v692
        %v694 = vsel %vm234, %v679, 0.0
        %695 = vadd.xlane.f32.xlu0 %v694
        %v696 = vpop.xlane.xlu0 %695
        %v697 = vsel %vm234, %v681, 0.0
        %698 = vadd.xlane.f32.xlu0 %v697
        %v699 = vpop.xlane.xlu0 %698
        %v700 = vsel %vm234, %v683, 0.0
        %701 = vadd.xlane.f32.xlu0 %v700
        %v702 = vpop.xlane.xlu0 %701
        %v703 = vsel %vm234, %v685, 0.0
        %704 = vadd.xlane.f32.xlu0 %v703
        %v705 = vpop.xlane.xlu0 %704
        %v706 = vsel %vm234, %v687, 0.0
        %707 = vadd.xlane.f32.xlu0 %v706
        %v708 = vpop.xlane.xlu0 %707
        %v709 = vsel %vm234, %v689, 0.0
        %710 = vadd.xlane.f32.xlu0 %v709
        %v711 = vpop.xlane.xlu0 %710
        %v712 = vsel %vm234, %v691, 0.0
        %713 = vadd.xlane.f32.xlu0 %v712
        %v714 = vpop.xlane.xlu0 %713
        %v715 = vsel %vm234, %v693, 0.0
        %716 = vadd.xlane.f32.xlu0 %v715
        %v717 = vpop.xlane.xlu0 %716
        %v718 = vpack.c.bf16 %v681, %v679
        %v719 = vpack.c.bf16 %v685, %v683
        %v720 = vpack.c.bf16 %v689, %v687
        %v721 = vpack.c.bf16 %v693, %v691
        %722 = vrot.lane.b32.xlu0 %v553, 64
        %v723 = vpop.permute.xlu0 %722
        %724 = vrot.lane.b32.xlu0 %v554, 64
        %v725 = vpop.permute.xlu0 %724
        %726 = vrot.lane.b32.xlu0 %v555, 64
        %v727 = vpop.permute.xlu0 %726
        %728 = vrot.lane.b32.xlu0 %v556, 64
        %v729 = vpop.permute.xlu0 %728
        %v735 = vsel %vm234, %v718, 0
        %v738 = vsel %vm234, %v719, 0
        %v741 = vsel %vm234, %v720, 0
        %v744 = vsel %vm234, %v721, 0
        %746 = vmatprep.subr.bf16.mxu0 0
        %747 = vmatpush1.bf16.msra.mxu0 %v723
        %748 = vmatprep.subr.bf16.mxu0 0
        %749 = vmatpush1.bf16.msra.mxu0 %v725
        %750 = vmatprep.subr.bf16.mxu0 0
        %751 = vmatpush1.bf16.msra.mxu0 %v727
        %752 = vmatprep.subr.bf16.mxu0 0
        %753 = vmatpush1.bf16.msra.mxu0 %v729
        %754 = vmatprep.subr.bf16.mxu0 0
        %755 = vmatpush1.bf16.msra.mxu0 0
        %756 = vmatprep.subr.bf16.mxu0 0
        %757 = vmatpush1.bf16.msra.mxu0 0
        %758 = vmatprep.subr.bf16.mxu0 0
        %759 = vmatpush1.bf16.msra.mxu0 0
        %760 = vmatprep.subr.bf16.mxu0 0
        %761 = vmatpush1.bf16.msra.mxu0 0
        %762 = vmatprep.subr.bf16.mxu0 0
        %763 = vmatpush1.bf16.msra.mxu0 0
        %764 = vmatprep.subr.bf16.mxu0 0
        %765 = vmatpush1.bf16.msra.mxu0 0
        %766 = vmatprep.subr.bf16.mxu0 0
        %767 = vmatpush1.bf16.msra.mxu0 0
        %768 = vmatprep.subr.bf16.mxu0 0
        %769 = vmatpush1.bf16.msra.mxu0 0
        %770 = vmatprep.subr.bf16.mxu0 0
        %771 = vmatpush1.bf16.msra.mxu0 0
        %772 = vmatprep.subr.bf16.mxu0 0
        %773 = vmatpush1.bf16.msra.mxu0 0
        %774 = vmatprep.subr.bf16.mxu0 0
        %775 = vmatpush1.bf16.msra.mxu0 0
        %776 = vmatprep.subr.bf16.mxu0 0
        %777 = vmatpush1.bf16.msra.mxu0 0
        %778 = vmatprep.mubr.bf16.mxu0 0
        %779 = vmatmul.mubr.bf16.gmra.mrb[0].mxu0 %v735
        %v780 = vpop.f32.mrb[0].mxu0
        %v781 = vadd.f32 0.0, %v780
        %v782 = vpop.f32.mrb[0].mxu0
        %v783 = vpop.f32.mrb[0].mxu0
        %v784 = vadd.f32 0.0, %v783
        %v785 = vpop.f32.mrb[0].mxu0
        %786 = vmatprep.mubr.bf16.mxu0 0
        %787 = vmatmul.mubr.bf16.gmra.mrb[0].mxu0 %v738
        %v788 = vpop.f32.mrb[0].mxu0
        %v789 = vadd.f32 0.0, %v788
        %v790 = vpop.f32.mrb[0].mxu0
        %v791 = vpop.f32.mrb[0].mxu0
        %v792 = vadd.f32 0.0, %v791
        %v793 = vpop.f32.mrb[0].mxu0
        %794 = vmatprep.mubr.bf16.mxu0 0
        %795 = vmatmul.mubr.bf16.gmra.mrb[0].mxu0 %v741
        %v796 = vpop.f32.mrb[0].mxu0
        %v797 = vadd.f32 0.0, %v796
        %v798 = vpop.f32.mrb[0].mxu0
        %v799 = vpop.f32.mrb[0].mxu0
        %v800 = vadd.f32 0.0, %v799
        %v801 = vpop.f32.mrb[0].mxu0
        %802 = vmatprep.mubr.bf16.mxu0 0
        %803 = vmatmul.mubr.bf16.gmra.mrb[0].mxu0 %v744
        %v804 = vpop.f32.mrb[0].mxu0
        %v805 = vadd.f32 0.0, %v804
        %v806 = vpop.f32.mrb[0].mxu0
        %v807 = vpop.f32.mrb[0].mxu0
        %v808 = vadd.f32 0.0, %v807
        %v809 = vpop.f32.mrb[0].mxu0
        %810 = vdwg.mxu0
        %v811 = vrcp.pop %v696
        %v812 = vrcp.pop %v699
        %v813 = vrcp.pop %v702
        %v814 = vrcp.pop %v705
        %v815 = vrcp.pop %v708
        %v816 = vrcp.pop %v711
        %v817 = vrcp.pop %v714
        %v818 = vrcp.pop %v717
        %v819 = vmul.f32 %v781, %v811
        %v820 = vmul.f32 %v784, %v812
        %v821 = vmul.f32 %v789, %v813
        %v822 = vmul.f32 %v792, %v814
        %v823 = vmul.f32 %v797, %v815
        %v824 = vmul.f32 %v800, %v816
        %v825 = vmul.f32 %v805, %v817
        %v826 = vmul.f32 %v808, %v818
        %v827 = vpack.c.bf16 %v820, %v819
        %v828 = vpack.c.bf16 %v822, %v821
        %v829 = vpack.c.bf16 %v824, %v823
        %v830 = vpack.c.bf16 %v826, %v825
        %835 = vrot.lane.b32.xlu0 %v827, 64
        %v836 = vpop.permute.xlu0 %835
        %837 = vrot.lane.b32.xlu0 %v828, 64
        %v838 = vpop.permute.xlu0 %837
        %839 = vrot.lane.b32.xlu0 %v829, 64
        %v840 = vpop.permute.xlu0 %839
        %841 = vrot.lane.b32.xlu0 %v830, 64
        %v842 = vpop.permute.xlu0 %841
        %v845 = vsel %vm234, %v517, %v836
        %v848 = vsel %vm234, %v518, %v838
        %v851 = vsel %vm234, %v519, %v840
        %v854 = vsel %vm234, %v520, %v842
        %v859 = vunpack.c.l.b16 %v845
        %v860 = vunpack.c.h.b16 %v845
        %v861 = vunpack.c.l.b16 %v848
        %v862 = vunpack.c.h.b16 %v848
        %v863 = vunpack.c.l.b16 %v851
        %v864 = vunpack.c.h.b16 %v851
        %v865 = vunpack.c.l.b16 %v854
        %v866 = vunpack.c.h.b16 %v854
        %v867 = vpack.c.b16 %v859, %v859
        %v868 = vpack.c.b16 %v860, %v860
        %v869 = vpack.c.b16 %v861, %v861
        %v870 = vpack.c.b16 %v862, %v862
        %v871 = vpack.c.b16 %v863, %v863
        %v872 = vpack.c.b16 %v864, %v864
        %v873 = vpack.c.b16 %v865, %v865
        %v874 = vpack.c.b16 %v866, %v866
        %883 = vst [vmem:[%s187] sm:$0xf] %v867
        %884 = vst [vmem:[%s187 + $0x4] sm:$0xf] %v868
        %885 = vst [vmem:[%s187 + $0x8] sm:$0xf] %v869
        %886 = vst [vmem:[%s187 + $0xc] sm:$0xf] %v870
        %887 = vst [vmem:[%s187 + $0x10] sm:$0xf] %v871
        %888 = vst [vmem:[%s187 + $0x14] sm:$0xf] %v872
        %889 = vst [vmem:[%s187 + $0x18] sm:$0xf] %v873
        %890 = vst [vmem:[%s187 + $0x1c] sm:$0xf] %v874
        %s891 = sand.u32 %s62, 1
        %s892 = sand.u32 %s62, 1
        %s893 = smul.addr %s892, 32
        %s894 = scalar_lea.vmem [#allocation3], %s893
        // Predicated region
        $region51: #{multi_head_attention.4} parent=45 // pred_check
          %p895 = pneg %p72
        $region52: #{multi_head_attention.4} parent=45 // pred_check_branch
          %897 = sbr.rel (%p895) target = $region54
        $region53: #{multi_head_attention.4} parent=45 // pred_region
          %s898 = smul.addr %s16, 16
          %s899 = sadd.s32 %s17, %s898
          %s900 = smul.addr %s899, 4
          %s901 = scalar_lea.vmem %s1, %s900
          // Predicated region
          $region55: #{multi_head_attention.4} parent=53 // pred_check
            _
          $region56: #{multi_head_attention.4} parent=53 // pred_check_branch
            %903 = sbr.rel (0) target = $region58
          $region57: #{multi_head_attention.4} parent=53 // pred_region
            // Predicated region
            $region59: #{multi_head_attention.4} parent=57 // pred_check
              _
            $region60: #{multi_head_attention.4} parent=57 // pred_check_branch
              %905 = sbr.rel target = $region62
            $region61: #{multi_head_attention.4} parent=57 // pred_region
              // Predicated region
              $region74: #{multi_head_attention.4} parent=61 // pred_check
                _
              $region75: #{multi_head_attention.4} parent=61 // pred_check_branch
                %934 = sbr.rel (0) target = $region77
              $region76: #{multi_head_attention.4} parent=61 // pred_region
                loop: start=0, step=1, limit=1
                $region78: #{multi_head_attention.4} parent=76 // loop_pre_header
                  _
                $region79: #{multi_head_attention.4} parent=76 // loop_header
                  %s936 = sphi 0, %s940
                  %p937 = scmp.ge.s32.totalorder %s936, 1
                  %s941 = sphi %s894, %s894
                  %s942 = sphi %s901, %s901
                $region80: #{multi_head_attention.4} parent=76 // loop_header_branch
                  %939 = sbr.rel (%p937) target = $region84
                $region81: #{multi_head_attention.4} parent=76 // loop_body
                  _
                $region82: #{multi_head_attention.4} parent=76 // loop_footer
                  %s940 = sadd.s32 1, %s936
                $region83: #{multi_head_attention.4} parent=76 // loop_footer_branch
                  %935 = sbr.rel target = $region79
                $region84: #{multi_head_attention.4} parent=76 // loop_exit
                  _
                loop: start=0, step=1, limit=1
                $region85: #{multi_head_attention.4} parent=76 // loop_pre_header
                  _
                $region86: #{multi_head_attention.4} parent=76 // loop_header
                  %s945 = sphi 0, %s949
                  %p946 = scmp.ge.s32.totalorder %s945, 1
                  %s950 = sphi %s894, %s894
                  %s951 = sphi %s901, %s901
                $region87: #{multi_head_attention.4} parent=76 // loop_header_branch
                  %948 = sbr.rel (%p946) target = $region91
                $region88: #{multi_head_attention.4} parent=76 // loop_body
                  %v952 = vld [vmem:[%s950] sm:$0xf]
                  %953 = vst [vmem:[%s951] sm:$0xf] %v952
                  %v954 = vld [vmem:[%s950 + $0x4] sm:$0xf]
                  %955 = vst [vmem:[%s951 + $0x8] sm:$0xf] %v954
                  %v956 = vld [vmem:[%s950 + $0x8] sm:$0xf]
                  %957 = vst [vmem:[%s951 + $0x10] sm:$0xf] %v956
                  %v958 = vld [vmem:[%s950 + $0xc] sm:$0xf]
                  %959 = vst [vmem:[%s951 + $0x18] sm:$0xf] %v958
                  %v960 = vld [vmem:[%s950 + $0x10] sm:$0xf]
                  %961 = vst [vmem:[%s951 + $0x20] sm:$0xf] %v960
                  %v962 = vld [vmem:[%s950 + $0x14] sm:$0xf]
                  %963 = vst [vmem:[%s951 + $0x28] sm:$0xf] %v962
                  %v964 = vld [vmem:[%s950 + $0x18] sm:$0xf]
                  %965 = vst [vmem:[%s951 + $0x30] sm:$0xf] %v964
                  %v966 = vld [vmem:[%s950 + $0x1c] sm:$0xf]
                  %967 = vst [vmem:[%s951 + $0x38] sm:$0xf] %v966
                $region89: #{multi_head_attention.4} parent=76 // loop_footer
                  %s949 = sadd.s32 1, %s945
                $region90: #{multi_head_attention.4} parent=76 // loop_footer_branch
                  %944 = sbr.rel target = $region86
                $region91: #{multi_head_attention.4} parent=76 // loop_exit
                  _
              $region77: #{multi_head_attention.4} parent=61 // pred_fallthru
                _
            $region62: #{multi_head_attention.4} parent=57 // pred_fallthru
              _
            // Predicated region
            $region63: #{multi_head_attention.4} parent=57 // pred_check
              _
            $region64: #{multi_head_attention.4} parent=57 // pred_check_branch
              %907 = sbr.rel (0) target = $region66
            $region65: #{multi_head_attention.4} parent=57 // pred_region
              loop: start=0, step=1, limit=1
              $region67: #{multi_head_attention.4} parent=65 // loop_pre_header
                _
              $region68: #{multi_head_attention.4} parent=65 // loop_header
                %s910 = sphi 0, %s914
                %p911 = scmp.ge.s32.totalorder %s910, 1
                %s915 = sphi %s894, %s894
                %s916 = sphi %s901, %s901
              $region69: #{multi_head_attention.4} parent=65 // loop_header_branch
                %913 = sbr.rel (%p911) target = $region73
              $region70: #{multi_head_attention.4} parent=65 // loop_body
                %v917 = vld [vmem:[%s915] sm:$0xf]
                %918 = vst [vmem:[%s916] sm:$0xf] %v917
                %v919 = vld [vmem:[%s915 + $0x4] sm:$0xf]
                %920 = vst [vmem:[%s916 + $0x8] sm:$0xf] %v919
                %v921 = vld [vmem:[%s915 + $0x8] sm:$0xf]
                %922 = vst [vmem:[%s916 + $0x10] sm:$0xf] %v921
                %v923 = vld [vmem:[%s915 + $0xc] sm:$0xf]
                %924 = vst [vmem:[%s916 + $0x18] sm:$0xf] %v923
                %v925 = vld [vmem:[%s915 + $0x10] sm:$0xf]
                %926 = vst [vmem:[%s916 + $0x20] sm:$0xf] %v925
                %v927 = vld [vmem:[%s915 + $0x14] sm:$0xf]
                %928 = vst [vmem:[%s916 + $0x28] sm:$0xf] %v927
                %v929 = vld [vmem:[%s915 + $0x18] sm:$0xf]
                %930 = vst [vmem:[%s916 + $0x30] sm:$0xf] %v929
                %v931 = vld [vmem:[%s915 + $0x1c] sm:$0xf]
                %932 = vst [vmem:[%s916 + $0x38] sm:$0xf] %v931
              $region71: #{multi_head_attention.4} parent=65 // loop_footer
                %s914 = sadd.s32 1, %s910
              $region72: #{multi_head_attention.4} parent=65 // loop_footer_branch
                %909 = sbr.rel target = $region68
              $region73: #{multi_head_attention.4} parent=65 // loop_exit
                _
            $region66: #{multi_head_attention.4} parent=57 // pred_fallthru
              _
          $region58: #{multi_head_attention.4} parent=53 // pred_fallthru
            _
          %968 = vnop
        $region54: #{multi_head_attention.4} parent=45 // pred_fallthru
          _
      $region46: #{multi_head_attention.4} parent=5 // pred_fallthru
        _
      %p969 = scmp.le.s32.totalorder 2, %s7
      // Predicated region
      $region92: #{multi_head_attention.4} parent=5 // pred_check
        %p970 = pneg %p969
      $region93: #{multi_head_attention.4} parent=5 // pred_check_branch
        %972 = sbr.rel (%p970) target = $region95
      $region94: #{multi_head_attention.4} parent=5 // pred_region
        %s973 = ssub.s32 %s7, 2
        // Predicated region
        $region96: #{multi_head_attention.4} parent=94 // pred_check
          %p974 = pneg %p78
        $region97: #{multi_head_attention.4} parent=94 // pred_check_branch
          %976 = sbr.rel (%p974) target = $region99
        $region98: #{multi_head_attention.4} parent=94 // pred_region
          %s977 = sand.u32 %s63, 1
          %s978 = sand.u32 %s63, 1
          %s979 = smul.addr %s978, 32
          %s980 = scalar_lea.vmem [#allocation3], %s979
        $region99: #{multi_head_attention.4} parent=94 // pred_fallthru
          _
      $region95: #{multi_head_attention.4} parent=5 // pred_fallthru
        _
    $region6: #{multi_head_attention.4} parent=1 // loop_footer
      %s11 = sadd.s32 1, %s7
    $region7: #{multi_head_attention.4} parent=1 // loop_footer_branch
      %6 = sbr.rel target = $region3
    $region8: #{multi_head_attention.4} parent=1 // loop_exit
      _

// kernel: multi_head_attention.3
$region0: #{multi_head_attention.3}
  #allocation0 [shape = 'u32[]', space=smem, size = 0x4, offset = 0x4, fixed_abs, tag = 'smem constant byte address 0x4 - core index']
  #allocation1 [shape = 'u32[144,128]{1,0:T(1,128)}', space=vmem, size = 0x12000, scoped, tag = 'internal scratch']
  #allocation2 [shape = 'f32[128,384]{1,0:T(8,128)}', space=vmem, size = 0x30000, scoped, tag = 'scratch operand']
  %s0 = inlined_call_operand.vmem [shape: bf16[128,256], index: 0, kind: input, shape index: {}]
  %s1 = inlined_call_operand.hbm [shape: bf16[768,256], index: 1, kind: input, shape index: {}]
  %s2 = inlined_call_operand.vmem [shape: bf16[128,768], index: 2, kind: output, shape index: {}]
  %s3 = sld [smem:[#allocation0]]
  $region75: #{multi_head_attention.3} parent=0
    _
  %s5 = ssub.s32 1, %s3
  %s6 = scalar_select 0, %s5, %s3
  $region1: #{multi_head_attention.3} parent=0
    #allocation3 [shape = 'u8[393216]{0}', space=vmem, size = 0x60000, scoped, tag = 'input window, operand 1']
    #allocation4 [shape = 's32[2]{0}', space=sflag, size = 0x8, scoped, tag = 'scoped memory for multi_head_attention.3']
    #allocation5 [shape = 'u8[196608]{0}', space=vmem, size = 0x30000, scoped, tag = 'output window, operand 0']
    %7 = vsyncpa [#allocation4], 0
    %s8 = scalar_lea.sflag [#allocation4], 1
    %9 = vsyncpa %s8, 0
    loop: start=0, step=1, limit=4
    $region2: #{multi_head_attention.3} parent=1 // loop_pre_header
      _
    $region3: #{multi_head_attention.3} parent=1 // loop_header
      %s11 = sphi 0, %s15
      %p12 = scmp.ge.s32.totalorder %s11, 4
      %s18 = sphi 0, %s37
      %s19 = sphi 0, %s33
      %s20 = sphi 0, %s29
      %s21 = sphi 0, %s18
      %s22 = sphi 0, %s19
      %s23 = sphi 0, %s20
      %s24 = sphi 0, %s21
      %s25 = sphi 0, %s22
      %s26 = sphi 0, %s23
      %s42 = sphi 0, %s44
      %s45 = sphi 0, %s42
      %s46 = sphi 0, %s45
      %s62 = sphi 0, %s46
      %s70 = sphi 0, %s72
      %s73 = sphi 0, %s70
      %s74 = sphi 0, %s73
      %s90 = sphi 0, %s74
      %s98 = sphi 0, %s100
      %s101 = sphi 0, %s98
      %s102 = sphi 0, %s101
      %s118 = sphi 0, %s102
    $region4: #{multi_head_attention.3} parent=1 // loop_header_branch
      %14 = sbr.rel (%p12) target = $region8
    $region5: #{multi_head_attention.3} parent=1 // loop_body
      %s16 = ssub.s32 %s11, 1
      %s17 = ssub.s32 %s11, 2
      %s27 = sadd.s32 1, %s20
      %p28 = scmp.ge.s32.totalorder %s27, 1
      %s29 = scalar_select %p28, 0, %s27
      %s30 = sadd.s32 1, %s19
      %s31 = scalar_select %p28, %s30, %s19
      %p32 = scmp.ge.s32.totalorder %s31, 2
      %s33 = scalar_select %p32, 0, %s31
      %s34 = sadd.s32 1, %s18
      %s35 = scalar_select %p32, %s34, %s18
      %p36 = scmp.ge.s32.totalorder %s35, 1
      %s37 = scalar_select %p36, 0, %s35
      %s38 = ssub.s32 %s18, %s37
      %s39 = ssub.s32 %s20, %s29
      %s40 = sor.u32 %s38, %s39
      %p41 = scmp.eq.s32.totalorder %s40, 0
      %s43 = sadd.s32 %s42, 1
      %s44 = scalar_select %p41, %s42, %s43
      %p47 = pneg %p41
      %p48 = scmp.eq.s32.totalorder %s11, 1
      %p49 = por %p47, %p48
      %p50 = scmp.ne.s32.totalorder %s42, %s45
      %p51 = scmp.eq.s32.totalorder %s11, 0
      %p52 = por %p50, %p51
      %p53 = scmp.ne.s32.totalorder %s42, %s45
      %p54 = scmp.eq.s32.totalorder %s16, 1
      %p55 = por %p53, %p54
      %p56 = scmp.ne.s32.totalorder %s45, %s46
      %p57 = scmp.eq.s32.totalorder %s16, 0
      %p58 = por %p56, %p57
      %p59 = scmp.ne.s32.totalorder %s45, %s46
      %p60 = scmp.eq.s32.totalorder %s17, 1
      %p61 = por %p59, %p60
      %p63 = scmp.ne.s32.totalorder %s46, %s62
      %p64 = scmp.eq.s32.totalorder %s17, 0
      %p65 = por %p63, %p64
      %s66 = ssub.s32 %s19, %s33
      %s67 = ssub.s32 %s20, %s29
      %s68 = sor.u32 %s66, %s67
      %p69 = scmp.eq.s32.totalorder %s68, 0
      %s71 = sadd.s32 %s70, 1
      %s72 = scalar_select %p69, %s70, %s71
      %p75 = pneg %p69
      %p76 = scmp.eq.s32.totalorder %s11, 1
      %p77 = por %p75, %p76
      %p78 = scmp.ne.s32.totalorder %s70, %s73
      %p79 = scmp.eq.s32.totalorder %s11, 0
      %p80 = por %p78, %p79
      %p81 = scmp.ne.s32.totalorder %s70, %s73
      %p82 = scmp.eq.s32.totalorder %s16, 1
      %p83 = por %p81, %p82
      %p84 = scmp.ne.s32.totalorder %s73, %s74
      %p85 = scmp.eq.s32.totalorder %s16, 0
      %p86 = por %p84, %p85
      %p87 = scmp.ne.s32.totalorder %s73, %s74
      %p88 = scmp.eq.s32.totalorder %s17, 1
      %p89 = por %p87, %p88
      %p91 = scmp.ne.s32.totalorder %s74, %s90
      %p92 = scmp.eq.s32.totalorder %s17, 0
      %p93 = por %p91, %p92
      %s94 = ssub.s32 %s18, %s37
      %s95 = ssub.s32 %s19, %s33
      %s96 = sor.u32 %s94, %s95
      %p97 = scmp.eq.s32.totalorder %s96, 0
      %s99 = sadd.s32 %s98, 1
      %s100 = scalar_select %p97, %s98, %s99
      %p103 = pneg %p97
      %p104 = scmp.eq.s32.totalorder %s11, 1
      %p105 = por %p103, %p104
      %p106 = scmp.ne.s32.totalorder %s98, %s101
      %p107 = scmp.eq.s32.totalorder %s11, 0
      %p108 = por %p106, %p107
      %p109 = scmp.ne.s32.totalorder %s98, %s101
      %p110 = scmp.eq.s32.totalorder %s16, 1
      %p111 = por %p109, %p110
      %p112 = scmp.ne.s32.totalorder %s101, %s102
      %p113 = scmp.eq.s32.totalorder %s16, 0
      %p114 = por %p112, %p113
      %p115 = scmp.ne.s32.totalorder %s101, %s102
      %p116 = scmp.eq.s32.totalorder %s17, 1
      %p117 = por %p115, %p116
      %p119 = scmp.ne.s32.totalorder %s102, %s118
      %p120 = scmp.eq.s32.totalorder %s17, 0
      %p121 = por %p119, %p120
      %p122 = scmp.le.s32.totalorder 1, %s11
      %p123 = scmp.lt.s32.totalorder %s11, 3
      %p124 = pnand %p122, %p123
      %p125 = pneg %p124
      // Predicated region
      $region9: #{multi_head_attention.3} parent=5 // pred_check
        _
      $region10: #{multi_head_attention.3} parent=5 // pred_check_branch
        %127 = sbr.rel (%p124) target = $region12
      $region11: #{multi_head_attention.3} parent=5 // pred_region
        %s128 = ssub.s32 %s11, 1
        // Predicated region
        $region13: #{multi_head_attention.3} parent=11 // pred_check
          %p129 = pneg %p58
        $region14: #{multi_head_attention.3} parent=11 // pred_check_branch
          %131 = sbr.rel (%p129) target = $region16
        $region15: #{multi_head_attention.3} parent=11 // pred_region
          %s132 = smul.u32 16, %s21
          %s133 = smul.u32 2, %s23
          %p134 = scmp.lt.s32.totalorder %s132, 15
          %s135 = scalar_select %p134, %s132, 15
          %p136 = scmp.lt.s32.totalorder %s133, 1
          %s137 = scalar_select %p136, %s133, 1
          %s138 = smul.addr %s135, 2
          %s139 = sadd.s32 %s137, %s138
          %s140 = smul.addr %s139, 4
          %s141 = scalar_lea.vmem %s0, %s140
          %s142 = smul.u32 16, %s21
          %s143 = smul.u32 2, %s23
        $region16: #{multi_head_attention.3} parent=11 // pred_fallthru
          _
      $region12: #{multi_head_attention.3} parent=5 // pred_fallthru
        _
      %p144 = scmp.lt.s32.totalorder %s11, 2
      // Predicated region
      $region17: #{multi_head_attention.3} parent=5 // pred_check
        %p145 = pneg %p144
      $region18: #{multi_head_attention.3} parent=5 // pred_check_branch
        %147 = sbr.rel (%p145) target = $region20
      $region19: #{multi_head_attention.3} parent=5 // pred_region
        // Predicated region
        $region21: #{multi_head_attention.3} parent=19 // pred_check
          %p148 = pneg %p80
        $region22: #{multi_head_attention.3} parent=19 // pred_check_branch
          %150 = sbr.rel (%p148) target = $region24
        $region23: #{multi_head_attention.3} parent=19 // pred_region
          %s151 = sand.u32 %s70, 1
          %s152 = scalar_lea.sflag [#allocation4], %s151
          %s153 = sand.u32 %s70, 1
          %s154 = smul.addr %s153, 384
          %s155 = scalar_lea.vmem [#allocation3], %s154
          %s156 = smul.u32 48, %s19
          %s157 = smul.u32 2, %s20
          %s159 = ssub.s32 6144, 6144
          %160 = vsyncadd %s152, %s159
          %s161 = smul.addr %s156, 2
          %s162 = sadd.s32 %s157, %s161
          %s163 = smul.addr %s162, 64
          %s164 = scalar_lea.hbm %s1, %s163
          %s165 = sshll.u32 %s155, 4
          %s166 = int_to_ptr.vmem [resolvable:$true] %s165
          %171 = dma.hbm_to_vmem [thread:$0]  %s164, 6144, %s166, %s152, 128, 128, 8
        $region24: #{multi_head_attention.3} parent=19 // pred_fallthru
          _
      $region20: #{multi_head_attention.3} parent=5 // pred_fallthru
        _
      %p172 = scmp.le.s32.totalorder 1, %s11
      %p173 = scmp.lt.s32.totalorder %s11, 3
      %p174 = pnand %p172, %p173
      %p175 = pneg %p174
      // Predicated region
      $region25: #{multi_head_attention.3} parent=5 // pred_check
        _
      $region26: #{multi_head_attention.3} parent=5 // pred_check_branch
        %177 = sbr.rel (%p174) target = $region28
      $region27: #{multi_head_attention.3} parent=5 // pred_region
        %s178 = ssub.s32 %s11, 1
        %s179 = sand.u32 %s73, 1
        %s180 = scalar_lea.sflag [#allocation4], %s179
        %s181 = sand.u32 %s73, 1
        %s182 = smul.addr %s181, 384
        %s183 = scalar_lea.vmem [#allocation3], %s182
        // Predicated region
        $region29: #{multi_head_attention.3} parent=27 // pred_check
          %p184 = pneg %p86
        $region30: #{multi_head_attention.3} parent=27 // pred_check_branch
          %186 = sbr.rel (%p184) target = $region32
        $region31: #{multi_head_attention.3} parent=27 // pred_region
          %187 = dma.done %s180, 6144
        $region32: #{multi_head_attention.3} parent=27 // pred_fallthru
          _
        %s188 = smul.u32 16, %s21
        %s189 = smul.u32 2, %s23
        %p190 = scmp.lt.s32.totalorder %s188, 15
        %s191 = scalar_select %p190, %s188, 15
        %p192 = scmp.lt.s32.totalorder %s189, 1
        %s193 = scalar_select %p192, %s189, 1
        %s194 = smul.addr %s191, 2
        %s195 = sadd.s32 %s193, %s194
        %s196 = smul.addr %s195, 4
        %s197 = scalar_lea.vmem %s0, %s196
        %p198 = pneg %p58
        %p199 = pneg %p55
        %s200 = sand.u32 %s73, 1
        %s201 = scalar_lea.sflag [#allocation4], %s200
        %s202 = sand.u32 %s73, 1
        %s203 = smul.addr %s202, 384
        %s204 = scalar_lea.vmem [#allocation3], %s203
        %p205 = pneg %p86
        %p206 = pneg %p83
        %p207 = pneg %p114
        %p208 = pneg %p111
        %s209 = sand.u32 %s101, 1
        %s210 = sand.u32 %s101, 1
        %s211 = smul.addr %s210, 192
        %s212 = scalar_lea.vmem [#allocation5], %s211
        %s213 = smul.u32 16, %s21
        %s214 = smul.u32 2, %s23
        %p215 = scmp.lt.s32.totalorder %s213, 15
        %s216 = scalar_select %p215, %s213, 15
        %p217 = scmp.lt.s32.totalorder %s214, 1
        %s218 = scalar_select %p217, %s214, 1
        %s219 = smul.addr %s216, 2
        %s220 = sadd.s32 %s218, %s219
        %s221 = smul.addr %s220, 4
        %s222 = scalar_lea.vmem %s0, %s221
        %s223 = smul.u32 16, %s21
        %s224 = smul.u32 2, %s23
        %s225 = smul.u32 48, %s22
        %s226 = smul.u32 2, %s23
        %s227 = smul.u32 16, %s21
        %s228 = smul.u32 3, %s22
        %p230 = scmp.eq.s32.totalorder %s23, 0
        // Predicated region
        $region33: #{multi_head_attention.3} parent=27 // pred_check
          %p231 = pneg %p230
        $region34: #{multi_head_attention.3} parent=27 // pred_check_branch
          %233 = sbr.rel (%p231) target = $region36
        $region35: #{multi_head_attention.3} parent=27 // pred_region
          %234 = vst [vmem:[#allocation2] sm:$0xff] 0.0
          %235 = vst [vmem:[#allocation2 + $0x8] sm:$0xff] 0.0
          %236 = vst [vmem:[#allocation2 + $0x10] sm:$0xff] 0.0
          %237 = vst [vmem:[#allocation2 + $0x18] sm:$0xff] 0.0
          %238 = vst [vmem:[#allocation2 + $0x20] sm:$0xff] 0.0
          %239 = vst [vmem:[#allocation2 + $0x28] sm:$0xff] 0.0
          %240 = vst [vmem:[#allocation2 + $0x30] sm:$0xff] 0.0
          %241 = vst [vmem:[#allocation2 + $0x38] sm:$0xff] 0.0
          %242 = vst [vmem:[#allocation2 + $0x40] sm:$0xff] 0.0
          %243 = vst [vmem:[#allocation2 + $0x48] sm:$0xff] 0.0
          %244 = vst [vmem:[#allocation2 + $0x50] sm:$0xff] 0.0
          %245 = vst [vmem:[#allocation2 + $0x58] sm:$0xff] 0.0
          %246 = vst [vmem:[#allocation2 + $0x60] sm:$0xff] 0.0
          %247 = vst [vmem:[#allocation2 + $0x68] sm:$0xff] 0.0
          %248 = vst [vmem:[#allocation2 + $0x70] sm:$0xff] 0.0
          %249 = vst [vmem:[#allocation2 + $0x78] sm:$0xff] 0.0
          %250 = vst [vmem:[#allocation2 + $0x80] sm:$0xff] 0.0
          %251 = vst [vmem:[#allocation2 + $0x88] sm:$0xff] 0.0
          %252 = vst [vmem:[#allocation2 + $0x90] sm:$0xff] 0.0
          %253 = vst [vmem:[#allocation2 + $0x98] sm:$0xff] 0.0
          %254 = vst [vmem:[#allocation2 + $0xa0] sm:$0xff] 0.0
          %255 = vst [vmem:[#allocation2 + $0xa8] sm:$0xff] 0.0
          %256 = vst [vmem:[#allocation2 + $0xb0] sm:$0xff] 0.0
          %257 = vst [vmem:[#allocation2 + $0xb8] sm:$0xff] 0.0
          %258 = vst [vmem:[#allocation2 + $0xc0] sm:$0xff] 0.0
          %259 = vst [vmem:[#allocation2 + $0xc8] sm:$0xff] 0.0
          %260 = vst [vmem:[#allocation2 + $0xd0] sm:$0xff] 0.0
          %261 = vst [vmem:[#allocation2 + $0xd8] sm:$0xff] 0.0
          %262 = vst [vmem:[#allocation2 + $0xe0] sm:$0xff] 0.0
          %263 = vst [vmem:[#allocation2 + $0xe8] sm:$0xff] 0.0
          %264 = vst [vmem:[#allocation2 + $0xf0] sm:$0xff] 0.0
          %265 = vst [vmem:[#allocation2 + $0xf8] sm:$0xff] 0.0
          %266 = vst [vmem:[#allocation2 + $0x100] sm:$0xff] 0.0
          %267 = vst [vmem:[#allocation2 + $0x108] sm:$0xff] 0.0
          %268 = vst [vmem:[#allocation2 + $0x110] sm:$0xff] 0.0
          %269 = vst [vmem:[#allocation2 + $0x118] sm:$0xff] 0.0
          %270 = vst [vmem:[#allocation2 + $0x120] sm:$0xff] 0.0
          %271 = vst [vmem:[#allocation2 + $0x128] sm:$0xff] 0.0
          %272 = vst [vmem:[#allocation2 + $0x130] sm:$0xff] 0.0
          %273 = vst [vmem:[#allocation2 + $0x138] sm:$0xff] 0.0
          %274 = vst [vmem:[#allocation2 + $0x140] sm:$0xff] 0.0
          %275 = vst [vmem:[#allocation2 + $0x148] sm:$0xff] 0.0
          %276 = vst [vmem:[#allocation2 + $0x150] sm:$0xff] 0.0
          %277 = vst [vmem:[#allocation2 + $0x158] sm:$0xff] 0.0
          %278 = vst [vmem:[#allocation2 + $0x160] sm:$0xff] 0.0
          %279 = vst [vmem:[#allocation2 + $0x168] sm:$0xff] 0.0
          %280 = vst [vmem:[#allocation2 + $0x170] sm:$0xff] 0.0
          %281 = vst [vmem:[#allocation2 + $0x178] sm:$0xff] 0.0
        $region36: #{multi_head_attention.3} parent=27 // pred_fallthru
          _
        %v282 = vld [vmem:[#allocation2] sm:$0xff]
        %v283 = vld [vmem:[#allocation2 + $0x8] sm:$0xff]
        %v284 = vld [vmem:[#allocation2 + $0x10] sm:$0xff]
        %v285 = vld [vmem:[#allocation2 + $0x18] sm:$0xff]
        %v286 = vld [vmem:[#allocation2 + $0x20] sm:$0xff]
        %v287 = vld [vmem:[#allocation2 + $0x28] sm:$0xff]
        %v288 = vld [vmem:[#allocation2 + $0x30] sm:$0xff]
        %v289 = vld [vmem:[#allocation2 + $0x38] sm:$0xff]
        %v290 = vld [vmem:[#allocation2 + $0x40] sm:$0xff]
        %v291 = vld [vmem:[#allocation2 + $0x48] sm:$0xff]
        %v292 = vld [vmem:[#allocation2 + $0x50] sm:$0xff]
        %v293 = vld [vmem:[#allocation2 + $0x58] sm:$0xff]
        %v294 = vld [vmem:[#allocation2 + $0x60] sm:$0xff]
        %v295 = vld [vmem:[#allocation2 + $0x68] sm:$0xff]
        %v296 = vld [vmem:[#allocation2 + $0x70] sm:$0xff]
        %v297 = vld [vmem:[#allocation2 + $0x78] sm:$0xff]
        %v298 = vld [vmem:[#allocation2 + $0x80] sm:$0xff]
        %v299 = vld [vmem:[#allocation2 + $0x88] sm:$0xff]
        %v300 = vld [vmem:[#allocation2 + $0x90] sm:$0xff]
        %v301 = vld [vmem:[#allocation2 + $0x98] sm:$0xff]
        %v302 = vld [vmem:[#allocation2 + $0xa0] sm:$0xff]
        %v303 = vld [vmem:[#allocation2 + $0xa8] sm:$0xff]
        %v304 = vld [vmem:[#allocation2 + $0xb0] sm:$0xff]
        %v305 = vld [vmem:[#allocation2 + $0xb8] sm:$0xff]
        %v306 = vld [vmem:[#allocation2 + $0xc0] sm:$0xff]
        %v307 = vld [vmem:[#allocation2 + $0xc8] sm:$0xff]
        %v308 = vld [vmem:[#allocation2 + $0xd0] sm:$0xff]
        %v309 = vld [vmem:[#allocation2 + $0xd8] sm:$0xff]
        %v310 = vld [vmem:[#allocation2 + $0xe0] sm:$0xff]
        %v311 = vld [vmem:[#allocation2 + $0xe8] sm:$0xff]
        %v312 = vld [vmem:[#allocation2 + $0xf0] sm:$0xff]
        %v313 = vld [vmem:[#allocation2 + $0xf8] sm:$0xff]
        %v314 = vld [vmem:[#allocation2 + $0x100] sm:$0xff]
        %v315 = vld [vmem:[#allocation2 + $0x108] sm:$0xff]
        %v316 = vld [vmem:[#allocation2 + $0x110] sm:$0xff]
        %v317 = vld [vmem:[#allocation2 + $0x118] sm:$0xff]
        %v318 = vld [vmem:[#allocation2 + $0x120] sm:$0xff]
        %v319 = vld [vmem:[#allocation2 + $0x128] sm:$0xff]
        %v320 = vld [vmem:[#allocation2 + $0x130] sm:$0xff]
        %v321 = vld [vmem:[#allocation2 + $0x138] sm:$0xff]
        %v322 = vld [vmem:[#allocation2 + $0x140] sm:$0xff]
        %v323 = vld [vmem:[#allocation2 + $0x148] sm:$0xff]
        %v324 = vld [vmem:[#allocation2 + $0x150] sm:$0xff]
        %v325 = vld [vmem:[#allocation2 + $0x158] sm:$0xff]
        %v326 = vld [vmem:[#allocation2 + $0x160] sm:$0xff]
        %v327 = vld [vmem:[#allocation2 + $0x168] sm:$0xff]
        %v328 = vld [vmem:[#allocation2 + $0x170] sm:$0xff]
        %v329 = vld [vmem:[#allocation2 + $0x178] sm:$0xff]
        %v330 = vld [vmem:[%s222] sm:$0xff]
        %v331 = vld [vmem:[%s222 + $0x8] sm:$0xff]
        %v332 = vld [vmem:[%s222 + $0x10] sm:$0xff]
        %v333 = vld [vmem:[%s222 + $0x18] sm:$0xff]
        %v334 = vld [vmem:[%s222 + $0x20] sm:$0xff]
        %v335 = vld [vmem:[%s222 + $0x28] sm:$0xff]
        %v336 = vld [vmem:[%s222 + $0x30] sm:$0xff]
        %v337 = vld [vmem:[%s222 + $0x38] sm:$0xff]
        %v338 = vld [vmem:[%s222 + $0x40] sm:$0xff]
        %v339 = vld [vmem:[%s222 + $0x48] sm:$0xff]
        %v340 = vld [vmem:[%s222 + $0x50] sm:$0xff]
        %v341 = vld [vmem:[%s222 + $0x58] sm:$0xff]
        %v342 = vld [vmem:[%s222 + $0x60] sm:$0xff]
        %v343 = vld [vmem:[%s222 + $0x68] sm:$0xff]
        %v344 = vld [vmem:[%s222 + $0x70] sm:$0xff]
        %v345 = vld [vmem:[%s222 + $0x78] sm:$0xff]
        %v346 = vld [vmem:[%s183] sm:$0xff]
        %v347 = vld [vmem:[%s183 + $0x8] sm:$0xff]
        %v348 = vld [vmem:[%s183 + $0x10] sm:$0xff]
        %v349 = vld [vmem:[%s183 + $0x18] sm:$0xff]
        %v350 = vld [vmem:[%s183 + $0x20] sm:$0xff]
        %v351 = vld [vmem:[%s183 + $0x28] sm:$0xff]
        %v352 = vld [vmem:[%s183 + $0x30] sm:$0xff]
        %v353 = vld [vmem:[%s183 + $0x38] sm:$0xff]
        %v354 = vld [vmem:[%s183 + $0x40] sm:$0xff]
        %v355 = vld [vmem:[%s183 + $0x48] sm:$0xff]
        %v356 = vld [vmem:[%s183 + $0x50] sm:$0xff]
        %v357 = vld [vmem:[%s183 + $0x58] sm:$0xff]
        %v358 = vld [vmem:[%s183 + $0x60] sm:$0xff]
        %v359 = vld [vmem:[%s183 + $0x68] sm:$0xff]
        %v360 = vld [vmem:[%s183 + $0x70] sm:$0xff]
        %v361 = vld [vmem:[%s183 + $0x78] sm:$0xff]
        %v362 = vld [vmem:[%s183 + $0x80] sm:$0xff]
        %v363 = vld [vmem:[%s183 + $0x88] sm:$0xff]
        %v364 = vld [vmem:[%s183 + $0x90] sm:$0xff]
        %v365 = vld [vmem:[%s183 + $0x98] sm:$0xff]
        %v366 = vld [vmem:[%s183 + $0xa0] sm:$0xff]
        %v367 = vld [vmem:[%s183 + $0xa8] sm:$0xff]
        %v368 = vld [vmem:[%s183 + $0xb0] sm:$0xff]
        %v369 = vld [vmem:[%s183 + $0xb8] sm:$0xff]
        %v370 = vld [vmem:[%s183 + $0xc0] sm:$0xff]
        %v371 = vld [vmem:[%s183 + $0xc8] sm:$0xff]
        %v372 = vld [vmem:[%s183 + $0xd0] sm:$0xff]
        %v373 = vld [vmem:[%s183 + $0xd8] sm:$0xff]
        %v374 = vld [vmem:[%s183 + $0xe0] sm:$0xff]
        %v375 = vld [vmem:[%s183 + $0xe8] sm:$0xff]
        %v376 = vld [vmem:[%s183 + $0xf0] sm:$0xff]
        %v377 = vld [vmem:[%s183 + $0xf8] sm:$0xff]
        %v378 = vld [vmem:[%s183 + $0x100] sm:$0xff]
        %v379 = vld [vmem:[%s183 + $0x108] sm:$0xff]
        %v380 = vld [vmem:[%s183 + $0x110] sm:$0xff]
        %v381 = vld [vmem:[%s183 + $0x118] sm:$0xff]
        %v382 = vld [vmem:[%s183 + $0x120] sm:$0xff]
        %v383 = vld [vmem:[%s183 + $0x128] sm:$0xff]
        %v384 = vld [vmem:[%s183 + $0x130] sm:$0xff]
        %v385 = vld [vmem:[%s183 + $0x138] sm:$0xff]
        %v386 = vld [vmem:[%s183 + $0x140] sm:$0xff]
        %v387 = vld [vmem:[%s183 + $0x148] sm:$0xff]
        %v388 = vld [vmem:[%s183 + $0x150] sm:$0xff]
        %v389 = vld [vmem:[%s183 + $0x158] sm:$0xff]
        %v390 = vld [vmem:[%s183 + $0x160] sm:$0xff]
        %v391 = vld [vmem:[%s183 + $0x168] sm:$0xff]
        %v392 = vld [vmem:[%s183 + $0x170] sm:$0xff]
        %v393 = vld [vmem:[%s183 + $0x178] sm:$0xff]
        %v410 = vunpack.c.l.b16 %v330
        %v411 = vunpack.c.h.b16 %v330
        %v412 = vunpack.c.l.b16 %v331
        %v413 = vunpack.c.h.b16 %v331
        %v414 = vunpack.c.l.b16 %v332
        %v415 = vunpack.c.h.b16 %v332
        %v416 = vunpack.c.l.b16 %v333
        %v417 = vunpack.c.h.b16 %v333
        %v418 = vunpack.c.l.b16 %v334
        %v419 = vunpack.c.h.b16 %v334
        %v420 = vunpack.c.l.b16 %v335
        %v421 = vunpack.c.h.b16 %v335
        %v422 = vunpack.c.l.b16 %v336
        %v423 = vunpack.c.h.b16 %v336
        %v424 = vunpack.c.l.b16 %v337
        %v425 = vunpack.c.h.b16 %v337
        %v426 = vunpack.c.l.b16 %v338
        %v427 = vunpack.c.h.b16 %v338
        %v428 = vunpack.c.l.b16 %v339
        %v429 = vunpack.c.h.b16 %v339
        %v430 = vunpack.c.l.b16 %v340
        %v431 = vunpack.c.h.b16 %v340
        %v432 = vunpack.c.l.b16 %v341
        %v433 = vunpack.c.h.b16 %v341
        %v434 = vunpack.c.l.b16 %v342
        %v435 = vunpack.c.h.b16 %v342
        %v436 = vunpack.c.l.b16 %v343
        %v437 = vunpack.c.h.b16 %v343
        %v438 = vunpack.c.l.b16 %v344
        %v439 = vunpack.c.h.b16 %v344
        %v440 = vunpack.c.l.b16 %v345
        %v441 = vunpack.c.h.b16 %v345
        %v442 = vpack.c.b16 %v412, %v410
        %v443 = vpack.c.b16 %v413, %v411
        %v444 = vpack.c.b16 %v416, %v414
        %v445 = vpack.c.b16 %v417, %v415
        %v446 = vpack.c.b16 %v420, %v418
        %v447 = vpack.c.b16 %v421, %v419
        %v448 = vpack.c.b16 %v424, %v422
        %v449 = vpack.c.b16 %v425, %v423
        %v450 = vpack.c.b16 %v428, %v426
        %v451 = vpack.c.b16 %v429, %v427
        %v452 = vpack.c.b16 %v432, %v430
        %v453 = vpack.c.b16 %v433, %v431
        %v454 = vpack.c.b16 %v436, %v434
        %v455 = vpack.c.b16 %v437, %v435
        %v456 = vpack.c.b16 %v440, %v438
        %v457 = vpack.c.b16 %v441, %v439
        %v522 = vunpack.c.l.b16 %v346
        %v523 = vunpack.c.h.b16 %v346
        %v524 = vunpack.c.l.b16 %v347
        %v525 = vunpack.c.h.b16 %v347
        %v526 = vunpack.c.l.b16 %v348
        %v527 = vunpack.c.h.b16 %v348
        %v528 = vunpack.c.l.b16 %v349
        %v529 = vunpack.c.h.b16 %v349
        %v530 = vunpack.c.l.b16 %v350
        %v531 = vunpack.c.h.b16 %v350
        %v532 = vunpack.c.l.b16 %v351
        %v533 = vunpack.c.h.b16 %v351
        %v534 = vunpack.c.l.b16 %v352
        %v535 = vunpack.c.h.b16 %v352
        %v536 = vunpack.c.l.b16 %v353
        %v537 = vunpack.c.h.b16 %v353
        %v538 = vunpack.c.l.b16 %v354
        %v539 = vunpack.c.h.b16 %v354
        %v540 = vunpack.c.l.b16 %v355
        %v541 = vunpack.c.h.b16 %v355
        %v542 = vunpack.c.l.b16 %v356
        %v543 = vunpack.c.h.b16 %v356
        %v544 = vunpack.c.l.b16 %v357
        %v545 = vunpack.c.h.b16 %v357
        %v546 = vunpack.c.l.b16 %v358
        %v547 = vunpack.c.h.b16 %v358
        %v548 = vunpack.c.l.b16 %v359
        %v549 = vunpack.c.h.b16 %v359
        %v550 = vunpack.c.l.b16 %v360
        %v551 = vunpack.c.h.b16 %v360
        %v552 = vunpack.c.l.b16 %v361
        %v553 = vunpack.c.h.b16 %v361
        %v554 = vunpack.c.l.b16 %v362
        %v555 = vunpack.c.h.b16 %v362
        %v556 = vunpack.c.l.b16 %v363
        %v557 = vunpack.c.h.b16 %v363
        %v558 = vunpack.c.l.b16 %v364
        %v559 = vunpack.c.h.b16 %v364
        %v560 = vunpack.c.l.b16 %v365
        %v561 = vunpack.c.h.b16 %v365
        %v562 = vunpack.c.l.b16 %v366
        %v563 = vunpack.c.h.b16 %v366
        %v564 = vunpack.c.l.b16 %v367
        %v565 = vunpack.c.h.b16 %v367
        %v566 = vunpack.c.l.b16 %v368
        %v567 = vunpack.c.h.b16 %v368
        %v568 = vunpack.c.l.b16 %v369
        %v569 = vunpack.c.h.b16 %v369
        %v570 = vunpack.c.l.b16 %v370
        %v571 = vunpack.c.h.b16 %v370
        %v572 = vunpack.c.l.b16 %v371
        %v573 = vunpack.c.h.b16 %v371
        %v574 = vunpack.c.l.b16 %v372
        %v575 = vunpack.c.h.b16 %v372
        %v576 = vunpack.c.l.b16 %v373
        %v577 = vunpack.c.h.b16 %v373
        %v578 = vunpack.c.l.b16 %v374
        %v579 = vunpack.c.h.b16 %v374
        %v580 = vunpack.c.l.b16 %v375
        %v581 = vunpack.c.h.b16 %v375
        %v582 = vunpack.c.l.b16 %v376
        %v583 = vunpack.c.h.b16 %v376
        %v584 = vunpack.c.l.b16 %v377
        %v585 = vunpack.c.h.b16 %v377
        %v586 = vunpack.c.l.b16 %v378
        %v587 = vunpack.c.h.b16 %v378
        %v588 = vunpack.c.l.b16 %v379
        %v589 = vunpack.c.h.b16 %v379
        %v590 = vunpack.c.l.b16 %v380
        %v591 = vunpack.c.h.b16 %v380
        %v592 = vunpack.c.l.b16 %v381
        %v593 = vunpack.c.h.b16 %v381
        %v594 = vunpack.c.l.b16 %v382
        %v595 = vunpack.c.h.b16 %v382
        %v596 = vunpack.c.l.b16 %v383
        %v597 = vunpack.c.h.b16 %v383
        %v598 = vunpack.c.l.b16 %v384
        %v599 = vunpack.c.h.b16 %v384
        %v600 = vunpack.c.l.b16 %v385
        %v601 = vunpack.c.h.b16 %v385
        %v602 = vunpack.c.l.b16 %v386
        %v603 = vunpack.c.h.b16 %v386
        %v604 = vunpack.c.l.b16 %v387
        %v605 = vunpack.c.h.b16 %v387
        %v606 = vunpack.c.l.b16 %v388
        %v607 = vunpack.c.h.b16 %v388
        %v608 = vunpack.c.l.b16 %v389
        %v609 = vunpack.c.h.b16 %v389
        %v610 = vunpack.c.l.b16 %v390
        %v611 = vunpack.c.h.b16 %v390
        %v612 = vunpack.c.l.b16 %v391
        %v613 = vunpack.c.h.b16 %v391
        %v614 = vunpack.c.l.b16 %v392
        %v615 = vunpack.c.h.b16 %v392
        %v616 = vunpack.c.l.b16 %v393
        %v617 = vunpack.c.h.b16 %v393
        %v618 = vpack.c.b16 %v524, %v522
        %v619 = vpack.c.b16 %v525, %v523
        %v620 = vpack.c.b16 %v528, %v526
        %v621 = vpack.c.b16 %v529, %v527
        %v622 = vpack.c.b16 %v532, %v530
        %v623 = vpack.c.b16 %v533, %v531
        %v624 = vpack.c.b16 %v536, %v534
        %v625 = vpack.c.b16 %v537, %v535
        %v626 = vpack.c.b16 %v540, %v538
        %v627 = vpack.c.b16 %v541, %v539
        %v628 = vpack.c.b16 %v544, %v542
        %v629 = vpack.c.b16 %v545, %v543
        %v630 = vpack.c.b16 %v548, %v546
        %v631 = vpack.c.b16 %v549, %v547
        %v632 = vpack.c.b16 %v552, %v550
        %v633 = vpack.c.b16 %v553, %v551
        %v634 = vpack.c.b16 %v556, %v554
        %v635 = vpack.c.b16 %v557, %v555
        %v636 = vpack.c.b16 %v560, %v558
        %v637 = vpack.c.b16 %v561, %v559
        %v638 = vpack.c.b16 %v564, %v562
        %v639 = vpack.c.b16 %v565, %v563
        %v640 = vpack.c.b16 %v568, %v566
        %v641 = vpack.c.b16 %v569, %v567
        %v642 = vpack.c.b16 %v572, %v570
        %v643 = vpack.c.b16 %v573, %v571
        %v644 = vpack.c.b16 %v576, %v574
        %v645 = vpack.c.b16 %v577, %v575
        %v646 = vpack.c.b16 %v580, %v578
        %v647 = vpack.c.b16 %v581, %v579
        %v648 = vpack.c.b16 %v584, %v582
        %v649 = vpack.c.b16 %v585, %v583
        %v650 = vpack.c.b16 %v588, %v586
        %v651 = vpack.c.b16 %v589, %v587
        %v652 = vpack.c.b16 %v592, %v590
        %v653 = vpack.c.b16 %v593, %v591
        %v654 = vpack.c.b16 %v596, %v594
        %v655 = vpack.c.b16 %v597, %v595
        %v656 = vpack.c.b16 %v600, %v598
        %v657 = vpack.c.b16 %v601, %v599
        %v658 = vpack.c.b16 %v604, %v602
        %v659 = vpack.c.b16 %v605, %v603
        %v660 = vpack.c.b16 %v608, %v606
        %v661 = vpack.c.b16 %v609, %v607
        %v662 = vpack.c.b16 %v612, %v610
        %v663 = vpack.c.b16 %v613, %v611
        %v664 = vpack.c.b16 %v616, %v614
        %v665 = vpack.c.b16 %v617, %v615
        %714 = vmatprep.subr.bf16.mxu0 %v619
        %715 = vmatpush1.bf16.xpose.msra.mxu0 %v618
        %716 = vmatprep.subr.bf16.mxu0 %v621
        %717 = vmatpush1.bf16.xpose.msra.mxu0 %v620
        %718 = vmatprep.subr.bf16.mxu0 %v623
        %719 = vmatpush1.bf16.xpose.msra.mxu0 %v622
        %720 = vmatprep.subr.bf16.mxu0 %v625
        %721 = vmatpush1.bf16.xpose.msra.mxu0 %v624
        %722 = vmatprep.subr.bf16.mxu0 %v627
        %723 = vmatpush1.bf16.xpose.msra.mxu0 %v626
        %724 = vmatprep.subr.bf16.mxu0 %v629
        %725 = vmatpush1.bf16.xpose.msra.mxu0 %v628
        %726 = vmatprep.subr.bf16.mxu0 %v631
        %727 = vmatpush1.bf16.xpose.msra.mxu0 %v630
        %728 = vmatprep.subr.bf16.mxu0 %v633
        %729 = vmatpush1.bf16.xpose.msra.mxu0 %v632
        %730 = vmatprep.subr.bf16.mxu0 %v635
        %731 = vmatpush1.bf16.xpose.msra.mxu0 %v634
        %732 = vmatprep.subr.bf16.mxu0 %v637
        %733 = vmatpush1.bf16.xpose.msra.mxu0 %v636
        %734 = vmatprep.subr.bf16.mxu0 %v639
        %735 = vmatpush1.bf16.xpose.msra.mxu0 %v638
        %736 = vmatprep.subr.bf16.mxu0 %v641
        %737 = vmatpush1.bf16.xpose.msra.mxu0 %v640
        %738 = vmatprep.subr.bf16.mxu0 %v643
        %739 = vmatpush1.bf16.xpose.msra.mxu0 %v642
        %740 = vmatprep.subr.bf16.mxu0 %v645
        %741 = vmatpush1.bf16.xpose.msra.mxu0 %v644
        %742 = vmatprep.subr.bf16.mxu0 %v647
        %743 = vmatpush1.bf16.xpose.msra.mxu0 %v646
        %744 = vmatprep.subr.bf16.mxu0 %v649
        %745 = vmatpush1.bf16.xpose.msra.mxu0 %v648
        %746 = vmatprep.mubr.bf16.mxu0 %v443
        %747 = vmatmul.mubr.bf16.gmra.mrb[0].mxu0 %v442
        %v748 = vpop.f32.mrb[0].mxu0
        %v749 = vadd.f32 0.0, %v748
        %v750 = vpop.f32.mrb[0].mxu0
        %v751 = vadd.f32 0.0, %v750
        %v752 = vpop.f32.mrb[0].mxu0
        %v753 = vadd.f32 0.0, %v752
        %v754 = vpop.f32.mrb[0].mxu0
        %v755 = vadd.f32 0.0, %v754
        %756 = vmatprep.mubr.bf16.mxu0 %v445
        %757 = vmatmul.mubr.bf16.gmra.mrb[0].mxu0 %v444
        %v758 = vpop.f32.mrb[0].mxu0
        %v759 = vadd.f32 0.0, %v758
        %v760 = vpop.f32.mrb[0].mxu0
        %v761 = vadd.f32 0.0, %v760
        %v762 = vpop.f32.mrb[0].mxu0
        %v763 = vadd.f32 0.0, %v762
        %v764 = vpop.f32.mrb[0].mxu0
        %v765 = vadd.f32 0.0, %v764
        %766 = vmatprep.mubr.bf16.mxu0 %v447
        %767 = vmatmul.mubr.bf16.gmra.mrb[0].mxu0 %v446
        %v768 = vpop.f32.mrb[0].mxu0
        %v769 = vadd.f32 0.0, %v768
        %v770 = vpop.f32.mrb[0].mxu0
        %v771 = vadd.f32 0.0, %v770
        %v772 = vpop.f32.mrb[0].mxu0
        %v773 = vadd.f32 0.0, %v772
        %v774 = vpop.f32.mrb[0].mxu0
        %v775 = vadd.f32 0.0, %v774
        %776 = vmatprep.mubr.bf16.mxu0 %v449
        %777 = vmatmul.mubr.bf16.gmra.mrb[0].mxu0 %v448
        %v778 = vpop.f32.mrb[0].mxu0
        %v779 = vadd.f32 0.0, %v778
        %v780 = vpop.f32.mrb[0].mxu0
        %v781 = vadd.f32 0.0, %v780
        %v782 = vpop.f32.mrb[0].mxu0
        %v783 = vadd.f32 0.0, %v782
        %v784 = vpop.f32.mrb[0].mxu0
        %v785 = vadd.f32 0.0, %v784
        %786 = vmatprep.mubr.bf16.mxu0 %v451
        %787 = vmatmul.mubr.bf16.gmra.mrb[0].mxu0 %v450
        %v788 = vpop.f32.mrb[0].mxu0
        %v789 = vadd.f32 0.0, %v788
        %v790 = vpop.f32.mrb[0].mxu0
        %v791 = vadd.f32 0.0, %v790
        %v792 = vpop.f32.mrb[0].mxu0
        %v793 = vadd.f32 0.0, %v792
        %v794 = vpop.f32.mrb[0].mxu0
        %v795 = vadd.f32 0.0, %v794
        %796 = vmatprep.mubr.bf16.mxu0 %v453
        %797 = vmatmul.mubr.bf16.gmra.mrb[0].mxu0 %v452
        %v798 = vpop.f32.mrb[0].mxu0
        %v799 = vadd.f32 0.0, %v798
        %v800 = vpop.f32.mrb[0].mxu0
        %v801 = vadd.f32 0.0, %v800
        %v802 = vpop.f32.mrb[0].mxu0
        %v803 = vadd.f32 0.0, %v802
        %v804 = vpop.f32.mrb[0].mxu0
        %v805 = vadd.f32 0.0, %v804
        %806 = vmatprep.mubr.bf16.mxu0 %v455
        %807 = vmatmul.mubr.bf16.gmra.mrb[0].mxu0 %v454
        %v808 = vpop.f32.mrb[0].mxu0
        %v809 = vadd.f32 0.0, %v808
        %v810 = vpop.f32.mrb[0].mxu0
        %v811 = vadd.f32 0.0, %v810
        %v812 = vpop.f32.mrb[0].mxu0
        %v813 = vadd.f32 0.0, %v812
        %v814 = vpop.f32.mrb[0].mxu0
        %v815 = vadd.f32 0.0, %v814
        %816 = vmatprep.mubr.bf16.mxu0 %v457
        %817 = vmatmul.mubr.bf16.gmra.mrb[0].mxu0 %v456
        %v818 = vpop.f32.mrb[0].mxu0
        %v819 = vadd.f32 0.0, %v818
        %v820 = vpop.f32.mrb[0].mxu0
        %v821 = vadd.f32 0.0, %v820
        %v822 = vpop.f32.mrb[0].mxu0
        %v823 = vadd.f32 0.0, %v822
        %v824 = vpop.f32.mrb[0].mxu0
        %v825 = vadd.f32 0.0, %v824
        %826 = vdwg.mxu0
        %827 = vmatprep.subr.bf16.mxu0 %v651
        %828 = vmatpush1.bf16.xpose.msra.mxu0 %v650
        %829 = vmatprep.subr.bf16.mxu0 %v653
        %830 = vmatpush1.bf16.xpose.msra.mxu0 %v652
        %831 = vmatprep.subr.bf16.mxu0 %v655
        %832 = vmatpush1.bf16.xpose.msra.mxu0 %v654
        %833 = vmatprep.subr.bf16.mxu0 %v657
        %834 = vmatpush1.bf16.xpose.msra.mxu0 %v656
        %835 = vmatprep.subr.bf16.mxu0 %v659
        %836 = vmatpush1.bf16.xpose.msra.mxu0 %v658
        %837 = vmatprep.subr.bf16.mxu0 %v661
        %838 = vmatpush1.bf16.xpose.msra.mxu0 %v660
        %839 = vmatprep.subr.bf16.mxu0 %v663
        %840 = vmatpush1.bf16.xpose.msra.mxu0 %v662
        %841 = vmatprep.subr.bf16.mxu0 %v665
        %842 = vmatpush1.bf16.xpose.msra.mxu0 %v664
        %843 = vmatprep.subr.bf16.mxu0 0
        %844 = vmatpush1.bf16.xpose.msra.mxu0 0
        %845 = vmatprep.subr.bf16.mxu0 0
        %846 = vmatpush1.bf16.xpose.msra.mxu0 0
        %847 = vmatprep.subr.bf16.mxu0 0
        %848 = vmatpush1.bf16.xpose.msra.mxu0 0
        %849 = vmatprep.subr.bf16.mxu0 0
        %850 = vmatpush1.bf16.xpose.msra.mxu0 0
        %851 = vmatprep.subr.bf16.mxu0 0
        %852 = vmatpush1.bf16.xpose.msra.mxu0 0
        %853 = vmatprep.subr.bf16.mxu0 0
        %854 = vmatpush1.bf16.xpose.msra.mxu0 0
        %855 = vmatprep.subr.bf16.mxu0 0
        %856 = vmatpush1.bf16.xpose.msra.mxu0 0
        %857 = vmatprep.subr.bf16.mxu0 0
        %858 = vmatpush1.bf16.xpose.msra.mxu0 0
        %859 = vmatprep.mubr.bf16.mxu0 %v443
        %860 = vmatmul.mubr.bf16.gmra.mrb[0].mxu0 %v442
        %v861 = vpop.f32.mrb[0].mxu0
        %v862 = vadd.f32 0.0, %v861
        %v863 = vpop.f32.mrb[0].mxu0
        %v864 = vpop.f32.mrb[0].mxu0
        %v865 = vadd.f32 0.0, %v864
        %v866 = vpop.f32.mrb[0].mxu0
        %867 = vmatprep.mubr.bf16.mxu0 %v445
        %868 = vmatmul.mubr.bf16.gmra.mrb[0].mxu0 %v444
        %v869 = vpop.f32.mrb[0].mxu0
        %v870 = vadd.f32 0.0, %v869
        %v871 = vpop.f32.mrb[0].mxu0
        %v872 = vpop.f32.mrb[0].mxu0
        %v873 = vadd.f32 0.0, %v872
        %v874 = vpop.f32.mrb[0].mxu0
        %875 = vmatprep.mubr.bf16.mxu0 %v447
        %876 = vmatmul.mubr.bf16.gmra.mrb[0].mxu0 %v446
        %v877 = vpop.f32.mrb[0].mxu0
        %v878 = vadd.f32 0.0, %v877
        %v879 = vpop.f32.mrb[0].mxu0
        %v880 = vpop.f32.mrb[0].mxu0
        %v881 = vadd.f32 0.0, %v880
        %v882 = vpop.f32.mrb[0].mxu0
        %883 = vmatprep.mubr.bf16.mxu0 %v449
        %884 = vmatmul.mubr.bf16.gmra.mrb[0].mxu0 %v448
        %v885 = vpop.f32.mrb[0].mxu0
        %v886 = vadd.f32 0.0, %v885
        %v887 = vpop.f32.mrb[0].mxu0
        %v888 = vpop.f32.mrb[0].mxu0
        %v889 = vadd.f32 0.0, %v888
        %v890 = vpop.f32.mrb[0].mxu0
        %891 = vmatprep.mubr.bf16.mxu0 %v451
        %892 = vmatmul.mubr.bf16.gmra.mrb[0].mxu0 %v450
        %v893 = vpop.f32.mrb[0].mxu0
        %v894 = vadd.f32 0.0, %v893
        %v895 = vpop.f32.mrb[0].mxu0
        %v896 = vpop.f32.mrb[0].mxu0
        %v897 = vadd.f32 0.0, %v896
        %v898 = vpop.f32.mrb[0].mxu0
        %899 = vmatprep.mubr.bf16.mxu0 %v453
        %900 = vmatmul.mubr.bf16.gmra.mrb[0].mxu0 %v452
        %v901 = vpop.f32.mrb[0].mxu0
        %v902 = vadd.f32 0.0, %v901
        %v903 = vpop.f32.mrb[0].mxu0
        %v904 = vpop.f32.mrb[0].mxu0
        %v905 = vadd.f32 0.0, %v904
        %v906 = vpop.f32.mrb[0].mxu0
        %907 = vmatprep.mubr.bf16.mxu0 %v455
        %908 = vmatmul.mubr.bf16.gmra.mrb[0].mxu0 %v454
        %v909 = vpop.f32.mrb[0].mxu0
        %v910 = vadd.f32 0.0, %v909
        %v911 = vpop.f32.mrb[0].mxu0
        %v912 = vpop.f32.mrb[0].mxu0
        %v913 = vadd.f32 0.0, %v912
        %v914 = vpop.f32.mrb[0].mxu0
        %915 = vmatprep.mubr.bf16.mxu0 %v457
        %916 = vmatmul.mubr.bf16.gmra.mrb[0].mxu0 %v456
        %v917 = vpop.f32.mrb[0].mxu0
        %v918 = vadd.f32 0.0, %v917
        %v919 = vpop.f32.mrb[0].mxu0
        %v920 = vpop.f32.mrb[0].mxu0
        %v921 = vadd.f32 0.0, %v920
        %v922 = vpop.f32.mrb[0].mxu0
        %923 = vdwg.mxu0
        %v924 = vadd.f32 %v282, %v749
        %v925 = vadd.f32 %v283, %v751
        %v926 = vadd.f32 %v284, %v862
        %v927 = vadd.f32 %v285, %v753
        %v928 = vadd.f32 %v286, %v755
        %v929 = vadd.f32 %v287, %v865
        %v930 = vadd.f32 %v288, %v759
        %v931 = vadd.f32 %v289, %v761
        %v932 = vadd.f32 %v290, %v870
        %v933 = vadd.f32 %v291, %v763
        %v934 = vadd.f32 %v292, %v765
        %v935 = vadd.f32 %v293, %v873
        %v936 = vadd.f32 %v294, %v769
        %v937 = vadd.f32 %v295, %v771
        %v938 = vadd.f32 %v296, %v878
        %v939 = vadd.f32 %v297, %v773
        %v940 = vadd.f32 %v298, %v775
        %v941 = vadd.f32 %v299, %v881
        %v942 = vadd.f32 %v300, %v779
        %v943 = vadd.f32 %v301, %v781
        %v944 = vadd.f32 %v302, %v886
        %v945 = vadd.f32 %v303, %v783
        %v946 = vadd.f32 %v304, %v785
        %v947 = vadd.f32 %v305, %v889
        %v948 = vadd.f32 %v306, %v789
        %v949 = vadd.f32 %v307, %v791
        %v950 = vadd.f32 %v308, %v894
        %v951 = vadd.f32 %v309, %v793
        %v952 = vadd.f32 %v310, %v795
        %v953 = vadd.f32 %v311, %v897
        %v954 = vadd.f32 %v312, %v799
        %v955 = vadd.f32 %v313, %v801
        %v956 = vadd.f32 %v314, %v902
        %v957 = vadd.f32 %v315, %v803
        %v958 = vadd.f32 %v316, %v805
        %v959 = vadd.f32 %v317, %v905
        %v960 = vadd.f32 %v318, %v809
        %v961 = vadd.f32 %v319, %v811
        %v962 = vadd.f32 %v320, %v910
        %v963 = vadd.f32 %v321, %v813
        %v964 = vadd.f32 %v322, %v815
        %v965 = vadd.f32 %v323, %v913
        %v966 = vadd.f32 %v324, %v819
        %v967 = vadd.f32 %v325, %v821
        %v968 = vadd.f32 %v326, %v918
        %v969 = vadd.f32 %v327, %v823
        %v970 = vadd.f32 %v328, %v825
        %v971 = vadd.f32 %v329, %v921
        %972 = vst [vmem:[#allocation2] sm:$0xff] %v924
        %973 = vst [vmem:[#allocation2 + $0x8] sm:$0xff] %v925
        %974 = vst [vmem:[#allocation2 + $0x10] sm:$0xff] %v926
        %975 = vst [vmem:[#allocation2 + $0x18] sm:$0xff] %v927
        %976 = vst [vmem:[#allocation2 + $0x20] sm:$0xff] %v928
        %977 = vst [vmem:[#allocation2 + $0x28] sm:$0xff] %v929
        %978 = vst [vmem:[#allocation2 + $0x30] sm:$0xff] %v930
        %979 = vst [vmem:[#allocation2 + $0x38] sm:$0xff] %v931
        %980 = vst [vmem:[#allocation2 + $0x40] sm:$0xff] %v932
        %981 = vst [vmem:[#allocation2 + $0x48] sm:$0xff] %v933
        %982 = vst [vmem:[#allocation2 + $0x50] sm:$0xff] %v934
        %983 = vst [vmem:[#allocation2 + $0x58] sm:$0xff] %v935
        %984 = vst [vmem:[#allocation2 + $0x60] sm:$0xff] %v936
        %985 = vst [vmem:[#allocation2 + $0x68] sm:$0xff] %v937
        %986 = vst [vmem:[#allocation2 + $0x70] sm:$0xff] %v938
        %987 = vst [vmem:[#allocation2 + $0x78] sm:$0xff] %v939
        %988 = vst [vmem:[#allocation2 + $0x80] sm:$0xff] %v940
        %989 = vst [vmem:[#allocation2 + $0x88] sm:$0xff] %v941
        %990 = vst [vmem:[#allocation2 + $0x90] sm:$0xff] %v942
        %991 = vst [vmem:[#allocation2 + $0x98] sm:$0xff] %v943
        %992 = vst [vmem:[#allocation2 + $0xa0] sm:$0xff] %v944
        %993 = vst [vmem:[#allocation2 + $0xa8] sm:$0xff] %v945
        %994 = vst [vmem:[#allocation2 + $0xb0] sm:$0xff] %v946
        %995 = vst [vmem:[#allocation2 + $0xb8] sm:$0xff] %v947
        %996 = vst [vmem:[#allocation2 + $0xc0] sm:$0xff] %v948
        %997 = vst [vmem:[#allocation2 + $0xc8] sm:$0xff] %v949
        %998 = vst [vmem:[#allocation2 + $0xd0] sm:$0xff] %v950
        %999 = vst [vmem:[#allocation2 + $0xd8] sm:$0xff] %v951
        %1000 = vst [vmem:[#allocation2 + $0xe0] sm:$0xff] %v952
        %1001 = vst [vmem:[#allocation2 + $0xe8] sm:$0xff] %v953
        %1002 = vst [vmem:[#allocation2 + $0xf0] sm:$0xff] %v954
        %1003 = vst [vmem:[#allocation2 + $0xf8] sm:$0xff] %v955
        %1004 = vst [vmem:[#allocation2 + $0x100] sm:$0xff] %v956
        %1005 = vst [vmem:[#allocation2 + $0x108] sm:$0xff] %v957
        %1006 = vst [vmem:[#allocation2 + $0x110] sm:$0xff] %v958
        %1007 = vst [vmem:[#allocation2 + $0x118] sm:$0xff] %v959
        %1008 = vst [vmem:[#allocation2 + $0x120] sm:$0xff] %v960
        %1009 = vst [vmem:[#allocation2 + $0x128] sm:$0xff] %v961
        %1010 = vst [vmem:[#allocation2 + $0x130] sm:$0xff] %v962
        %1011 = vst [vmem:[#allocation2 + $0x138] sm:$0xff] %v963
        %1012 = vst [vmem:[#allocation2 + $0x140] sm:$0xff] %v964
        %1013 = vst [vmem:[#allocation2 + $0x148] sm:$0xff] %v965
        %1014 = vst [vmem:[#allocation2 + $0x150] sm:$0xff] %v966
        %1015 = vst [vmem:[#allocation2 + $0x158] sm:$0xff] %v967
        %1016 = vst [vmem:[#allocation2 + $0x160] sm:$0xff] %v968
        %1017 = vst [vmem:[#allocation2 + $0x168] sm:$0xff] %v969
        %1018 = vst [vmem:[#allocation2 + $0x170] sm:$0xff] %v970
        %1019 = vst [vmem:[#allocation2 + $0x178] sm:$0xff] %v971
        // Predicated region
        $region37: #{multi_head_attention.3} parent=27 // pred_check
          %p1020 = pneg %p230
        $region38: #{multi_head_attention.3} parent=27 // pred_check_branch
          %1022 = sbr.rel (%p1020) target = $region40
        $region39: #{multi_head_attention.3} parent=27 // pred_region
          %v1023 = vld [vmem:[#allocation2] sm:$0xff]
          %v1024 = vld [vmem:[#allocation2 + $0x8] sm:$0xff]
          %v1025 = vld [vmem:[#allocation2 + $0x10] sm:$0xff]
          %v1026 = vld [vmem:[#allocation2 + $0x18] sm:$0xff]
          %v1027 = vld [vmem:[#allocation2 + $0x20] sm:$0xff]
          %v1028 = vld [vmem:[#allocation2 + $0x28] sm:$0xff]
          %v1029 = vld [vmem:[#allocation2 + $0x30] sm:$0xff]
          %v1030 = vld [vmem:[#allocation2 + $0x38] sm:$0xff]
          %v1031 = vld [vmem:[#allocation2 + $0x40] sm:$0xff]
          %v1032 = vld [vmem:[#allocation2 + $0x48] sm:$0xff]
          %v1033 = vld [vmem:[#allocation2 + $0x50] sm:$0xff]
          %v1034 = vld [vmem:[#allocation2 + $0x58] sm:$0xff]
          %v1035 = vld [vmem:[#allocation2 + $0x60] sm:$0xff]
          %v1036 = vld [vmem:[#allocation2 + $0x68] sm:$0xff]
          %v1037 = vld [vmem:[#allocation2 + $0x70] sm:$0xff]
          %v1038 = vld [vmem:[#allocation2 + $0x78] sm:$0xff]
          %v1039 = vld [vmem:[#allocation2 + $0x80] sm:$0xff]
          %v1040 = vld [vmem:[#allocation2 + $0x88] sm:$0xff]
          %v1041 = vld [vmem:[#allocation2 + $0x90] sm:$0xff]
          %v1042 = vld [vmem:[#allocation2 + $0x98] sm:$0xff]
          %v1043 = vld [vmem:[#allocation2 + $0xa0] sm:$0xff]
          %v1044 = vld [vmem:[#allocation2 + $0xa8] sm:$0xff]
          %v1045 = vld [vmem:[#allocation2 + $0xb0] sm:$0xff]
          %v1046 = vld [vmem:[#allocation2 + $0xb8] sm:$0xff]
          %v1047 = vld [vmem:[#allocation2 + $0xc0] sm:$0xff]
          %v1048 = vld [vmem:[#allocation2 + $0xc8] sm:$0xff]
          %v1049 = vld [vmem:[#allocation2 + $0xd0] sm:$0xff]
          %v1050 = vld [vmem:[#allocation2 + $0xd8] sm:$0xff]
          %v1051 = vld [vmem:[#allocation2 + $0xe0] sm:$0xff]
          %v1052 = vld [vmem:[#allocation2 + $0xe8] sm:$0xff]
          %v1053 = vld [vmem:[#allocation2 + $0xf0] sm:$0xff]
          %v1054 = vld [vmem:[#allocation2 + $0xf8] sm:$0xff]
          %v1055 = vld [vmem:[#allocation2 + $0x100] sm:$0xff]
          %v1056 = vld [vmem:[#allocation2 + $0x108] sm:$0xff]
          %v1057 = vld [vmem:[#allocation2 + $0x110] sm:$0xff]
          %v1058 = vld [vmem:[#allocation2 + $0x118] sm:$0xff]
          %v1059 = vld [vmem:[#allocation2 + $0x120] sm:$0xff]
          %v1060 = vld [vmem:[#allocation2 + $0x128] sm:$0xff]
          %v1061 = vld [vmem:[#allocation2 + $0x130] sm:$0xff]
          %v1062 = vld [vmem:[#allocation2 + $0x138] sm:$0xff]
          %v1063 = vld [vmem:[#allocation2 + $0x140] sm:$0xff]
          %v1064 = vld [vmem:[#allocation2 + $0x148] sm:$0xff]
          %v1065 = vld [vmem:[#allocation2 + $0x150] sm:$0xff]
          %v1066 = vld [vmem:[#allocation2 + $0x158] sm:$0xff]
          %v1067 = vld [vmem:[#allocation2 + $0x160] sm:$0xff]
          %v1068 = vld [vmem:[#allocation2 + $0x168] sm:$0xff]
          %v1069 = vld [vmem:[#allocation2 + $0x170] sm:$0xff]
          %v1070 = vld [vmem:[#allocation2 + $0x178] sm:$0xff]
          %v1071 = vpack.c.bf16 %v1026, %v1023
          %v1072 = vpack.c.bf16 %v1027, %v1024
          %v1073 = vpack.c.bf16 %v1028, %v1025
          %v1074 = vpack.c.bf16 %v1032, %v1029
          %v1075 = vpack.c.bf16 %v1033, %v1030
          %v1076 = vpack.c.bf16 %v1034, %v1031
          %v1077 = vpack.c.bf16 %v1038, %v1035
          %v1078 = vpack.c.bf16 %v1039, %v1036
          %v1079 = vpack.c.bf16 %v1040, %v1037
          %v1080 = vpack.c.bf16 %v1044, %v1041
          %v1081 = vpack.c.bf16 %v1045, %v1042
          %v1082 = vpack.c.bf16 %v1046, %v1043
          %v1083 = vpack.c.bf16 %v1050, %v1047
          %v1084 = vpack.c.bf16 %v1051, %v1048
          %v1085 = vpack.c.bf16 %v1052, %v1049
          %v1086 = vpack.c.bf16 %v1056, %v1053
          %v1087 = vpack.c.bf16 %v1057, %v1054
          %v1088 = vpack.c.bf16 %v1058, %v1055
          %v1089 = vpack.c.bf16 %v1062, %v1059
          %v1090 = vpack.c.bf16 %v1063, %v1060
          %v1091 = vpack.c.bf16 %v1064, %v1061
          %v1092 = vpack.c.bf16 %v1068, %v1065
          %v1093 = vpack.c.bf16 %v1069, %v1066
          %v1094 = vpack.c.bf16 %v1070, %v1067
          %v1119 = vunpack.c.l.b16 %v1071
          %v1120 = vunpack.c.l.b16 %v1072
          %v1121 = vunpack.c.l.b16 %v1073
          %v1122 = vunpack.c.h.b16 %v1071
          %v1123 = vunpack.c.h.b16 %v1072
          %v1124 = vunpack.c.h.b16 %v1073
          %v1125 = vunpack.c.l.b16 %v1074
          %v1126 = vunpack.c.l.b16 %v1075
          %v1127 = vunpack.c.l.b16 %v1076
          %v1128 = vunpack.c.h.b16 %v1074
          %v1129 = vunpack.c.h.b16 %v1075
          %v1130 = vunpack.c.h.b16 %v1076
          %v1131 = vunpack.c.l.b16 %v1077
          %v1132 = vunpack.c.l.b16 %v1078
          %v1133 = vunpack.c.l.b16 %v1079
          %v1134 = vunpack.c.h.b16 %v1077
          %v1135 = vunpack.c.h.b16 %v1078
          %v1136 = vunpack.c.h.b16 %v1079
          %v1137 = vunpack.c.l.b16 %v1080
          %v1138 = vunpack.c.l.b16 %v1081
          %v1139 = vunpack.c.l.b16 %v1082
          %v1140 = vunpack.c.h.b16 %v1080
          %v1141 = vunpack.c.h.b16 %v1081
          %v1142 = vunpack.c.h.b16 %v1082
          %v1143 = vunpack.c.l.b16 %v1083
          %v1144 = vunpack.c.l.b16 %v1084
          %v1145 = vunpack.c.l.b16 %v1085
          %v1146 = vunpack.c.h.b16 %v1083
          %v1147 = vunpack.c.h.b16 %v1084
          %v1148 = vunpack.c.h.b16 %v1085
          %v1149 = vunpack.c.l.b16 %v1086
          %v1150 = vunpack.c.l.b16 %v1087
          %v1151 = vunpack.c.l.b16 %v1088
          %v1152 = vunpack.c.h.b16 %v1086
          %v1153 = vunpack.c.h.b16 %v1087
          %v1154 = vunpack.c.h.b16 %v1088
          %v1155 = vunpack.c.l.b16 %v1089
          %v1156 = vunpack.c.l.b16 %v1090
          %v1157 = vunpack.c.l.b16 %v1091
          %v1158 = vunpack.c.h.b16 %v1089
          %v1159 = vunpack.c.h.b16 %v1090
          %v1160 = vunpack.c.h.b16 %v1091
          %v1161 = vunpack.c.l.b16 %v1092
          %v1162 = vunpack.c.l.b16 %v1093
          %v1163 = vunpack.c.l.b16 %v1094
          %v1164 = vunpack.c.h.b16 %v1092
          %v1165 = vunpack.c.h.b16 %v1093
          %v1166 = vunpack.c.h.b16 %v1094
          %v1167 = vpack.c.b16 %v1120, %v1119
          %v1168 = vpack.c.b16 %v1121, %v1121
          %v1169 = vpack.c.b16 %v1123, %v1122
          %v1170 = vpack.c.b16 %v1124, %v1124
          %v1171 = vpack.c.b16 %v1126, %v1125
          %v1172 = vpack.c.b16 %v1127, %v1127
          %v1173 = vpack.c.b16 %v1129, %v1128
          %v1174 = vpack.c.b16 %v1130, %v1130
          %v1175 = vpack.c.b16 %v1132, %v1131
          %v1176 = vpack.c.b16 %v1133, %v1133
          %v1177 = vpack.c.b16 %v1135, %v1134
          %v1178 = vpack.c.b16 %v1136, %v1136
          %v1179 = vpack.c.b16 %v1138, %v1137
          %v1180 = vpack.c.b16 %v1139, %v1139
          %v1181 = vpack.c.b16 %v1141, %v1140
          %v1182 = vpack.c.b16 %v1142, %v1142
          %v1183 = vpack.c.b16 %v1144, %v1143
          %v1184 = vpack.c.b16 %v1145, %v1145
          %v1185 = vpack.c.b16 %v1147, %v1146
          %v1186 = vpack.c.b16 %v1148, %v1148
          %v1187 = vpack.c.b16 %v1150, %v1149
          %v1188 = vpack.c.b16 %v1151, %v1151
          %v1189 = vpack.c.b16 %v1153, %v1152
          %v1190 = vpack.c.b16 %v1154, %v1154
          %v1191 = vpack.c.b16 %v1156, %v1155
          %v1192 = vpack.c.b16 %v1157, %v1157
          %v1193 = vpack.c.b16 %v1159, %v1158
          %v1194 = vpack.c.b16 %v1160, %v1160
          %v1195 = vpack.c.b16 %v1162, %v1161
          %v1196 = vpack.c.b16 %v1163, %v1163
          %v1197 = vpack.c.b16 %v1165, %v1164
          %v1198 = vpack.c.b16 %v1166, %v1166
          %1231 = vst [vmem:[%s212] sm:$0xff] %v1167
          %1232 = vst [vmem:[%s212 + $0x8] sm:$0xf] %v1168
          %1233 = vst [vmem:[%s212 + $0xc] sm:$0xff] %v1169
          %1234 = vst [vmem:[%s212 + $0x14] sm:$0xf] %v1170
          %1235 = vst [vmem:[%s212 + $0x18] sm:$0xff] %v1171
          %1236 = vst [vmem:[%s212 + $0x20] sm:$0xf] %v1172
          %1237 = vst [vmem:[%s212 + $0x24] sm:$0xff] %v1173
          %1238 = vst [vmem:[%s212 + $0x2c] sm:$0xf] %v1174
          %1239 = vst [vmem:[%s212 + $0x30] sm:$0xff] %v1175
          %1240 = vst [vmem:[%s212 + $0x38] sm:$0xf] %v1176
          %1241 = vst [vmem:[%s212 + $0x3c] sm:$0xff] %v1177
          %1242 = vst [vmem:[%s212 + $0x44] sm:$0xf] %v1178
          %1243 = vst [vmem:[%s212 + $0x48] sm:$0xff] %v1179
          %1244 = vst [vmem:[%s212 + $0x50] sm:$0xf] %v1180
          %1245 = vst [vmem:[%s212 + $0x54] sm:$0xff] %v1181
          %1246 = vst [vmem:[%s212 + $0x5c] sm:$0xf] %v1182
          %1247 = vst [vmem:[%s212 + $0x60] sm:$0xff] %v1183
          %1248 = vst [vmem:[%s212 + $0x68] sm:$0xf] %v1184
          %1249 = vst [vmem:[%s212 + $0x6c] sm:$0xff] %v1185
          %1250 = vst [vmem:[%s212 + $0x74] sm:$0xf] %v1186
          %1251 = vst [vmem:[%s212 + $0x78] sm:$0xff] %v1187
          %1252 = vst [vmem:[%s212 + $0x80] sm:$0xf] %v1188
          %1253 = vst [vmem:[%s212 + $0x84] sm:$0xff] %v1189
          %1254 = vst [vmem:[%s212 + $0x8c] sm:$0xf] %v1190
          %1255 = vst [vmem:[%s212 + $0x90] sm:$0xff] %v1191
          %1256 = vst [vmem:[%s212 + $0x98] sm:$0xf] %v1192
          %1257 = vst [vmem:[%s212 + $0x9c] sm:$0xff] %v1193
          %1258 = vst [vmem:[%s212 + $0xa4] sm:$0xf] %v1194
          %1259 = vst [vmem:[%s212 + $0xa8] sm:$0xff] %v1195
          %1260 = vst [vmem:[%s212 + $0xb0] sm:$0xf] %v1196
          %1261 = vst [vmem:[%s212 + $0xb4] sm:$0xff] %v1197
          %1262 = vst [vmem:[%s212 + $0xbc] sm:$0xf] %v1198
        $region40: #{multi_head_attention.3} parent=27 // pred_fallthru
          _
        %s1263 = sand.u32 %s101, 1
        %s1264 = sand.u32 %s101, 1
        %s1265 = smul.addr %s1264, 192
        %s1266 = scalar_lea.vmem [#allocation5], %s1265
        // Predicated region
        $region41: #{multi_head_attention.3} parent=27 // pred_check
          %p1267 = pneg %p111
        $region42: #{multi_head_attention.3} parent=27 // pred_check_branch
          %1269 = sbr.rel (%p1267) target = $region44
        $region43: #{multi_head_attention.3} parent=27 // pred_region
          %s1270 = smul.u32 16, %s21
          %s1271 = smul.u32 3, %s22
          %s1272 = smul.addr %s1270, 6
          %s1273 = sadd.s32 %s1271, %s1272
          %s1274 = smul.addr %s1273, 4
          %s1275 = scalar_lea.vmem %s2, %s1274
          // Predicated region
          $region45: #{multi_head_attention.3} parent=43 // pred_check
            _
          $region46: #{multi_head_attention.3} parent=43 // pred_check_branch
            %1277 = sbr.rel (0) target = $region48
          $region47: #{multi_head_attention.3} parent=43 // pred_region
            // Predicated region
            $region49: #{multi_head_attention.3} parent=47 // pred_check
              _
            $region50: #{multi_head_attention.3} parent=47 // pred_check_branch
              %1279 = sbr.rel (0) target = $region52
            $region51: #{multi_head_attention.3} parent=47 // pred_region
              %s1280 = scalar_lea.vmem %s1266, 8 [#allocation5]
              %s1281 = scalar_lea.vmem %s1275, 8
              loop: start=0, step=1, limit=1
              $region53: #{multi_head_attention.3} parent=51 // loop_pre_header
                _
              $region54: #{multi_head_attention.3} parent=51 // loop_header
                %s1283 = sphi 0, %s1287
                %p1284 = scmp.ge.s32.totalorder %s1283, 1
                %s1288 = sphi %s1266, %s1266
                %s1289 = sphi %s1275, %s1275
              $region55: #{multi_head_attention.3} parent=51 // loop_header_branch
                %1286 = sbr.rel (%p1284) target = $region59
              $region56: #{multi_head_attention.3} parent=51 // loop_body
                %v1290 = vld [vmem:[%s1288] sm:$0xff]
                %1291 = vst [vmem:[%s1289] sm:$0xff] %v1290
                %v1292 = vld [vmem:[%s1288 + $0xc] sm:$0xff]
                %1293 = vst [vmem:[%s1289 + $0x18] sm:$0xff] %v1292
                %v1294 = vld [vmem:[%s1288 + $0x18] sm:$0xff]
                %1295 = vst [vmem:[%s1289 + $0x30] sm:$0xff] %v1294
                %v1296 = vld [vmem:[%s1288 + $0x24] sm:$0xff]
                %1297 = vst [vmem:[%s1289 + $0x48] sm:$0xff] %v1296
                %v1298 = vld [vmem:[%s1288 + $0x30] sm:$0xff]
                %1299 = vst [vmem:[%s1289 + $0x60] sm:$0xff] %v1298
                %v1300 = vld [vmem:[%s1288 + $0x3c] sm:$0xff]
                %1301 = vst [vmem:[%s1289 + $0x78] sm:$0xff] %v1300
                %v1302 = vld [vmem:[%s1288 + $0x48] sm:$0xff]
                %1303 = vst [vmem:[%s1289 + $0x90] sm:$0xff] %v1302
                %v1304 = vld [vmem:[%s1288 + $0x54] sm:$0xff]
                %1305 = vst [vmem:[%s1289 + $0xa8] sm:$0xff] %v1304
                %v1306 = vld [vmem:[%s1288 + $0x60] sm:$0xff]
                %1307 = vst [vmem:[%s1289 + $0xc0] sm:$0xff] %v1306
                %v1308 = vld [vmem:[%s1288 + $0x6c] sm:$0xff]
                %1309 = vst [vmem:[%s1289 + $0xd8] sm:$0xff] %v1308
                %v1310 = vld [vmem:[%s1288 + $0x78] sm:$0xff]
                %1311 = vst [vmem:[%s1289 + $0xf0] sm:$0xff] %v1310
                %v1312 = vld [vmem:[%s1288 + $0x84] sm:$0xff]
                %1313 = vst [vmem:[%s1289 + $0x108] sm:$0xff] %v1312
                %v1314 = vld [vmem:[%s1288 + $0x90] sm:$0xff]
                %1315 = vst [vmem:[%s1289 + $0x120] sm:$0xff] %v1314
                %v1316 = vld [vmem:[%s1288 + $0x9c] sm:$0xff]
                %1317 = vst [vmem:[%s1289 + $0x138] sm:$0xff] %v1316
                %v1318 = vld [vmem:[%s1288 + $0xa8] sm:$0xff]
                %1319 = vst [vmem:[%s1289 + $0x150] sm:$0xff] %v1318
                %v1320 = vld [vmem:[%s1288 + $0xb4] sm:$0xff]
                %1321 = vst [vmem:[%s1289 + $0x168] sm:$0xff] %v1320
              $region57: #{multi_head_attention.3} parent=51 // loop_footer
                %s1287 = sadd.s32 1, %s1283
              $region58: #{multi_head_attention.3} parent=51 // loop_footer_branch
                %1282 = sbr.rel target = $region54
              $region59: #{multi_head_attention.3} parent=51 // loop_exit
                _
              loop: start=0, step=1, limit=1
              $region60: #{multi_head_attention.3} parent=51 // loop_pre_header
                _
              $region61: #{multi_head_attention.3} parent=51 // loop_header
                %s1324 = sphi 0, %s1328
                %p1325 = scmp.ge.s32.totalorder %s1324, 1
                %s1329 = sphi %s1280, %s1280
                %s1330 = sphi %s1281, %s1281
              $region62: #{multi_head_attention.3} parent=51 // loop_header_branch
                %1327 = sbr.rel (%p1325) target = $region66
              $region63: #{multi_head_attention.3} parent=51 // loop_body
                %v1331 = vld [vmem:[%s1329] sm:$0xf]
                %1332 = vst [vmem:[%s1330] sm:$0xf] %v1331
                %v1333 = vld [vmem:[%s1329 + $0xc] sm:$0xf]
                %1334 = vst [vmem:[%s1330 + $0x18] sm:$0xf] %v1333
                %v1335 = vld [vmem:[%s1329 + $0x18] sm:$0xf]
                %1336 = vst [vmem:[%s1330 + $0x30] sm:$0xf] %v1335
                %v1337 = vld [vmem:[%s1329 + $0x24] sm:$0xf]
                %1338 = vst [vmem:[%s1330 + $0x48] sm:$0xf] %v1337
                %v1339 = vld [vmem:[%s1329 + $0x30] sm:$0xf]
                %1340 = vst [vmem:[%s1330 + $0x60] sm:$0xf] %v1339
                %v1341 = vld [vmem:[%s1329 + $0x3c] sm:$0xf]
                %1342 = vst [vmem:[%s1330 + $0x78] sm:$0xf] %v1341
                %v1343 = vld [vmem:[%s1329 + $0x48] sm:$0xf]
                %1344 = vst [vmem:[%s1330 + $0x90] sm:$0xf] %v1343
                %v1345 = vld [vmem:[%s1329 + $0x54] sm:$0xf]
                %1346 = vst [vmem:[%s1330 + $0xa8] sm:$0xf] %v1345
                %v1347 = vld [vmem:[%s1329 + $0x60] sm:$0xf]
                %1348 = vst [vmem:[%s1330 + $0xc0] sm:$0xf] %v1347
                %v1349 = vld [vmem:[%s1329 + $0x6c] sm:$0xf]
                %1350 = vst [vmem:[%s1330 + $0xd8] sm:$0xf] %v1349
                %v1351 = vld [vmem:[%s1329 + $0x78] sm:$0xf]
                %1352 = vst [vmem:[%s1330 + $0xf0] sm:$0xf] %v1351
                %v1353 = vld [vmem:[%s1329 + $0x84] sm:$0xf]
                %1354 = vst [vmem:[%s1330 + $0x108] sm:$0xf] %v1353
                %v1355 = vld [vmem:[%s1329 + $0x90] sm:$0xf]
                %1356 = vst [vmem:[%s1330 + $0x120] sm:$0xf] %v1355
                %v1357 = vld [vmem:[%s1329 + $0x9c] sm:$0xf]
                %1358 = vst [vmem:[%s1330 + $0x138] sm:$0xf] %v1357
                %v1359 = vld [vmem:[%s1329 + $0xa8] sm:$0xf]
                %1360 = vst [vmem:[%s1330 + $0x150] sm:$0xf] %v1359
                %v1361 = vld [vmem:[%s1329 + $0xb4] sm:$0xf]
                %1362 = vst [vmem:[%s1330 + $0x168] sm:$0xf] %v1361
              $region64: #{multi_head_attention.3} parent=51 // loop_footer
                %s1328 = sadd.s32 1, %s1324
              $region65: #{multi_head_attention.3} parent=51 // loop_footer_branch
                %1323 = sbr.rel target = $region61
              $region66: #{multi_head_attention.3} parent=51 // loop_exit
                _
            $region52: #{multi_head_attention.3} parent=47 // pred_fallthru
              _
          $region48: #{multi_head_attention.3} parent=43 // pred_fallthru
            _
          %1363 = vnop
        $region44: #{multi_head_attention.3} parent=27 // pred_fallthru
          _
      $region28: #{multi_head_attention.3} parent=5 // pred_fallthru
        _
      %p1364 = scmp.le.s32.totalorder 2, %s11
      // Predicated region
      $region67: #{multi_head_attention.3} parent=5 // pred_check
        %p1365 = pneg %p1364
      $region68: #{multi_head_attention.3} parent=5 // pred_check_branch
        %1367 = sbr.rel (%p1365) target = $region70
      $region69: #{multi_head_attention.3} parent=5 // pred_region
        %s1368 = ssub.s32 %s11, 2
        // Predicated region
        $region71: #{multi_head_attention.3} parent=69 // pred_check
          %p1369 = pneg %p117
        $region72: #{multi_head_attention.3} parent=69 // pred_check_branch
          %1371 = sbr.rel (%p1369) target = $region74
        $region73: #{multi_head_attention.3} parent=69 // pred_region
          %s1372 = sand.u32 %s102, 1
          %s1373 = sand.u32 %s102, 1
          %s1374 = smul.addr %s1373, 192
          %s1375 = scalar_lea.vmem [#allocation5], %s1374
        $region74: #{multi_head_attention.3} parent=69 // pred_fallthru
          _
      $region70: #{multi_head_attention.3} parent=5 // pred_fallthru
        _
    $region6: #{multi_head_attention.3} parent=1 // loop_footer
      %s15 = sadd.s32 1, %s11
    $region7: #{multi_head_attention.3} parent=1 // loop_footer_branch
      %10 = sbr.rel target = $region3
    $region8: #{multi_head_attention.3} parent=1 // loop_exit
      _
    %1376 = vsyncpa [#allocation4], 1
    %s1377 = scalar_lea.sflag [#allocation4], 1
    %1378 = vsyncpa %s1377, 1

</llo_original>
